<compile_context>
chip_gen: v7x
topology: tpu7x:2x2x1
jax: 0.10.0
libtpu: 0.0.40
codegen_flags: <defaults>
</compile_context>

<pallas_src>
import functools

import jax
import jax.numpy as jnp
from jax.experimental import pallas as pl
from jax.experimental.pallas import tpu as pltpu


def _fold_bn(gamma, beta, mean=None, var=None, eps=1e-5):
    mean = jnp.zeros_like(gamma) if mean is None else mean
    var = jnp.ones_like(gamma) if var is None else var
    scale = gamma / jnp.sqrt(var + eps)
    return scale, beta - mean * scale


def _prepare_params(params, stride):
    """Fold BN scales into the conv weights (exact, BN is linear) and cast the
    MXU operands to bf16.  Biases stay f32."""
    Cin, P = params["w1"].shape
    Cout = params["w3"].shape[1]
    s1, b1 = _fold_bn(params["g1"], params["be1"])
    s2, b2 = _fold_bn(params["g2"], params["be2"])
    s3, b3 = _fold_bn(params["g3"], params["be3"])
    w1 = (params["w1"] * s1[None, :]).astype(jnp.bfloat16)                 # (Cin, P)
    w2 = (params["w2"] * s2[None, None, None, :]).astype(jnp.bfloat16)     # (3,3,P,P)
    w3 = (params["w3"] * s3[None, :]).astype(jnp.bfloat16)                 # (P, Cout)
    has_proj = (stride != 1) or (Cin != Cout)
    if has_proj:
        ssc, bsc = _fold_bn(params["gsc"], params["besc"])
        wsc = (params["wsc"] * ssc[None, :]).astype(jnp.bfloat16)          # (Cin, Cout)
        wcat = jnp.concatenate([w3, wsc], axis=0)                          # (P+Cin, Cout)
        bcat = b3 + bsc
    else:
        wcat = w3                                                          # (P, Cout)
        bcat = b3
    return dict(w1=w1, b1=b1, w2=w2, b2=b2, wcat=wcat, bcat=bcat,
                has_proj=has_proj)


def _bottleneck_kernel(x_ref, w1_ref, b1_ref, w2_ref, b2_ref, wcat_ref,
                       bcat_ref, o_ref, pad_ref, *, stride, has_proj, fused):
    f32 = jnp.float32
    _, H, W, Cin = x_ref.shape
    P = w1_ref.shape[1]
    Ho, Wo = H // stride, W // stride
    Cout = bcat_ref.shape[1]

    x = x_ref[0]                                       # (H, W, Cin) bf16
    x2d = x.reshape(H * W, Cin)

    # ---- conv1 (1x1; BN1 scale pre-folded into w1) + bias + ReLU -----------
    h1 = jnp.dot(x2d, w1_ref[...], preferred_element_type=f32)
    h1 = jnp.maximum(h1 + b1_ref[...], 0.0)            # (H*W, P) f32

    # ---- conv2 (3x3, pad=1): padded scratch, only the 1-px border re-zeroed
    pad_ref[0:1, :, :] = jnp.zeros((1, W + 2, P), pad_ref.dtype)
    pad_ref[H + 1:H + 2, :, :] = jnp.zeros((1, W + 2, P), pad_ref.dtype)
    pad_ref[1:H + 1, 0:1, :] = jnp.zeros((H, 1, P), pad_ref.dtype)
    pad_ref[1:H + 1, W + 1:W + 2, :] = jnp.zeros((H, 1, P), pad_ref.dtype)
    pad_ref[1:H + 1, 1:W + 1, :] = h1.reshape(H, W, P).astype(pad_ref.dtype)
    padded = pad_ref[...]                              # (H+2, W+2, P) bf16

    taps = [padded[ki:ki + H, kj:kj + W, :]            # each (H, W, P)
            for ki in range(3) for kj in range(3)]
    if fused:
        # single im2col matmul, K = 9*P (stride-2 output == stride-1 output
        # subsampled at even positions, done once below)
        cols = jnp.concatenate(taps, axis=2)           # (H, W, 9P)
        h2 = jnp.dot(cols.reshape(H * W, 9 * P), w2_ref[...],
                     preferred_element_type=f32)       # (H*W, P)
    else:
        h2 = jnp.zeros((H * W, P), f32)
        for t in range(9):
            h2 = h2 + jnp.dot(taps[t].reshape(H * W, P),
                              w2_ref[t * P:(t + 1) * P, :],
                              preferred_element_type=f32)
    if stride > 1:
        h2 = h2.reshape(H, W, P)
        h2 = h2.reshape(Ho, stride, W, P)[:, 0]
        h2 = h2.reshape(Ho, Wo, stride, P)[:, :, 0, :]
        h2 = h2.reshape(Ho * Wo, P)
    h2 = jnp.maximum(h2 + b2_ref[...], 0.0)            # (Ho*Wo, P) f32
    h2b = h2.astype(wcat_ref.dtype)

    # ---- conv3 (+ projection shortcut) -------------------------------------
    if has_proj:
        if stride > 1:
            xs = x.reshape(Ho, stride, W, Cin)[:, 0]
            xs = xs.reshape(Ho, Wo, stride, Cin)[:, :, 0, :]
            xs2d = xs.reshape(Ho * Wo, Cin)
        else:
            xs2d = x2d
        if fused:
            lhs = jnp.concatenate([h2b, xs2d], axis=1)              # (Ho*Wo, P+Cin)
            out = jnp.dot(lhs, wcat_ref[...], preferred_element_type=f32)
        else:
            out = (jnp.dot(h2b, wcat_ref[0:P, :], preferred_element_type=f32)
                   + jnp.dot(xs2d, wcat_ref[P:P + Cin, :],
                             preferred_element_type=f32))
        out = out + bcat_ref[...]
    else:
        # identity shortcut: no projection matmul, direct residual add
        out = jnp.dot(h2b, wcat_ref[...], preferred_element_type=f32)
        out = out + bcat_ref[...] + x2d.astype(f32)
    out = jnp.maximum(out, 0.0)                        # (Ho*Wo, Cout)

    if fused:
        # lane-dense store: last dim Wo*Cout is a multiple of 128 (unmasked vst)
        o_ref[0] = out.reshape(Ho, Wo * Cout).astype(o_ref.dtype)
    else:
        o_ref[0] = out.reshape(Ho, Wo, Cout).astype(o_ref.dtype)


def bottleneck_forward(x_nchw, params, stride):
    """Forward pass of the Bottleneck block. Input/output are NCHW (PyTorch)."""
    N, Cin, H, W = x_nchw.shape
    P = params["w1"].shape[1]
    Cout = params["w3"].shape[1]
    Ho, Wo = H // stride, W // stride

    prep = _prepare_params(params, stride)
    has_proj = prep["has_proj"]

    # NHWC, bf16 activations for the MXU (halves HBM traffic as well)
    x = jnp.transpose(x_nchw, (0, 2, 3, 1)).astype(jnp.bfloat16)
    w1 = prep["w1"]
    w2 = prep["w2"].reshape(9 * P, P)
    wcat = prep["wcat"]
    Kc = wcat.shape[0]
    b1 = prep["b1"].reshape(1, P).astype(jnp.float32)
    b2 = prep["b2"].reshape(1, P).astype(jnp.float32)
    bcat = prep["bcat"].reshape(1, Cout).astype(jnp.float32)

    def build(fused):
        kernel = functools.partial(_bottleneck_kernel, stride=stride,
                                   has_proj=has_proj, fused=fused)
        if fused:
            out_shape = jax.ShapeDtypeStruct((N, Ho, Wo * Cout), jnp.float32)
            out_spec = pl.BlockSpec((1, Ho, Wo * Cout), lambda n: (n, 0, 0))
        else:
            out_shape = jax.ShapeDtypeStruct((N, Ho, Wo, Cout), jnp.float32)
            out_spec = pl.BlockSpec((1, Ho, Wo, Cout), lambda n: (n, 0, 0, 0))
        grid_spec = pltpu.PrefetchScalarGridSpec(
            num_scalar_prefetch=0,
            grid=(N,),
            in_specs=[
                pl.BlockSpec((1, H, W, Cin), lambda n: (n, 0, 0, 0)),
                pl.BlockSpec((Cin, P), lambda n: (0, 0)),
                pl.BlockSpec((1, P), lambda n: (0, 0)),
                pl.BlockSpec((9 * P, P), lambda n: (0, 0)),
                pl.BlockSpec((1, P), lambda n: (0, 0)),
                pl.BlockSpec((Kc, Cout), lambda n: (0, 0)),
                pl.BlockSpec((1, Cout), lambda n: (0, 0)),
            ],
            out_specs=out_spec,
            scratch_shapes=[pltpu.VMEM((H + 2, W + 2, P), jnp.bfloat16)],
        )
        return pl.pallas_call(
            kernel,
            grid_spec=grid_spec,
            out_shape=out_shape,
            compiler_params=pltpu.CompilerParams(
                dimension_semantics=("parallel",)),
        )

    args = (x, w1, b1, w2, b2, wcat, bcat)
    try:
        out4 = jax.block_until_ready(build(True)(*args))
        out4 = out4.reshape(N, Ho, Wo, Cout)
    except Exception:
        # Fallback for Mosaic releases without lane-minor concatenate /
        # lane-merging reshape support needed by the fully fused variant.
        out4 = jax.block_until_ready(build(False)(*args))
    return jnp.transpose(out4, (0, 3, 1, 2))           # back to NCHW


def _reference_nchw(x_nchw, params, stride):
    """Pure-JAX f32 reference on the same bf16-rounded folded weights / input."""
    prep = _prepare_params(params, stride)
    dn = ("NHWC", "HWIO", "NHWC")
    x = jnp.transpose(x_nchw, (0, 2, 3, 1)).astype(jnp.bfloat16).astype(jnp.float32)
    w1 = prep["w1"].astype(jnp.float32)
    w2 = prep["w2"].astype(jnp.float32)
    wcat = prep["wcat"].astype(jnp.float32)
    Cin, P = w1.shape
    Cout = wcat.shape[1]

    h = jax.lax.conv_general_dilated(x, w1.reshape(1, 1, Cin, P), (1, 1),
                                     "VALID", dimension_numbers=dn)
    h = jnp.maximum(h + prep["b1"], 0.0)
    h = jax.lax.conv_general_dilated(h, w2, (stride, stride), ((1, 1), (1, 1)),
                                     dimension_numbers=dn)
    h = jnp.maximum(h + prep["b2"], 0.0)
    h = jax.lax.conv_general_dilated(h, wcat[:P].reshape(1, 1, P, Cout), (1, 1),
                                     "VALID", dimension_numbers=dn)
    if prep["has_proj"]:
        sc = jax.lax.conv_general_dilated(x, wcat[P:].reshape(1, 1, Cin, Cout),
                                          (stride, stride), "VALID",
                                          dimension_numbers=dn)
    else:
        sc = x
    out = jnp.maximum(h + prep["bcat"] + sc, 0.0)
    return jnp.transpose(out, (0, 3, 1, 2))


def _make_params(key, in_planes, planes):
    Cout = 4 * planes
    ks = jax.random.split(key, 12)
    return {
        # conv weights stored as (Cin, Cout) / HWIO (== PyTorch OIHW transposed)
        "w1": 0.1 * jax.random.normal(ks[0], (in_planes, planes), jnp.float32),
        "w2": 0.1 * jax.random.normal(ks[1], (3, 3, planes, planes), jnp.float32),
        "w3": 0.1 * jax.random.normal(ks[2], (planes, Cout), jnp.float32),
        "wsc": 0.1 * jax.random.normal(ks[3], (in_planes, Cout), jnp.float32),
        # BatchNorm affine params
        "g1": 1.0 + 0.1 * jax.random.normal(ks[4], (planes,), jnp.float32),
        "be1": 0.1 * jax.random.normal(ks[5], (planes,), jnp.float32),
        "g2": 1.0 + 0.1 * jax.random.normal(ks[6], (planes,), jnp.float32),
        "be2": 0.1 * jax.random.normal(ks[7], (planes,), jnp.float32),
        "g3": 1.0 + 0.1 * jax.random.normal(ks[8], (Cout,), jnp.float32),
        "be3": 0.1 * jax.random.normal(ks[9], (Cout,), jnp.float32),
        "gsc": 1.0 + 0.1 * jax.random.normal(ks[10], (Cout,), jnp.float32),
        "besc": 0.1 * jax.random.normal(ks[11], (Cout,), jnp.float32),
    }


if __name__ == "__main__":
    key = jax.random.PRNGKey(0)
    k1, k2, k3, k4 = jax.random.split(key, 4)

    # Case 1: projection shortcut (in_planes=16, planes=8, stride=2)
    params1 = _make_params(k1, 16, 8)
    x1 = jax.random.normal(k2, (2, 16, 16, 16), jnp.float32)
    out1 = jax.block_until_ready(bottleneck_forward(x1, params1, stride=2))
    ref1 = _reference_nchw(x1, params1, 2)
    assert out1.shape == (2, 32, 8, 8), out1.shape
    if not jnp.allclose(out1, ref1, rtol=2e-2, atol=2e-2):
        raise AssertionError("Pallas kernel mismatch vs JAX reference (proj path)")

    # Case 2: identity shortcut (in_planes=32, planes=8, stride=1)
    params2 = _make_params(k3, 32, 8)
    x2 = jax.random.normal(k4, (2, 32, 16, 16), jnp.float32)
    out2 = jax.block_until_ready(bottleneck_forward(x2, params2, stride=1))
    ref2 = _reference_nchw(x2, params2, 1)
    assert out2.shape == (2, 32, 16, 16), out2.shape
    if not jnp.allclose(out2, ref2, rtol=2e-2, atol=2e-2):
        raise AssertionError("Pallas kernel mismatch vs JAX reference (identity path)")

    print("KERNEL_OK")
</pallas_src>

<mosaic_0001>
module attributes {stable_mosaic.version = 11 : i64} {
  func.func @_bottleneck_kernel(%arg0: i32, %arg1: memref<1x16x16x16xbf16, #tpu.memory_space<vmem>>, %arg2: memref<16x8xbf16, #tpu.memory_space<vmem>>, %arg3: memref<1x8xf32, #tpu.memory_space<vmem>>, %arg4: memref<72x8xbf16, #tpu.memory_space<vmem>>, %arg5: memref<1x8xf32, #tpu.memory_space<vmem>>, %arg6: memref<24x32xbf16, #tpu.memory_space<vmem>>, %arg7: memref<1x32xf32, #tpu.memory_space<vmem>>, %arg8: memref<1x8x256xf32, #tpu.memory_space<vmem>>, %arg9: memref<18x18x8xbf16, #tpu.memory_space<vmem>>) attributes {dimension_semantics = [#tpu.dimension_semantics<parallel>], iteration_bounds = array<i64: 2>, scalar_prefetch = 0 : i64, scratch_operands = 1 : i64, tpu.core_type = #tpu.core_type<tc>, window_params = [{transform_indices = @transform_0, window_bounds = array<i64: 1, 16, 16, 16>}, {pipeline_mode = #tpu.pipeline_mode<synchronous>, transform_indices = @transform_1, window_bounds = array<i64: 16, 8>}, {pipeline_mode = #tpu.pipeline_mode<synchronous>, transform_indices = @transform_2, window_bounds = array<i64: 1, 8>}, {pipeline_mode = #tpu.pipeline_mode<synchronous>, transform_indices = @transform_3, window_bounds = array<i64: 72, 8>}, {pipeline_mode = #tpu.pipeline_mode<synchronous>, transform_indices = @transform_4, window_bounds = array<i64: 1, 8>}, {pipeline_mode = #tpu.pipeline_mode<synchronous>, transform_indices = @transform_5, window_bounds = array<i64: 24, 32>}, {pipeline_mode = #tpu.pipeline_mode<synchronous>, transform_indices = @transform_6, window_bounds = array<i64: 1, 32>}, {transform_indices = @transform_7, window_bounds = array<i64: 1, 8, 256>}]} {
    %c0 = arith.constant 0 : index
    %c0_0 = arith.constant 0 : index
    %c0_1 = arith.constant 0 : index
    %c0_2 = arith.constant 0 : index
    %0 = vector.load %arg1[%c0, %c0_0, %c0_1, %c0_2] : memref<1x16x16x16xbf16, #tpu.memory_space<vmem>>, vector<1x16x16x16xbf16>
    %1 = vector.shape_cast %0 : vector<1x16x16x16xbf16> to vector<16x16x16xbf16>
    %2 = vector.shape_cast %1 : vector<16x16x16xbf16> to vector<256x16xbf16>
    %c0_3 = arith.constant 0 : index
    %c0_4 = arith.constant 0 : index
    %3 = vector.load %arg2[%c0_3, %c0_4] : memref<16x8xbf16, #tpu.memory_space<vmem>>, vector<16x8xbf16>
    %cst = arith.constant dense<0.000000e+00> : vector<256x8xf32>
    %4 = tpu.matmul %2, %3, %cst {dimension_numbers = #tpu.dot_dimension_numbers<[1], [0], [0], [1], [0, 0, 1, 1], [], []>} : vector<256x16xbf16>, vector<16x8xbf16>, vector<256x8xf32> -> vector<256x8xf32>
    %c0_5 = arith.constant 0 : index
    %c0_6 = arith.constant 0 : index
    %5 = vector.load %arg3[%c0_5, %c0_6] : memref<1x8xf32, #tpu.memory_space<vmem>>, vector<1x8xf32>
    %6 = vector.broadcast %5 : vector<1x8xf32> to vector<256x8xf32>
    %7 = arith.addf %4, %6 : vector<256x8xf32>
    %cst_7 = arith.constant 0.000000e+00 : f32
    %8 = vector.broadcast %cst_7 : f32 to vector<256x8xf32>
    %9 = arith.maximumf %7, %8 : vector<256x8xf32>
    %cst_8 = arith.constant 0.000000e+00 : bf16
    %10 = vector.broadcast %cst_8 : bf16 to vector<1x18x8xbf16>
    %c0_9 = arith.constant 0 : index
    %c0_10 = arith.constant 0 : index
    %c0_11 = arith.constant 0 : index
    %11 = vector.load %arg9[%c0_9, %c0_10, %c0_11] : memref<18x18x8xbf16, #tpu.memory_space<vmem>>, vector<1x18x8xbf16>
    tpu.vector_store %arg9[%c0_9, %c0_10, %c0_11], %10 {strides = array<i32>} : memref<18x18x8xbf16, #tpu.memory_space<vmem>>, vector<1x18x8xbf16>,
    %cst_12 = arith.constant 0.000000e+00 : bf16
    %12 = vector.broadcast %cst_12 : bf16 to vector<1x18x8xbf16>
    %c17 = arith.constant 17 : index
    %c0_13 = arith.constant 0 : index
    %c0_14 = arith.constant 0 : index
    %13 = vector.load %arg9[%c17, %c0_13, %c0_14] : memref<18x18x8xbf16, #tpu.memory_space<vmem>>, vector<1x18x8xbf16>
    tpu.vector_store %arg9[%c17, %c0_13, %c0_14], %12 {strides = array<i32>} : memref<18x18x8xbf16, #tpu.memory_space<vmem>>, vector<1x18x8xbf16>,
    %cst_15 = arith.constant 0.000000e+00 : bf16
    %14 = vector.broadcast %cst_15 : bf16 to vector<16x1x8xbf16>
    %c1 = arith.constant 1 : index
    %c0_16 = arith.constant 0 : index
    %c0_17 = arith.constant 0 : index
    %15 = vector.load %arg9[%c1, %c0_16, %c0_17] : memref<18x18x8xbf16, #tpu.memory_space<vmem>>, vector<16x1x8xbf16>
    tpu.vector_store %arg9[%c1, %c0_16, %c0_17], %14 {strides = array<i32>} : memref<18x18x8xbf16, #tpu.memory_space<vmem>>, vector<16x1x8xbf16>,
    %cst_18 = arith.constant 0.000000e+00 : bf16
    %16 = vector.broadcast %cst_18 : bf16 to vector<16x1x8xbf16>
    %c1_19 = arith.constant 1 : index
    %c17_20 = arith.constant 17 : index
    %c0_21 = arith.constant 0 : index
    %17 = vector.load %arg9[%c1_19, %c17_20, %c0_21] : memref<18x18x8xbf16, #tpu.memory_space<vmem>>, vector<16x1x8xbf16>
    tpu.vector_store %arg9[%c1_19, %c17_20, %c0_21], %16 {strides = array<i32>} : memref<18x18x8xbf16, #tpu.memory_space<vmem>>, vector<16x1x8xbf16>,
    %18 = vector.shape_cast %9 : vector<256x8xf32> to vector<16x16x8xf32>
    %19 = arith.truncf %18 : vector<16x16x8xf32> to vector<16x16x8xbf16>
    %c1_22 = arith.constant 1 : index
    %c1_23 = arith.constant 1 : index
    %c0_24 = arith.constant 0 : index
    %20 = vector.load %arg9[%c1_22, %c1_23, %c0_24] : memref<18x18x8xbf16, #tpu.memory_space<vmem>>, vector<16x16x8xbf16>
    tpu.vector_store %arg9[%c1_22, %c1_23, %c0_24], %19 {strides = array<i32>} : memref<18x18x8xbf16, #tpu.memory_space<vmem>>, vector<16x16x8xbf16>,
    %c0_25 = arith.constant 0 : index
    %c0_26 = arith.constant 0 : index
    %c0_27 = arith.constant 0 : index
    %21 = vector.load %arg9[%c0_25, %c0_26, %c0_27] : memref<18x18x8xbf16, #tpu.memory_space<vmem>>, vector<18x18x8xbf16>
    %22 = vector.extract_strided_slice %21 {offsets = [0, 0, 0], sizes = [16, 16, 8], strides = [1, 1, 1]} : vector<18x18x8xbf16> to vector<16x16x8xbf16>
    %23 = vector.extract_strided_slice %21 {offsets = [0, 1, 0], sizes = [16, 16, 8], strides = [1, 1, 1]} : vector<18x18x8xbf16> to vector<16x16x8xbf16>
    %24 = vector.extract_strided_slice %21 {offsets = [0, 2, 0], sizes = [16, 16, 8], strides = [1, 1, 1]} : vector<18x18x8xbf16> to vector<16x16x8xbf16>
    %25 = vector.extract_strided_slice %21 {offsets = [1, 0, 0], sizes = [16, 16, 8], strides = [1, 1, 1]} : vector<18x18x8xbf16> to vector<16x16x8xbf16>
    %26 = vector.extract_strided_slice %21 {offsets = [1, 1, 0], sizes = [16, 16, 8], strides = [1, 1, 1]} : vector<18x18x8xbf16> to vector<16x16x8xbf16>
    %27 = vector.extract_strided_slice %21 {offsets = [1, 2, 0], sizes = [16, 16, 8], strides = [1, 1, 1]} : vector<18x18x8xbf16> to vector<16x16x8xbf16>
    %28 = vector.extract_strided_slice %21 {offsets = [2, 0, 0], sizes = [16, 16, 8], strides = [1, 1, 1]} : vector<18x18x8xbf16> to vector<16x16x8xbf16>
    %29 = vector.extract_strided_slice %21 {offsets = [2, 1, 0], sizes = [16, 16, 8], strides = [1, 1, 1]} : vector<18x18x8xbf16> to vector<16x16x8xbf16>
    %30 = vector.extract_strided_slice %21 {offsets = [2, 2, 0], sizes = [16, 16, 8], strides = [1, 1, 1]} : vector<18x18x8xbf16> to vector<16x16x8xbf16>
    %31 = tpu.concatenate %22, %23, %24, %25, %26, %27, %28, %29, %30 in 2 : vector<16x16x8xbf16>, vector<16x16x8xbf16>, vector<16x16x8xbf16>, vector<16x16x8xbf16>, vector<16x16x8xbf16>, vector<16x16x8xbf16>, vector<16x16x8xbf16>, vector<16x16x8xbf16>, vector<16x16x8xbf16> -> vector<16x16x72xbf16>
    %32 = vector.shape_cast %31 : vector<16x16x72xbf16> to vector<256x72xbf16>
    %c0_28 = arith.constant 0 : index
    %c0_29 = arith.constant 0 : index
    %33 = vector.load %arg4[%c0_28, %c0_29] : memref<72x8xbf16, #tpu.memory_space<vmem>>, vector<72x8xbf16>
    %cst_30 = arith.constant dense<0.000000e+00> : vector<256x8xf32>
    %34 = tpu.matmul %32, %33, %cst_30 {dimension_numbers = #tpu.dot_dimension_numbers<[1], [0], [0], [1], [0, 0, 1, 1], [], []>} : vector<256x72xbf16>, vector<72x8xbf16>, vector<256x8xf32> -> vector<256x8xf32>
    %35 = vector.shape_cast %34 : vector<256x8xf32> to vector<16x16x8xf32>
    %36 = vector.shape_cast %35 : vector<16x16x8xf32> to vector<8x2x16x8xf32>
    %37 = vector.extract_strided_slice %36 {offsets = [0, 0, 0, 0], sizes = [8, 1, 16, 8], strides = [1, 1, 1, 1]} : vector<8x2x16x8xf32> to vector<8x1x16x8xf32>
    %38 = vector.shape_cast %37 : vector<8x1x16x8xf32> to vector<8x16x8xf32>
    %39 = vector.shape_cast %38 : vector<8x16x8xf32> to vector<8x8x2x8xf32>
    %40 = vector.extract_strided_slice %39 {offsets = [0, 0, 0, 0], sizes = [8, 8, 1, 8], strides = [1, 1, 1, 1]} : vector<8x8x2x8xf32> to vector<8x8x1x8xf32>
    %41 = vector.shape_cast %40 : vector<8x8x1x8xf32> to vector<8x8x8xf32>
    %42 = vector.shape_cast %41 : vector<8x8x8xf32> to vector<64x8xf32>
    %c0_31 = arith.constant 0 : index
    %c0_32 = arith.constant 0 : index
    %43 = vector.load %arg5[%c0_31, %c0_32] : memref<1x8xf32, #tpu.memory_space<vmem>>, vector<1x8xf32>
    %44 = vector.broadcast %43 : vector<1x8xf32> to vector<64x8xf32>
    %45 = arith.addf %42, %44 : vector<64x8xf32>
    %cst_33 = arith.constant 0.000000e+00 : f32
    %46 = vector.broadcast %cst_33 : f32 to vector<64x8xf32>
    %47 = arith.maximumf %45, %46 : vector<64x8xf32>
    %48 = arith.truncf %47 : vector<64x8xf32> to vector<64x8xbf16>
    %49 = vector.shape_cast %1 : vector<16x16x16xbf16> to vector<8x2x16x16xbf16>
    %50 = vector.extract_strided_slice %49 {offsets = [0, 0, 0, 0], sizes = [8, 1, 16, 16], strides = [1, 1, 1, 1]} : vector<8x2x16x16xbf16> to vector<8x1x16x16xbf16>
    %51 = vector.shape_cast %50 : vector<8x1x16x16xbf16> to vector<8x16x16xbf16>
    %52 = vector.shape_cast %51 : vector<8x16x16xbf16> to vector<8x8x2x16xbf16>
    %53 = vector.extract_strided_slice %52 {offsets = [0, 0, 0, 0], sizes = [8, 8, 1, 16], strides = [1, 1, 1, 1]} : vector<8x8x2x16xbf16> to vector<8x8x1x16xbf16>
    %54 = vector.shape_cast %53 : vector<8x8x1x16xbf16> to vector<8x8x16xbf16>
    %55 = vector.shape_cast %54 : vector<8x8x16xbf16> to vector<64x16xbf16>
    %56 = tpu.concatenate %48, %55 in 1 : vector<64x8xbf16>, vector<64x16xbf16> -> vector<64x24xbf16>
    %c0_34 = arith.constant 0 : index
    %c0_35 = arith.constant 0 : index
    %57 = vector.load %arg6[%c0_34, %c0_35] : memref<24x32xbf16, #tpu.memory_space<vmem>>, vector<24x32xbf16>
    %cst_36 = arith.constant dense<0.000000e+00> : vector<64x32xf32>
    %58 = tpu.matmul %56, %57, %cst_36 {dimension_numbers = #tpu.dot_dimension_numbers<[1], [0], [0], [1], [0, 0, 1, 1], [], []>} : vector<64x24xbf16>, vector<24x32xbf16>, vector<64x32xf32> -> vector<64x32xf32>
    %c0_37 = arith.constant 0 : index
    %c0_38 = arith.constant 0 : index
    %59 = vector.load %arg7[%c0_37, %c0_38] : memref<1x32xf32, #tpu.memory_space<vmem>>, vector<1x32xf32>
    %60 = vector.broadcast %59 : vector<1x32xf32> to vector<64x32xf32>
    %61 = arith.addf %58, %60 : vector<64x32xf32>
    %cst_39 = arith.constant 0.000000e+00 : f32
    %62 = vector.broadcast %cst_39 : f32 to vector<64x32xf32>
    %63 = arith.maximumf %61, %62 : vector<64x32xf32>
    %64 = vector.shape_cast %63 : vector<64x32xf32> to vector<8x256xf32>
    %c0_40 = arith.constant 0 : index
    %c0_41 = arith.constant 0 : index
    %c0_42 = arith.constant 0 : index
    %65 = vector.load %arg8[%c0_40, %c0_41, %c0_42] : memref<1x8x256xf32, #tpu.memory_space<vmem>>, vector<1x8x256xf32>
    %66 = vector.shape_cast %65 : vector<1x8x256xf32> to vector<8x256xf32>
    %67 = vector.shape_cast %64 : vector<8x256xf32> to vector<1x8x256xf32>
    tpu.vector_store %arg8[%c0_40, %c0_41, %c0_42], %67 {strides = array<i32>} : memref<1x8x256xf32, #tpu.memory_space<vmem>>, vector<1x8x256xf32>,
    return
  }
  func.func @transform_0(%arg0: i32) -> (i32, i32, i32, i32) {
    %c0_i32 = arith.constant 0 : i32
    %c0_i32_0 = arith.constant 0 : i32
    %c0_i32_1 = arith.constant 0 : i32
    %c0_i32_2 = arith.constant 0 : i32
    return %arg0, %c0_i32, %c0_i32_0, %c0_i32_1 : i32, i32, i32, i32
  }
  func.func @transform_1(%arg0: i32) -> (i32, i32) {
    %c0_i32 = arith.constant 0 : i32
    %c0_i32_0 = arith.constant 0 : i32
    %c0_i32_1 = arith.constant 0 : i32
    return %c0_i32, %c0_i32_0 : i32, i32
  }
  func.func @transform_2(%arg0: i32) -> (i32, i32) {
    %c0_i32 = arith.constant 0 : i32
    %c0_i32_0 = arith.constant 0 : i32
    %c0_i32_1 = arith.constant 0 : i32
    return %c0_i32, %c0_i32_0 : i32, i32
  }
  func.func @transform_3(%arg0: i32) -> (i32, i32) {
    %c0_i32 = arith.constant 0 : i32
    %c0_i32_0 = arith.constant 0 : i32
    %c0_i32_1 = arith.constant 0 : i32
    return %c0_i32, %c0_i32_0 : i32, i32
  }
  func.func @transform_4(%arg0: i32) -> (i32, i32) {
    %c0_i32 = arith.constant 0 : i32
    %c0_i32_0 = arith.constant 0 : i32
    %c0_i32_1 = arith.constant 0 : i32
    return %c0_i32, %c0_i32_0 : i32, i32
  }
  func.func @transform_5(%arg0: i32) -> (i32, i32) {
    %c0_i32 = arith.constant 0 : i32
    %c0_i32_0 = arith.constant 0 : i32
    %c0_i32_1 = arith.constant 0 : i32
    return %c0_i32, %c0_i32_0 : i32, i32
  }
  func.func @transform_6(%arg0: i32) -> (i32, i32) {
    %c0_i32 = arith.constant 0 : i32
    %c0_i32_0 = arith.constant 0 : i32
    %c0_i32_1 = arith.constant 0 : i32
    return %c0_i32, %c0_i32_0 : i32, i32
  }
  func.func @transform_7(%arg0: i32) -> (i32, i32, i32) {
    %c0_i32 = arith.constant 0 : i32
    %c0_i32_0 = arith.constant 0 : i32
    %c0_i32_1 = arith.constant 0 : i32
    return %arg0, %c0_i32, %c0_i32_0 : i32, i32, i32
  }
}

module attributes {stable_mosaic.version = 11 : i64} {
  func.func @_bottleneck_kernel(%arg0: i32, %arg1: memref<1x16x16x16xbf16, #tpu.memory_space<vmem>>, %arg2: memref<16x8xbf16, #tpu.memory_space<vmem>>, %arg3: memref<1x8xf32, #tpu.memory_space<vmem>>, %arg4: memref<72x8xbf16, #tpu.memory_space<vmem>>, %arg5: memref<1x8xf32, #tpu.memory_space<vmem>>, %arg6: memref<24x32xbf16, #tpu.memory_space<vmem>>, %arg7: memref<1x32xf32, #tpu.memory_space<vmem>>, %arg8: memref<1x8x8x32xf32, #tpu.memory_space<vmem>>, %arg9: memref<18x18x8xbf16, #tpu.memory_space<vmem>>) attributes {dimension_semantics = [#tpu.dimension_semantics<parallel>], iteration_bounds = array<i64: 2>, scalar_prefetch = 0 : i64, scratch_operands = 1 : i64, tpu.core_type = #tpu.core_type<tc>, window_params = [{transform_indices = @transform_0, window_bounds = array<i64: 1, 16, 16, 16>}, {pipeline_mode = #tpu.pipeline_mode<synchronous>, transform_indices = @transform_1, window_bounds = array<i64: 16, 8>}, {pipeline_mode = #tpu.pipeline_mode<synchronous>, transform_indices = @transform_2, window_bounds = array<i64: 1, 8>}, {pipeline_mode = #tpu.pipeline_mode<synchronous>, transform_indices = @transform_3, window_bounds = array<i64: 72, 8>}, {pipeline_mode = #tpu.pipeline_mode<synchronous>, transform_indices = @transform_4, window_bounds = array<i64: 1, 8>}, {pipeline_mode = #tpu.pipeline_mode<synchronous>, transform_indices = @transform_5, window_bounds = array<i64: 24, 32>}, {pipeline_mode = #tpu.pipeline_mode<synchronous>, transform_indices = @transform_6, window_bounds = array<i64: 1, 32>}, {transform_indices = @transform_7, window_bounds = array<i64: 1, 8, 8, 32>}]} {
    %c0 = arith.constant 0 : index
    %c0_0 = arith.constant 0 : index
    %c0_1 = arith.constant 0 : index
    %c0_2 = arith.constant 0 : index
    %0 = vector.load %arg1[%c0, %c0_0, %c0_1, %c0_2] : memref<1x16x16x16xbf16, #tpu.memory_space<vmem>>, vector<1x16x16x16xbf16>
    %1 = vector.shape_cast %0 : vector<1x16x16x16xbf16> to vector<16x16x16xbf16>
    %2 = vector.shape_cast %1 : vector<16x16x16xbf16> to vector<256x16xbf16>
    %c0_3 = arith.constant 0 : index
    %c0_4 = arith.constant 0 : index
    %3 = vector.load %arg2[%c0_3, %c0_4] : memref<16x8xbf16, #tpu.memory_space<vmem>>, vector<16x8xbf16>
    %cst = arith.constant dense<0.000000e+00> : vector<256x8xf32>
    %4 = tpu.matmul %2, %3, %cst {dimension_numbers = #tpu.dot_dimension_numbers<[1], [0], [0], [1], [0, 0, 1, 1], [], []>} : vector<256x16xbf16>, vector<16x8xbf16>, vector<256x8xf32> -> vector<256x8xf32>
    %c0_5 = arith.constant 0 : index
    %c0_6 = arith.constant 0 : index
    %5 = vector.load %arg3[%c0_5, %c0_6] : memref<1x8xf32, #tpu.memory_space<vmem>>, vector<1x8xf32>
    %6 = vector.broadcast %5 : vector<1x8xf32> to vector<256x8xf32>
    %7 = arith.addf %4, %6 : vector<256x8xf32>
    %cst_7 = arith.constant 0.000000e+00 : f32
    %8 = vector.broadcast %cst_7 : f32 to vector<256x8xf32>
    %9 = arith.maximumf %7, %8 : vector<256x8xf32>
    %cst_8 = arith.constant 0.000000e+00 : bf16
    %10 = vector.broadcast %cst_8 : bf16 to vector<1x18x8xbf16>
    %c0_9 = arith.constant 0 : index
    %c0_10 = arith.constant 0 : index
    %c0_11 = arith.constant 0 : index
    %11 = vector.load %arg9[%c0_9, %c0_10, %c0_11] : memref<18x18x8xbf16, #tpu.memory_space<vmem>>, vector<1x18x8xbf16>
    tpu.vector_store %arg9[%c0_9, %c0_10, %c0_11], %10 {strides = array<i32>} : memref<18x18x8xbf16, #tpu.memory_space<vmem>>, vector<1x18x8xbf16>,
    %cst_12 = arith.constant 0.000000e+00 : bf16
    %12 = vector.broadcast %cst_12 : bf16 to vector<1x18x8xbf16>
    %c17 = arith.constant 17 : index
    %c0_13 = arith.constant 0 : index
    %c0_14 = arith.constant 0 : index
    %13 = vector.load %arg9[%c17, %c0_13, %c0_14] : memref<18x18x8xbf16, #tpu.memory_space<vmem>>, vector<1x18x8xbf16>
    tpu.vector_store %arg9[%c17, %c0_13, %c0_14], %12 {strides = array<i32>} : memref<18x18x8xbf16, #tpu.memory_space<vmem>>, vector<1x18x8xbf16>,
    %cst_15 = arith.constant 0.000000e+00 : bf16
    %14 = vector.broadcast %cst_15 : bf16 to vector<16x1x8xbf16>
    %c1 = arith.constant 1 : index
    %c0_16 = arith.constant 0 : index
    %c0_17 = arith.constant 0 : index
    %15 = vector.load %arg9[%c1, %c0_16, %c0_17] : memref<18x18x8xbf16, #tpu.memory_space<vmem>>, vector<16x1x8xbf16>
    tpu.vector_store %arg9[%c1, %c0_16, %c0_17], %14 {strides = array<i32>} : memref<18x18x8xbf16, #tpu.memory_space<vmem>>, vector<16x1x8xbf16>,
    %cst_18 = arith.constant 0.000000e+00 : bf16
    %16 = vector.broadcast %cst_18 : bf16 to vector<16x1x8xbf16>
    %c1_19 = arith.constant 1 : index
    %c17_20 = arith.constant 17 : index
    %c0_21 = arith.constant 0 : index
    %17 = vector.load %arg9[%c1_19, %c17_20, %c0_21] : memref<18x18x8xbf16, #tpu.memory_space<vmem>>, vector<16x1x8xbf16>
    tpu.vector_store %arg9[%c1_19, %c17_20, %c0_21], %16 {strides = array<i32>} : memref<18x18x8xbf16, #tpu.memory_space<vmem>>, vector<16x1x8xbf16>,
    %18 = vector.shape_cast %9 : vector<256x8xf32> to vector<16x16x8xf32>
    %19 = arith.truncf %18 : vector<16x16x8xf32> to vector<16x16x8xbf16>
    %c1_22 = arith.constant 1 : index
    %c1_23 = arith.constant 1 : index
    %c0_24 = arith.constant 0 : index
    %20 = vector.load %arg9[%c1_22, %c1_23, %c0_24] : memref<18x18x8xbf16, #tpu.memory_space<vmem>>, vector<16x16x8xbf16>
    tpu.vector_store %arg9[%c1_22, %c1_23, %c0_24], %19 {strides = array<i32>} : memref<18x18x8xbf16, #tpu.memory_space<vmem>>, vector<16x16x8xbf16>,
    %c0_25 = arith.constant 0 : index
    %c0_26 = arith.constant 0 : index
    %c0_27 = arith.constant 0 : index
    %21 = vector.load %arg9[%c0_25, %c0_26, %c0_27] : memref<18x18x8xbf16, #tpu.memory_space<vmem>>, vector<18x18x8xbf16>
    %22 = vector.extract_strided_slice %21 {offsets = [0, 0, 0], sizes = [16, 16, 8], strides = [1, 1, 1]} : vector<18x18x8xbf16> to vector<16x16x8xbf16>
    %23 = vector.extract_strided_slice %21 {offsets = [0, 1, 0], sizes = [16, 16, 8], strides = [1, 1, 1]} : vector<18x18x8xbf16> to vector<16x16x8xbf16>
    %24 = vector.extract_strided_slice %21 {offsets = [0, 2, 0], sizes = [16, 16, 8], strides = [1, 1, 1]} : vector<18x18x8xbf16> to vector<16x16x8xbf16>
    %25 = vector.extract_strided_slice %21 {offsets = [1, 0, 0], sizes = [16, 16, 8], strides = [1, 1, 1]} : vector<18x18x8xbf16> to vector<16x16x8xbf16>
    %26 = vector.extract_strided_slice %21 {offsets = [1, 1, 0], sizes = [16, 16, 8], strides = [1, 1, 1]} : vector<18x18x8xbf16> to vector<16x16x8xbf16>
    %27 = vector.extract_strided_slice %21 {offsets = [1, 2, 0], sizes = [16, 16, 8], strides = [1, 1, 1]} : vector<18x18x8xbf16> to vector<16x16x8xbf16>
    %28 = vector.extract_strided_slice %21 {offsets = [2, 0, 0], sizes = [16, 16, 8], strides = [1, 1, 1]} : vector<18x18x8xbf16> to vector<16x16x8xbf16>
    %29 = vector.extract_strided_slice %21 {offsets = [2, 1, 0], sizes = [16, 16, 8], strides = [1, 1, 1]} : vector<18x18x8xbf16> to vector<16x16x8xbf16>
    %30 = vector.extract_strided_slice %21 {offsets = [2, 2, 0], sizes = [16, 16, 8], strides = [1, 1, 1]} : vector<18x18x8xbf16> to vector<16x16x8xbf16>
    %cst_28 = arith.constant 0.000000e+00 : f32
    %31 = vector.broadcast %cst_28 : f32 to vector<256x8xf32>
    %32 = vector.shape_cast %22 : vector<16x16x8xbf16> to vector<256x8xbf16>
    %c0_29 = arith.constant 0 : index
    %c0_30 = arith.constant 0 : index
    %33 = vector.load %arg4[%c0_29, %c0_30] : memref<72x8xbf16, #tpu.memory_space<vmem>>, vector<8x8xbf16>
    %cst_31 = arith.constant dense<0.000000e+00> : vector<256x8xf32>
    %34 = tpu.matmul %32, %33, %cst_31 {dimension_numbers = #tpu.dot_dimension_numbers<[1], [0], [0], [1], [0, 0, 1, 1], [], []>} : vector<256x8xbf16>, vector<8x8xbf16>, vector<256x8xf32> -> vector<256x8xf32>
    %35 = arith.addf %31, %34 : vector<256x8xf32>
    %36 = vector.shape_cast %23 : vector<16x16x8xbf16> to vector<256x8xbf16>
    %c8 = arith.constant 8 : index
    %c0_32 = arith.constant 0 : index
    %37 = vector.load %arg4[%c8, %c0_32] : memref<72x8xbf16, #tpu.memory_space<vmem>>, vector<8x8xbf16>
    %cst_33 = arith.constant dense<0.000000e+00> : vector<256x8xf32>
    %38 = tpu.matmul %36, %37, %cst_33 {dimension_numbers = #tpu.dot_dimension_numbers<[1], [0], [0], [1], [0, 0, 1, 1], [], []>} : vector<256x8xbf16>, vector<8x8xbf16>, vector<256x8xf32> -> vector<256x8xf32>
    %39 = arith.addf %35, %38 : vector<256x8xf32>
    %40 = vector.shape_cast %24 : vector<16x16x8xbf16> to vector<256x8xbf16>
    %c16 = arith.constant 16 : index
    %c0_34 = arith.constant 0 : index
    %41 = vector.load %arg4[%c16, %c0_34] : memref<72x8xbf16, #tpu.memory_space<vmem>>, vector<8x8xbf16>
    %cst_35 = arith.constant dense<0.000000e+00> : vector<256x8xf32>
    %42 = tpu.matmul %40, %41, %cst_35 {dimension_numbers = #tpu.dot_dimension_numbers<[1], [0], [0], [1], [0, 0, 1, 1], [], []>} : vector<256x8xbf16>, vector<8x8xbf16>, vector<256x8xf32> -> vector<256x8xf32>
    %43 = arith.addf %39, %42 : vector<256x8xf32>
    %44 = vector.shape_cast %25 : vector<16x16x8xbf16> to vector<256x8xbf16>
    %c24 = arith.constant 24 : index
    %c0_36 = arith.constant 0 : index
    %45 = vector.load %arg4[%c24, %c0_36] : memref<72x8xbf16, #tpu.memory_space<vmem>>, vector<8x8xbf16>
    %cst_37 = arith.constant dense<0.000000e+00> : vector<256x8xf32>
    %46 = tpu.matmul %44, %45, %cst_37 {dimension_numbers = #tpu.dot_dimension_numbers<[1], [0], [0], [1], [0, 0, 1, 1], [], []>} : vector<256x8xbf16>, vector<8x8xbf16>, vector<256x8xf32> -> vector<256x8xf32>
    %47 = arith.addf %43, %46 : vector<256x8xf32>
    %48 = vector.shape_cast %26 : vector<16x16x8xbf16> to vector<256x8xbf16>
    %c32 = arith.constant 32 : index
    %c0_38 = arith.constant 0 : index
    %49 = vector.load %arg4[%c32, %c0_38] : memref<72x8xbf16, #tpu.memory_space<vmem>>, vector<8x8xbf16>
    %cst_39 = arith.constant dense<0.000000e+00> : vector<256x8xf32>
    %50 = tpu.matmul %48, %49, %cst_39 {dimension_numbers = #tpu.dot_dimension_numbers<[1], [0], [0], [1], [0, 0, 1, 1], [], []>} : vector<256x8xbf16>, vector<8x8xbf16>, vector<256x8xf32> -> vector<256x8xf32>
    %51 = arith.addf %47, %50 : vector<256x8xf32>
    %52 = vector.shape_cast %27 : vector<16x16x8xbf16> to vector<256x8xbf16>
    %c40 = arith.constant 40 : index
    %c0_40 = arith.constant 0 : index
    %53 = vector.load %arg4[%c40, %c0_40] : memref<72x8xbf16, #tpu.memory_space<vmem>>, vector<8x8xbf16>
    %cst_41 = arith.constant dense<0.000000e+00> : vector<256x8xf32>
    %54 = tpu.matmul %52, %53, %cst_41 {dimension_numbers = #tpu.dot_dimension_numbers<[1], [0], [0], [1], [0, 0, 1, 1], [], []>} : vector<256x8xbf16>, vector<8x8xbf16>, vector<256x8xf32> -> vector<256x8xf32>
    %55 = arith.addf %51, %54 : vector<256x8xf32>
    %56 = vector.shape_cast %28 : vector<16x16x8xbf16> to vector<256x8xbf16>
    %c48 = arith.constant 48 : index
    %c0_42 = arith.constant 0 : index
    %57 = vector.load %arg4[%c48, %c0_42] : memref<72x8xbf16, #tpu.memory_space<vmem>>, vector<8x8xbf16>
    %cst_43 = arith.constant dense<0.000000e+00> : vector<256x8xf32>
    %58 = tpu.matmul %56, %57, %cst_43 {dimension_numbers = #tpu.dot_dimension_numbers<[1], [0], [0], [1], [0, 0, 1, 1], [], []>} : vector<256x8xbf16>, vector<8x8xbf16>, vector<256x8xf32> -> vector<256x8xf32>
    %59 = arith.addf %55, %58 : vector<256x8xf32>
    %60 = vector.shape_cast %29 : vector<16x16x8xbf16> to vector<256x8xbf16>
    %c56 = arith.constant 56 : index
    %c0_44 = arith.constant 0 : index
    %61 = vector.load %arg4[%c56, %c0_44] : memref<72x8xbf16, #tpu.memory_space<vmem>>, vector<8x8xbf16>
    %cst_45 = arith.constant dense<0.000000e+00> : vector<256x8xf32>
    %62 = tpu.matmul %60, %61, %cst_45 {dimension_numbers = #tpu.dot_dimension_numbers<[1], [0], [0], [1], [0, 0, 1, 1], [], []>} : vector<256x8xbf16>, vector<8x8xbf16>, vector<256x8xf32> -> vector<256x8xf32>
    %63 = arith.addf %59, %62 : vector<256x8xf32>
    %64 = vector.shape_cast %30 : vector<16x16x8xbf16> to vector<256x8xbf16>
    %c64 = arith.constant 64 : index
    %c0_46 = arith.constant 0 : index
    %65 = vector.load %arg4[%c64, %c0_46] : memref<72x8xbf16, #tpu.memory_space<vmem>>, vector<8x8xbf16>
    %cst_47 = arith.constant dense<0.000000e+00> : vector<256x8xf32>
    %66 = tpu.matmul %64, %65, %cst_47 {dimension_numbers = #tpu.dot_dimension_numbers<[1], [0], [0], [1], [0, 0, 1, 1], [], []>} : vector<256x8xbf16>, vector<8x8xbf16>, vector<256x8xf32> -> vector<256x8xf32>
    %67 = arith.addf %63, %66 : vector<256x8xf32>
    %68 = vector.shape_cast %67 : vector<256x8xf32> to vector<16x16x8xf32>
    %69 = vector.shape_cast %68 : vector<16x16x8xf32> to vector<8x2x16x8xf32>
    %70 = vector.extract_strided_slice %69 {offsets = [0, 0, 0, 0], sizes = [8, 1, 16, 8], strides = [1, 1, 1, 1]} : vector<8x2x16x8xf32> to vector<8x1x16x8xf32>
    %71 = vector.shape_cast %70 : vector<8x1x16x8xf32> to vector<8x16x8xf32>
    %72 = vector.shape_cast %71 : vector<8x16x8xf32> to vector<8x8x2x8xf32>
    %73 = vector.extract_strided_slice %72 {offsets = [0, 0, 0, 0], sizes = [8, 8, 1, 8], strides = [1, 1, 1, 1]} : vector<8x8x2x8xf32> to vector<8x8x1x8xf32>
    %74 = vector.shape_cast %73 : vector<8x8x1x8xf32> to vector<8x8x8xf32>
    %75 = vector.shape_cast %74 : vector<8x8x8xf32> to vector<64x8xf32>
    %c0_48 = arith.constant 0 : index
    %c0_49 = arith.constant 0 : index
    %76 = vector.load %arg5[%c0_48, %c0_49] : memref<1x8xf32, #tpu.memory_space<vmem>>, vector<1x8xf32>
    %77 = vector.broadcast %76 : vector<1x8xf32> to vector<64x8xf32>
    %78 = arith.addf %75, %77 : vector<64x8xf32>
    %cst_50 = arith.constant 0.000000e+00 : f32
    %79 = vector.broadcast %cst_50 : f32 to vector<64x8xf32>
    %80 = arith.maximumf %78, %79 : vector<64x8xf32>
    %81 = arith.truncf %80 : vector<64x8xf32> to vector<64x8xbf16>
    %82 = vector.shape_cast %1 : vector<16x16x16xbf16> to vector<8x2x16x16xbf16>
    %83 = vector.extract_strided_slice %82 {offsets = [0, 0, 0, 0], sizes = [8, 1, 16, 16], strides = [1, 1, 1, 1]} : vector<8x2x16x16xbf16> to vector<8x1x16x16xbf16>
    %84 = vector.shape_cast %83 : vector<8x1x16x16xbf16> to vector<8x16x16xbf16>
    %85 = vector.shape_cast %84 : vector<8x16x16xbf16> to vector<8x8x2x16xbf16>
    %86 = vector.extract_strided_slice %85 {offsets = [0, 0, 0, 0], sizes = [8, 8, 1, 16], strides = [1, 1, 1, 1]} : vector<8x8x2x16xbf16> to vector<8x8x1x16xbf16>
    %87 = vector.shape_cast %86 : vector<8x8x1x16xbf16> to vector<8x8x16xbf16>
    %88 = vector.shape_cast %87 : vector<8x8x16xbf16> to vector<64x16xbf16>
    %c0_51 = arith.constant 0 : index
    %c0_52 = arith.constant 0 : index
    %89 = vector.load %arg6[%c0_51, %c0_52] : memref<24x32xbf16, #tpu.memory_space<vmem>>, vector<8x32xbf16>
    %cst_53 = arith.constant dense<0.000000e+00> : vector<64x32xf32>
    %90 = tpu.matmul %81, %89, %cst_53 {dimension_numbers = #tpu.dot_dimension_numbers<[1], [0], [0], [1], [0, 0, 1, 1], [], []>} : vector<64x8xbf16>, vector<8x32xbf16>, vector<64x32xf32> -> vector<64x32xf32>
    %c8_54 = arith.constant 8 : index
    %c0_55 = arith.constant 0 : index
    %91 = vector.load %arg6[%c8_54, %c0_55] : memref<24x32xbf16, #tpu.memory_space<vmem>>, vector<16x32xbf16>
    %cst_56 = arith.constant dense<0.000000e+00> : vector<64x32xf32>
    %92 = tpu.matmul %88, %91, %cst_56 {dimension_numbers = #tpu.dot_dimension_numbers<[1], [0], [0], [1], [0, 0, 1, 1], [], []>} : vector<64x16xbf16>, vector<16x32xbf16>, vector<64x32xf32> -> vector<64x32xf32>
    %93 = arith.addf %90, %92 : vector<64x32xf32>
    %c0_57 = arith.constant 0 : index
    %c0_58 = arith.constant 0 : index
    %94 = vector.load %arg7[%c0_57, %c0_58] : memref<1x32xf32, #tpu.memory_space<vmem>>, vector<1x32xf32>
    %95 = vector.broadcast %94 : vector<1x32xf32> to vector<64x32xf32>
    %96 = arith.addf %93, %95 : vector<64x32xf32>
    %cst_59 = arith.constant 0.000000e+00 : f32
    %97 = vector.broadcast %cst_59 : f32 to vector<64x32xf32>
    %98 = arith.maximumf %96, %97 : vector<64x32xf32>
    %99 = vector.shape_cast %98 : vector<64x32xf32> to vector<8x8x32xf32>
    %c0_60 = arith.constant 0 : index
    %c0_61 = arith.constant 0 : index
    %c0_62 = arith.constant 0 : index
    %c0_63 = arith.constant 0 : index
    %100 = vector.load %arg8[%c0_60, %c0_61, %c0_62, %c0_63] : memref<1x8x8x32xf32, #tpu.memory_space<vmem>>, vector<1x8x8x32xf32>
    %101 = vector.shape_cast %100 : vector<1x8x8x32xf32> to vector<8x8x32xf32>
    %102 = vector.shape_cast %99 : vector<8x8x32xf32> to vector<1x8x8x32xf32>
    tpu.vector_store %arg8[%c0_60, %c0_61, %c0_62, %c0_63], %102 {strides = array<i32>} : memref<1x8x8x32xf32, #tpu.memory_space<vmem>>, vector<1x8x8x32xf32>,
    return
  }
  func.func @transform_0(%arg0: i32) -> (i32, i32, i32, i32) {
    %c0_i32 = arith.constant 0 : i32
    %c0_i32_0 = arith.constant 0 : i32
    %c0_i32_1 = arith.constant 0 : i32
    %c0_i32_2 = arith.constant 0 : i32
    return %arg0, %c0_i32, %c0_i32_0, %c0_i32_1 : i32, i32, i32, i32
  }
  func.func @transform_1(%arg0: i32) -> (i32, i32) {
    %c0_i32 = arith.constant 0 : i32
    %c0_i32_0 = arith.constant 0 : i32
    %c0_i32_1 = arith.constant 0 : i32
    return %c0_i32, %c0_i32_0 : i32, i32
  }
  func.func @transform_2(%arg0: i32) -> (i32, i32) {
    %c0_i32 = arith.constant 0 : i32
    %c0_i32_0 = arith.constant 0 : i32
    %c0_i32_1 = arith.constant 0 : i32
    return %c0_i32, %c0_i32_0 : i32, i32
  }
  func.func @transform_3(%arg0: i32) -> (i32, i32) {
    %c0_i32 = arith.constant 0 : i32
    %c0_i32_0 = arith.constant 0 : i32
    %c0_i32_1 = arith.constant 0 : i32
    return %c0_i32, %c0_i32_0 : i32, i32
  }
  func.func @transform_4(%arg0: i32) -> (i32, i32) {
    %c0_i32 = arith.constant 0 : i32
    %c0_i32_0 = arith.constant 0 : i32
    %c0_i32_1 = arith.constant 0 : i32
    return %c0_i32, %c0_i32_0 : i32, i32
  }
  func.func @transform_5(%arg0: i32) -> (i32, i32) {
    %c0_i32 = arith.constant 0 : i32
    %c0_i32_0 = arith.constant 0 : i32
    %c0_i32_1 = arith.constant 0 : i32
    return %c0_i32, %c0_i32_0 : i32, i32
  }
  func.func @transform_6(%arg0: i32) -> (i32, i32) {
    %c0_i32 = arith.constant 0 : i32
    %c0_i32_0 = arith.constant 0 : i32
    %c0_i32_1 = arith.constant 0 : i32
    return %c0_i32, %c0_i32_0 : i32, i32
  }
  func.func @transform_7(%arg0: i32) -> (i32, i32, i32, i32) {
    %c0_i32 = arith.constant 0 : i32
    %c0_i32_0 = arith.constant 0 : i32
    %c0_i32_1 = arith.constant 0 : i32
    %c0_i32_2 = arith.constant 0 : i32
    return %arg0, %c0_i32, %c0_i32_0, %c0_i32_1 : i32, i32, i32, i32
  }
}

</mosaic_0001>

<llo_original>
// kernel: tpu_custom_call.1
$region0: #{tpu_custom_call.1}
  #allocation0 [shape = 'u32[]', space=smem, size = 0x4, offset = 0x4, fixed_abs, tag = 'smem constant byte address 0x4 - core index']
  #allocation1 [shape = 'u32[144,128]{1,0:T(1,128)}', space=vmem, size = 0x12000, scoped, tag = 'internal scratch']
  #allocation2 [shape = 'bf16[18,18,8]{2,1,0:T(8,128)(2,1)}', space=vmem, size = 0x1b000, scoped, tag = 'scratch operand']
  %s0 = inlined_call_operand.hbm [shape: bf16[2,16,16,16], index: 0, kind: input, shape index: {}]
  %s1 = inlined_call_operand.vmem [shape: bf16[16,8], index: 1, kind: input, shape index: {}]
  %s2 = inlined_call_operand.vmem [shape: f32[1,8], index: 2, kind: input, shape index: {}]
  %s3 = inlined_call_operand.vmem [shape: bf16[72,8], index: 3, kind: input, shape index: {}]
  %s4 = inlined_call_operand.vmem [shape: f32[1,8], index: 4, kind: input, shape index: {}]
  %s5 = inlined_call_operand.vmem [shape: bf16[24,32], index: 5, kind: input, shape index: {}]
  %s6 = inlined_call_operand.vmem [shape: f32[1,32], index: 6, kind: input, shape index: {}]
  %s7 = inlined_call_operand.hbm [shape: f32[2,8,8,32], index: 7, kind: output, shape index: {}]
  %s8 = sld [smem:[#allocation0]]
  $region65: #{tpu_custom_call.1} parent=0
    _
  %s10 = ssub.s32 1, %s8
  %s11 = scalar_select 0, %s10, %s8
  $region1: #{tpu_custom_call.1} parent=0
    #allocation3 [shape = 'u8[131072]{0}', space=vmem, size = 0x20000, scoped, tag = 'input window, operand 0']
    #allocation4 [shape = 's32[2]{0}', space=sflag, size = 0x8, scoped, tag = 'scoped memory for tpu_custom_call.1']
    #allocation5 [shape = 's32[2]{0}', space=sflag, size = 0x8, scoped, tag = 'scoped memory for tpu_custom_call.1']
    #allocation6 [shape = 'u8[65536]{0}', space=vmem, size = 0x10000, scoped, tag = 'output window, operand 0']
    %12 = vsyncpa [#allocation4], 0
    %s13 = scalar_lea.sflag [#allocation4], 1
    %14 = vsyncpa %s13, 0
    %15 = vsyncpa [#allocation5], 0
    %s16 = scalar_lea.sflag [#allocation5], 1
    %17 = vsyncpa %s16, 0
    loop: start=0, step=1, limit=4
    $region2: #{tpu_custom_call.1} parent=1 // loop_pre_header
      _
    $region3: #{tpu_custom_call.1} parent=1 // loop_header
      %s19 = sphi 0, %s23
      %p20 = scmp.ge.s32.totalorder %s19, 4
      %s29 = sphi 0, %s31
      %s32 = sphi 0, %s29
      %s33 = sphi 0, %s32
      %s49 = sphi 0, %s33
      %s53 = sphi 0, %s53
      %s55 = sphi 0, %s53
      %s56 = sphi 0, %s55
      %s70 = sphi 0, %s56
      %s74 = sphi 0, %s74
      %s76 = sphi 0, %s74
      %s77 = sphi 0, %s76
      %s91 = sphi 0, %s77
      %s95 = sphi 0, %s95
      %s97 = sphi 0, %s95
      %s98 = sphi 0, %s97
      %s112 = sphi 0, %s98
      %s116 = sphi 0, %s116
      %s118 = sphi 0, %s116
      %s119 = sphi 0, %s118
      %s133 = sphi 0, %s119
      %s137 = sphi 0, %s137
      %s139 = sphi 0, %s137
      %s140 = sphi 0, %s139
      %s154 = sphi 0, %s140
      %s158 = sphi 0, %s158
      %s160 = sphi 0, %s158
      %s161 = sphi 0, %s160
      %s175 = sphi 0, %s161
      %s181 = sphi 0, %s183
      %s184 = sphi 0, %s181
      %s185 = sphi 0, %s184
      %s201 = sphi 0, %s185
    $region4: #{tpu_custom_call.1} parent=1 // loop_header_branch
      %22 = sbr.rel (%p20) target = $region8
    $region5: #{tpu_custom_call.1} parent=1 // loop_body
      %s24 = ssub.s32 %s19, 1
      %s25 = ssub.s32 %s19, 2
      %s26 = sadd.s32 %s19, 1
      %s27 = ssub.s32 %s19, %s26
      %p28 = scmp.eq.s32.totalorder %s27, 0
      %s30 = sadd.s32 %s29, 1
      %s31 = scalar_select %p28, %s29, %s30
      %p34 = pneg %p28
      %p35 = scmp.eq.s32.totalorder %s19, 1
      %p36 = por %p34, %p35
      %p37 = scmp.ne.s32.totalorder %s29, %s32
      %p38 = scmp.eq.s32.totalorder %s19, 0
      %p39 = por %p37, %p38
      %p40 = scmp.ne.s32.totalorder %s29, %s32
      %p41 = scmp.eq.s32.totalorder %s24, 1
      %p42 = por %p40, %p41
      %p43 = scmp.ne.s32.totalorder %s32, %s33
      %p44 = scmp.eq.s32.totalorder %s24, 0
      %p45 = por %p43, %p44
      %p46 = scmp.ne.s32.totalorder %s32, %s33
      %p47 = scmp.eq.s32.totalorder %s25, 1
      %p48 = por %p46, %p47
      %p50 = scmp.ne.s32.totalorder %s33, %s49
      %p51 = scmp.eq.s32.totalorder %s25, 0
      %p52 = por %p50, %p51
      %s54 = sadd.s32 %s53, 1
      %p57 = scmp.eq.s32.totalorder %s19, 1
      %p58 = scmp.ne.s32.totalorder %s53, %s55
      %p59 = scmp.eq.s32.totalorder %s19, 0
      %p60 = por %p58, %p59
      %p61 = scmp.ne.s32.totalorder %s53, %s55
      %p62 = scmp.eq.s32.totalorder %s24, 1
      %p63 = por %p61, %p62
      %p64 = scmp.ne.s32.totalorder %s55, %s56
      %p65 = scmp.eq.s32.totalorder %s24, 0
      %p66 = por %p64, %p65
      %p67 = scmp.ne.s32.totalorder %s55, %s56
      %p68 = scmp.eq.s32.totalorder %s25, 1
      %p69 = por %p67, %p68
      %p71 = scmp.ne.s32.totalorder %s56, %s70
      %p72 = scmp.eq.s32.totalorder %s25, 0
      %p73 = por %p71, %p72
      %s75 = sadd.s32 %s74, 1
      %p78 = scmp.eq.s32.totalorder %s19, 1
      %p79 = scmp.ne.s32.totalorder %s74, %s76
      %p80 = scmp.eq.s32.totalorder %s19, 0
      %p81 = por %p79, %p80
      %p82 = scmp.ne.s32.totalorder %s74, %s76
      %p83 = scmp.eq.s32.totalorder %s24, 1
      %p84 = por %p82, %p83
      %p85 = scmp.ne.s32.totalorder %s76, %s77
      %p86 = scmp.eq.s32.totalorder %s24, 0
      %p87 = por %p85, %p86
      %p88 = scmp.ne.s32.totalorder %s76, %s77
      %p89 = scmp.eq.s32.totalorder %s25, 1
      %p90 = por %p88, %p89
      %p92 = scmp.ne.s32.totalorder %s77, %s91
      %p93 = scmp.eq.s32.totalorder %s25, 0
      %p94 = por %p92, %p93
      %s96 = sadd.s32 %s95, 1
      %p99 = scmp.eq.s32.totalorder %s19, 1
      %p100 = scmp.ne.s32.totalorder %s95, %s97
      %p101 = scmp.eq.s32.totalorder %s19, 0
      %p102 = por %p100, %p101
      %p103 = scmp.ne.s32.totalorder %s95, %s97
      %p104 = scmp.eq.s32.totalorder %s24, 1
      %p105 = por %p103, %p104
      %p106 = scmp.ne.s32.totalorder %s97, %s98
      %p107 = scmp.eq.s32.totalorder %s24, 0
      %p108 = por %p106, %p107
      %p109 = scmp.ne.s32.totalorder %s97, %s98
      %p110 = scmp.eq.s32.totalorder %s25, 1
      %p111 = por %p109, %p110
      %p113 = scmp.ne.s32.totalorder %s98, %s112
      %p114 = scmp.eq.s32.totalorder %s25, 0
      %p115 = por %p113, %p114
      %s117 = sadd.s32 %s116, 1
      %p120 = scmp.eq.s32.totalorder %s19, 1
      %p121 = scmp.ne.s32.totalorder %s116, %s118
      %p122 = scmp.eq.s32.totalorder %s19, 0
      %p123 = por %p121, %p122
      %p124 = scmp.ne.s32.totalorder %s116, %s118
      %p125 = scmp.eq.s32.totalorder %s24, 1
      %p126 = por %p124, %p125
      %p127 = scmp.ne.s32.totalorder %s118, %s119
      %p128 = scmp.eq.s32.totalorder %s24, 0
      %p129 = por %p127, %p128
      %p130 = scmp.ne.s32.totalorder %s118, %s119
      %p131 = scmp.eq.s32.totalorder %s25, 1
      %p132 = por %p130, %p131
      %p134 = scmp.ne.s32.totalorder %s119, %s133
      %p135 = scmp.eq.s32.totalorder %s25, 0
      %p136 = por %p134, %p135
      %s138 = sadd.s32 %s137, 1
      %p141 = scmp.eq.s32.totalorder %s19, 1
      %p142 = scmp.ne.s32.totalorder %s137, %s139
      %p143 = scmp.eq.s32.totalorder %s19, 0
      %p144 = por %p142, %p143
      %p145 = scmp.ne.s32.totalorder %s137, %s139
      %p146 = scmp.eq.s32.totalorder %s24, 1
      %p147 = por %p145, %p146
      %p148 = scmp.ne.s32.totalorder %s139, %s140
      %p149 = scmp.eq.s32.totalorder %s24, 0
      %p150 = por %p148, %p149
      %p151 = scmp.ne.s32.totalorder %s139, %s140
      %p152 = scmp.eq.s32.totalorder %s25, 1
      %p153 = por %p151, %p152
      %p155 = scmp.ne.s32.totalorder %s140, %s154
      %p156 = scmp.eq.s32.totalorder %s25, 0
      %p157 = por %p155, %p156
      %s159 = sadd.s32 %s158, 1
      %p162 = scmp.eq.s32.totalorder %s19, 1
      %p163 = scmp.ne.s32.totalorder %s158, %s160
      %p164 = scmp.eq.s32.totalorder %s19, 0
      %p165 = por %p163, %p164
      %p166 = scmp.ne.s32.totalorder %s158, %s160
      %p167 = scmp.eq.s32.totalorder %s24, 1
      %p168 = por %p166, %p167
      %p169 = scmp.ne.s32.totalorder %s160, %s161
      %p170 = scmp.eq.s32.totalorder %s24, 0
      %p171 = por %p169, %p170
      %p172 = scmp.ne.s32.totalorder %s160, %s161
      %p173 = scmp.eq.s32.totalorder %s25, 1
      %p174 = por %p172, %p173
      %p176 = scmp.ne.s32.totalorder %s161, %s175
      %p177 = scmp.eq.s32.totalorder %s25, 0
      %p178 = por %p176, %p177
      %s179 = ssub.s32 %s19, %s26
      %p180 = scmp.eq.s32.totalorder %s179, 0
      %s182 = sadd.s32 %s181, 1
      %s183 = scalar_select %p180, %s181, %s182
      %p186 = pneg %p180
      %p187 = scmp.eq.s32.totalorder %s19, 1
      %p188 = por %p186, %p187
      %p189 = scmp.ne.s32.totalorder %s181, %s184
      %p190 = scmp.eq.s32.totalorder %s19, 0
      %p191 = por %p189, %p190
      %p192 = scmp.ne.s32.totalorder %s181, %s184
      %p193 = scmp.eq.s32.totalorder %s24, 1
      %p194 = por %p192, %p193
      %p195 = scmp.ne.s32.totalorder %s184, %s185
      %p196 = scmp.eq.s32.totalorder %s24, 0
      %p197 = por %p195, %p196
      %p198 = scmp.ne.s32.totalorder %s184, %s185
      %p199 = scmp.eq.s32.totalorder %s25, 1
      %p200 = por %p198, %p199
      %p202 = scmp.ne.s32.totalorder %s185, %s201
      %p203 = scmp.eq.s32.totalorder %s25, 0
      %p204 = por %p202, %p203
      %p205 = scmp.le.s32.totalorder 1, %s19
      %p206 = scmp.lt.s32.totalorder %s19, 3
      %p207 = pnand %p205, %p206
      %p208 = pneg %p207
      // Predicated region
      $region9: #{tpu_custom_call.1} parent=5 // pred_check
        _
      $region10: #{tpu_custom_call.1} parent=5 // pred_check_branch
        %210 = sbr.rel (%p207) target = $region12
      $region11: #{tpu_custom_call.1} parent=5 // pred_region
        %s211 = ssub.s32 %s19, 1
        // Predicated region
        $region13: #{tpu_custom_call.1} parent=11 // pred_check
          %p212 = pneg %p66
        $region14: #{tpu_custom_call.1} parent=11 // pred_check_branch
          %214 = sbr.rel (%p212) target = $region16
        $region15: #{tpu_custom_call.1} parent=11 // pred_region
          _
        $region16: #{tpu_custom_call.1} parent=11 // pred_fallthru
          _
        // Predicated region
        $region17: #{tpu_custom_call.1} parent=11 // pred_check
          %p215 = pneg %p87
        $region18: #{tpu_custom_call.1} parent=11 // pred_check_branch
          %217 = sbr.rel (%p215) target = $region20
        $region19: #{tpu_custom_call.1} parent=11 // pred_region
          _
        $region20: #{tpu_custom_call.1} parent=11 // pred_fallthru
          _
        // Predicated region
        $region21: #{tpu_custom_call.1} parent=11 // pred_check
          %p218 = pneg %p108
        $region22: #{tpu_custom_call.1} parent=11 // pred_check_branch
          %220 = sbr.rel (%p218) target = $region24
        $region23: #{tpu_custom_call.1} parent=11 // pred_region
          _
        $region24: #{tpu_custom_call.1} parent=11 // pred_fallthru
          _
        // Predicated region
        $region25: #{tpu_custom_call.1} parent=11 // pred_check
          %p221 = pneg %p129
        $region26: #{tpu_custom_call.1} parent=11 // pred_check_branch
          %223 = sbr.rel (%p221) target = $region28
        $region27: #{tpu_custom_call.1} parent=11 // pred_region
          _
        $region28: #{tpu_custom_call.1} parent=11 // pred_fallthru
          _
        // Predicated region
        $region29: #{tpu_custom_call.1} parent=11 // pred_check
          %p224 = pneg %p150
        $region30: #{tpu_custom_call.1} parent=11 // pred_check_branch
          %226 = sbr.rel (%p224) target = $region32
        $region31: #{tpu_custom_call.1} parent=11 // pred_region
          _
        $region32: #{tpu_custom_call.1} parent=11 // pred_fallthru
          _
        // Predicated region
        $region33: #{tpu_custom_call.1} parent=11 // pred_check
          %p227 = pneg %p171
        $region34: #{tpu_custom_call.1} parent=11 // pred_check_branch
          %229 = sbr.rel (%p227) target = $region36
        $region35: #{tpu_custom_call.1} parent=11 // pred_region
          _
        $region36: #{tpu_custom_call.1} parent=11 // pred_fallthru
          _
      $region12: #{tpu_custom_call.1} parent=5 // pred_fallthru
        _
      %p230 = scmp.lt.s32.totalorder %s19, 2
      // Predicated region
      $region37: #{tpu_custom_call.1} parent=5 // pred_check
        %p231 = pneg %p230
      $region38: #{tpu_custom_call.1} parent=5 // pred_check_branch
        %233 = sbr.rel (%p231) target = $region40
      $region39: #{tpu_custom_call.1} parent=5 // pred_region
        // Predicated region
        $region41: #{tpu_custom_call.1} parent=39 // pred_check
          %p234 = pneg %p39
        $region42: #{tpu_custom_call.1} parent=39 // pred_check_branch
          %236 = sbr.rel (%p234) target = $region44
        $region43: #{tpu_custom_call.1} parent=39 // pred_region
          %s237 = sand.u32 %s29, 1
          %s238 = scalar_lea.sflag [#allocation4], %s237
          %s239 = sand.u32 %s29, 1
          %s240 = smul.addr %s239, 128
          %s241 = scalar_lea.vmem [#allocation3], %s240
          %s243 = ssub.s32 2048, 2048
          %244 = vsyncadd %s238, %s243
          %s245 = smul.addr %s19, 32
          %s246 = smul.addr %s245, 64
          %s247 = scalar_lea.hbm %s0, %s246
          %s248 = sshll.u32 %s241, 4
          %s249 = int_to_ptr.vmem [resolvable:$true] %s248
          %254 = dma.hbm_to_vmem [thread:$0]  %s247, 2048, %s249, %s238, 64, 64, 4
        $region44: #{tpu_custom_call.1} parent=39 // pred_fallthru
          _
      $region40: #{tpu_custom_call.1} parent=5 // pred_fallthru
        _
      %p255 = scmp.le.s32.totalorder 1, %s19
      %p256 = scmp.lt.s32.totalorder %s19, 3
      %p257 = pnand %p255, %p256
      %p258 = pneg %p257
      // Predicated region
      $region45: #{tpu_custom_call.1} parent=5 // pred_check
        _
      $region46: #{tpu_custom_call.1} parent=5 // pred_check_branch
        %260 = sbr.rel (%p257) target = $region48
      $region47: #{tpu_custom_call.1} parent=5 // pred_region
        %s261 = ssub.s32 %s19, 1
        %s262 = sand.u32 %s32, 1
        %s263 = scalar_lea.sflag [#allocation4], %s262
        %s264 = sand.u32 %s32, 1
        %s265 = smul.addr %s264, 128
        %s266 = scalar_lea.vmem [#allocation3], %s265
        // Predicated region
        $region49: #{tpu_custom_call.1} parent=47 // pred_check
          %p267 = pneg %p45
        $region50: #{tpu_custom_call.1} parent=47 // pred_check_branch
          %269 = sbr.rel (%p267) target = $region52
        $region51: #{tpu_custom_call.1} parent=47 // pred_region
          %270 = dma.done %s263, 2048
        $region52: #{tpu_custom_call.1} parent=47 // pred_fallthru
          _
        %s271 = sand.u32 %s32, 1
        %s272 = scalar_lea.sflag [#allocation4], %s271
        %s273 = sand.u32 %s32, 1
        %s274 = smul.addr %s273, 128
        %s275 = scalar_lea.vmem [#allocation3], %s274
        %p276 = pneg %p45
        %p277 = pneg %p42
        %p278 = pneg %p66
        %p279 = pneg %p63
        %p280 = pneg %p87
        %p281 = pneg %p84
        %p282 = pneg %p108
        %p283 = pneg %p105
        %p284 = pneg %p129
        %p285 = pneg %p126
        %p286 = pneg %p150
        %p287 = pneg %p147
        %p288 = pneg %p171
        %p289 = pneg %p168
        %p290 = pneg %p197
        %p291 = pneg %p194
        %s292 = sand.u32 %s184, 1
        %s293 = scalar_lea.sflag [#allocation5], %s292
        %s294 = sand.u32 %s184, 1
        %s295 = smul.addr %s294, 64
        %s296 = scalar_lea.vmem [#allocation6], %s295
        %v298 = vld [vmem:[%s266] sm:$0xf]
        %v299 = vld [vmem:[%s266 + $0x4] sm:$0xf]
        %v300 = vld [vmem:[%s266 + $0x8] sm:$0xf]
        %v301 = vld [vmem:[%s266 + $0xc] sm:$0xf]
        %v302 = vld [vmem:[%s266 + $0x10] sm:$0xf]
        %v303 = vld [vmem:[%s266 + $0x14] sm:$0xf]
        %v304 = vld [vmem:[%s266 + $0x18] sm:$0xf]
        %v305 = vld [vmem:[%s266 + $0x1c] sm:$0xf]
        %v306 = vld [vmem:[%s266 + $0x20] sm:$0xf]
        %v307 = vld [vmem:[%s266 + $0x24] sm:$0xf]
        %v308 = vld [vmem:[%s266 + $0x28] sm:$0xf]
        %v309 = vld [vmem:[%s266 + $0x2c] sm:$0xf]
        %v310 = vld [vmem:[%s266 + $0x30] sm:$0xf]
        %v311 = vld [vmem:[%s266 + $0x34] sm:$0xf]
        %v312 = vld [vmem:[%s266 + $0x38] sm:$0xf]
        %v313 = vld [vmem:[%s266 + $0x3c] sm:$0xf]
        %v314 = vld [vmem:[%s266 + $0x40] sm:$0xf]
        %v315 = vld [vmem:[%s266 + $0x44] sm:$0xf]
        %v316 = vld [vmem:[%s266 + $0x48] sm:$0xf]
        %v317 = vld [vmem:[%s266 + $0x4c] sm:$0xf]
        %v318 = vld [vmem:[%s266 + $0x50] sm:$0xf]
        %v319 = vld [vmem:[%s266 + $0x54] sm:$0xf]
        %v320 = vld [vmem:[%s266 + $0x58] sm:$0xf]
        %v321 = vld [vmem:[%s266 + $0x5c] sm:$0xf]
        %v322 = vld [vmem:[%s266 + $0x60] sm:$0xf]
        %v323 = vld [vmem:[%s266 + $0x64] sm:$0xf]
        %v324 = vld [vmem:[%s266 + $0x68] sm:$0xf]
        %v325 = vld [vmem:[%s266 + $0x6c] sm:$0xf]
        %v326 = vld [vmem:[%s266 + $0x70] sm:$0xf]
        %v327 = vld [vmem:[%s266 + $0x74] sm:$0xf]
        %v328 = vld [vmem:[%s266 + $0x78] sm:$0xf]
        %v329 = vld [vmem:[%s266 + $0x7c] sm:$0xf]
        %v330 = vld [vmem:[%s1] sm:$0xf]
        %v331 = vld [vmem:[%s1 + $0x4] sm:$0xf]
        %v332 = vld [vmem:[%s2] sm:$0x1]
        %v334 = vlaneseq
        %v335 = vshrl.u32 %v334, 7
        %v336 = vsub.s32 0, %v335
        %v337 = vrot.slane %v332, %v336
        %v371 = vunpack.c.l.b16 %v298
        %v372 = vunpack.c.l.b16 %v299
        %v373 = vunpack.c.l.b16 %v300
        %v374 = vunpack.c.l.b16 %v301
        %v375 = vunpack.c.l.b16 %v302
        %v376 = vunpack.c.l.b16 %v303
        %v377 = vunpack.c.l.b16 %v304
        %v378 = vunpack.c.l.b16 %v305
        %v379 = vunpack.c.l.b16 %v306
        %v380 = vunpack.c.l.b16 %v307
        %v381 = vunpack.c.l.b16 %v308
        %v382 = vunpack.c.l.b16 %v309
        %v383 = vunpack.c.l.b16 %v310
        %v384 = vunpack.c.l.b16 %v311
        %v385 = vunpack.c.l.b16 %v312
        %v386 = vunpack.c.l.b16 %v313
        %v387 = vunpack.c.l.b16 %v314
        %v388 = vunpack.c.l.b16 %v315
        %v389 = vunpack.c.l.b16 %v316
        %v390 = vunpack.c.l.b16 %v317
        %v391 = vunpack.c.l.b16 %v318
        %v392 = vunpack.c.l.b16 %v319
        %v393 = vunpack.c.l.b16 %v320
        %v394 = vunpack.c.l.b16 %v321
        %v395 = vunpack.c.l.b16 %v322
        %v396 = vunpack.c.l.b16 %v323
        %v397 = vunpack.c.l.b16 %v324
        %v398 = vunpack.c.l.b16 %v325
        %v399 = vunpack.c.l.b16 %v326
        %v400 = vunpack.c.l.b16 %v327
        %v401 = vunpack.c.l.b16 %v328
        %v402 = vunpack.c.l.b16 %v329
        %v403 = vpack.c.b16 %v372, %v371
        %v404 = vpack.c.b16 %v374, %v373
        %v405 = vpack.c.b16 %v376, %v375
        %v406 = vpack.c.b16 %v378, %v377
        %v407 = vpack.c.b16 %v380, %v379
        %v408 = vpack.c.b16 %v382, %v381
        %v409 = vpack.c.b16 %v384, %v383
        %v410 = vpack.c.b16 %v386, %v385
        %v411 = vpack.c.b16 %v388, %v387
        %v412 = vpack.c.b16 %v390, %v389
        %v413 = vpack.c.b16 %v392, %v391
        %v414 = vpack.c.b16 %v394, %v393
        %v415 = vpack.c.b16 %v396, %v395
        %v416 = vpack.c.b16 %v398, %v397
        %v417 = vpack.c.b16 %v400, %v399
        %v418 = vpack.c.b16 %v402, %v401
        %v421 = vunpack.c.l.b16 %v330
        %v422 = vunpack.c.l.b16 %v331
        %v423 = vpack.c.b16 %v422, %v421
        %vm425 = vcmask 130048
        %v427 = vsel %vm425, %v403, 0
        %v430 = vsel %vm425, %v404, 0
        %v433 = vsel %vm425, %v405, 0
        %v436 = vsel %vm425, %v406, 0
        %v439 = vsel %vm425, %v407, 0
        %v442 = vsel %vm425, %v408, 0
        %v445 = vsel %vm425, %v409, 0
        %v448 = vsel %vm425, %v410, 0
        %v451 = vsel %vm425, %v411, 0
        %v454 = vsel %vm425, %v412, 0
        %v457 = vsel %vm425, %v413, 0
        %v460 = vsel %vm425, %v414, 0
        %v463 = vsel %vm425, %v415, 0
        %v466 = vsel %vm425, %v416, 0
        %v469 = vsel %vm425, %v417, 0
        %v472 = vsel %vm425, %v418, 0
        %474 = vmatprep.subr.bf16.mxu0 0
        %475 = vmatpush1.bf16.msra.mxu0 %v423
        %476 = vmatprep.subr.bf16.mxu0 0
        %477 = vmatpush1.bf16.msra.mxu0 0
        %478 = vmatprep.subr.bf16.mxu0 0
        %479 = vmatpush1.bf16.msra.mxu0 0
        %480 = vmatprep.subr.bf16.mxu0 0
        %481 = vmatpush1.bf16.msra.mxu0 0
        %482 = vmatprep.subr.bf16.mxu0 0
        %483 = vmatpush1.bf16.msra.mxu0 0
        %484 = vmatprep.subr.bf16.mxu0 0
        %485 = vmatpush1.bf16.msra.mxu0 0
        %486 = vmatprep.subr.bf16.mxu0 0
        %487 = vmatpush1.bf16.msra.mxu0 0
        %488 = vmatprep.subr.bf16.mxu0 0
        %489 = vmatpush1.bf16.msra.mxu0 0
        %490 = vmatprep.subr.bf16.mxu0 0
        %491 = vmatpush1.bf16.msra.mxu0 0
        %492 = vmatprep.subr.bf16.mxu0 0
        %493 = vmatpush1.bf16.msra.mxu0 0
        %494 = vmatprep.subr.bf16.mxu0 0
        %495 = vmatpush1.bf16.msra.mxu0 0
        %496 = vmatprep.subr.bf16.mxu0 0
        %497 = vmatpush1.bf16.msra.mxu0 0
        %498 = vmatprep.subr.bf16.mxu0 0
        %499 = vmatpush1.bf16.msra.mxu0 0
        %500 = vmatprep.subr.bf16.mxu0 0
        %501 = vmatpush1.bf16.msra.mxu0 0
        %502 = vmatprep.subr.bf16.mxu0 0
        %503 = vmatpush1.bf16.msra.mxu0 0
        %504 = vmatprep.subr.bf16.mxu0 0
        %505 = vmatpush1.bf16.msra.mxu0 0
        %506 = vmatprep.mubr.bf16.mxu0 0
        %507 = vmatmul.mubr.bf16.gmra.mrb[0].mxu0 %v427
        %v508 = vpop.f32.mrb[0].mxu0
        %v509 = vadd.f32 %v337, %v508
        %v510 = vpop.f32.mrb[0].mxu0
        %v511 = vpop.f32.mrb[0].mxu0
        %v512 = vadd.f32 %v337, %v511
        %v513 = vpop.f32.mrb[0].mxu0
        %514 = vmatprep.mubr.bf16.mxu0 0
        %515 = vmatmul.mubr.bf16.gmra.mrb[0].mxu0 %v430
        %v516 = vpop.f32.mrb[0].mxu0
        %v517 = vadd.f32 %v337, %v516
        %v518 = vpop.f32.mrb[0].mxu0
        %v519 = vpop.f32.mrb[0].mxu0
        %v520 = vadd.f32 %v337, %v519
        %v521 = vpop.f32.mrb[0].mxu0
        %522 = vmatprep.mubr.bf16.mxu0 0
        %523 = vmatmul.mubr.bf16.gmra.mrb[0].mxu0 %v433
        %v524 = vpop.f32.mrb[0].mxu0
        %v525 = vadd.f32 %v337, %v524
        %v526 = vpop.f32.mrb[0].mxu0
        %v527 = vpop.f32.mrb[0].mxu0
        %v528 = vadd.f32 %v337, %v527
        %v529 = vpop.f32.mrb[0].mxu0
        %530 = vmatprep.mubr.bf16.mxu0 0
        %531 = vmatmul.mubr.bf16.gmra.mrb[0].mxu0 %v436
        %v532 = vpop.f32.mrb[0].mxu0
        %v533 = vadd.f32 %v337, %v532
        %v534 = vpop.f32.mrb[0].mxu0
        %v535 = vpop.f32.mrb[0].mxu0
        %v536 = vadd.f32 %v337, %v535
        %v537 = vpop.f32.mrb[0].mxu0
        %538 = vmatprep.mubr.bf16.mxu0 0
        %539 = vmatmul.mubr.bf16.gmra.mrb[0].mxu0 %v439
        %v540 = vpop.f32.mrb[0].mxu0
        %v541 = vadd.f32 %v337, %v540
        %v542 = vpop.f32.mrb[0].mxu0
        %v543 = vpop.f32.mrb[0].mxu0
        %v544 = vadd.f32 %v337, %v543
        %v545 = vpop.f32.mrb[0].mxu0
        %546 = vmatprep.mubr.bf16.mxu0 0
        %547 = vmatmul.mubr.bf16.gmra.mrb[0].mxu0 %v442
        %v548 = vpop.f32.mrb[0].mxu0
        %v549 = vadd.f32 %v337, %v548
        %v550 = vpop.f32.mrb[0].mxu0
        %v551 = vpop.f32.mrb[0].mxu0
        %v552 = vadd.f32 %v337, %v551
        %v553 = vpop.f32.mrb[0].mxu0
        %554 = vmatprep.mubr.bf16.mxu0 0
        %555 = vmatmul.mubr.bf16.gmra.mrb[0].mxu0 %v445
        %v556 = vpop.f32.mrb[0].mxu0
        %v557 = vadd.f32 %v337, %v556
        %v558 = vpop.f32.mrb[0].mxu0
        %v559 = vpop.f32.mrb[0].mxu0
        %v560 = vadd.f32 %v337, %v559
        %v561 = vpop.f32.mrb[0].mxu0
        %562 = vmatprep.mubr.bf16.mxu0 0
        %563 = vmatmul.mubr.bf16.gmra.mrb[0].mxu0 %v448
        %v564 = vpop.f32.mrb[0].mxu0
        %v565 = vadd.f32 %v337, %v564
        %v566 = vpop.f32.mrb[0].mxu0
        %v567 = vpop.f32.mrb[0].mxu0
        %v568 = vadd.f32 %v337, %v567
        %v569 = vpop.f32.mrb[0].mxu0
        %570 = vmatprep.mubr.bf16.mxu0 0
        %571 = vmatmul.mubr.bf16.gmra.mrb[0].mxu0 %v451
        %v572 = vpop.f32.mrb[0].mxu0
        %v573 = vadd.f32 %v337, %v572
        %v574 = vpop.f32.mrb[0].mxu0
        %v575 = vpop.f32.mrb[0].mxu0
        %v576 = vadd.f32 %v337, %v575
        %v577 = vpop.f32.mrb[0].mxu0
        %578 = vmatprep.mubr.bf16.mxu0 0
        %579 = vmatmul.mubr.bf16.gmra.mrb[0].mxu0 %v454
        %v580 = vpop.f32.mrb[0].mxu0
        %v581 = vadd.f32 %v337, %v580
        %v582 = vpop.f32.mrb[0].mxu0
        %v583 = vpop.f32.mrb[0].mxu0
        %v584 = vadd.f32 %v337, %v583
        %v585 = vpop.f32.mrb[0].mxu0
        %586 = vmatprep.mubr.bf16.mxu0 0
        %587 = vmatmul.mubr.bf16.gmra.mrb[0].mxu0 %v457
        %v588 = vpop.f32.mrb[0].mxu0
        %v589 = vadd.f32 %v337, %v588
        %v590 = vpop.f32.mrb[0].mxu0
        %v591 = vpop.f32.mrb[0].mxu0
        %v592 = vadd.f32 %v337, %v591
        %v593 = vpop.f32.mrb[0].mxu0
        %594 = vmatprep.mubr.bf16.mxu0 0
        %595 = vmatmul.mubr.bf16.gmra.mrb[0].mxu0 %v460
        %v596 = vpop.f32.mrb[0].mxu0
        %v597 = vadd.f32 %v337, %v596
        %v598 = vpop.f32.mrb[0].mxu0
        %v599 = vpop.f32.mrb[0].mxu0
        %v600 = vadd.f32 %v337, %v599
        %v601 = vpop.f32.mrb[0].mxu0
        %602 = vmatprep.mubr.bf16.mxu0 0
        %603 = vmatmul.mubr.bf16.gmra.mrb[0].mxu0 %v463
        %v604 = vpop.f32.mrb[0].mxu0
        %v605 = vadd.f32 %v337, %v604
        %v606 = vpop.f32.mrb[0].mxu0
        %v607 = vpop.f32.mrb[0].mxu0
        %v608 = vadd.f32 %v337, %v607
        %v609 = vpop.f32.mrb[0].mxu0
        %610 = vmatprep.mubr.bf16.mxu0 0
        %611 = vmatmul.mubr.bf16.gmra.mrb[0].mxu0 %v466
        %v612 = vpop.f32.mrb[0].mxu0
        %v613 = vadd.f32 %v337, %v612
        %v614 = vpop.f32.mrb[0].mxu0
        %v615 = vpop.f32.mrb[0].mxu0
        %v616 = vadd.f32 %v337, %v615
        %v617 = vpop.f32.mrb[0].mxu0
        %618 = vmatprep.mubr.bf16.mxu0 0
        %619 = vmatmul.mubr.bf16.gmra.mrb[0].mxu0 %v469
        %v620 = vpop.f32.mrb[0].mxu0
        %v621 = vadd.f32 %v337, %v620
        %v622 = vpop.f32.mrb[0].mxu0
        %v623 = vpop.f32.mrb[0].mxu0
        %v624 = vadd.f32 %v337, %v623
        %v625 = vpop.f32.mrb[0].mxu0
        %626 = vmatprep.mubr.bf16.mxu0 0
        %627 = vmatmul.mubr.bf16.gmra.mrb[0].mxu0 %v472
        %v628 = vpop.f32.mrb[0].mxu0
        %v629 = vadd.f32 %v337, %v628
        %v630 = vpop.f32.mrb[0].mxu0
        %v631 = vpop.f32.mrb[0].mxu0
        %v632 = vadd.f32 %v337, %v631
        %v633 = vpop.f32.mrb[0].mxu0
        %634 = vdwg.mxu0
        %v635 = vmax.f32 %v509, 0.0
        %v636 = vmax.f32 %v512, 0.0
        %v637 = vmax.f32 %v517, 0.0
        %v638 = vmax.f32 %v520, 0.0
        %v639 = vmax.f32 %v525, 0.0
        %v640 = vmax.f32 %v528, 0.0
        %v641 = vmax.f32 %v533, 0.0
        %v642 = vmax.f32 %v536, 0.0
        %v643 = vmax.f32 %v541, 0.0
        %v644 = vmax.f32 %v544, 0.0
        %v645 = vmax.f32 %v549, 0.0
        %v646 = vmax.f32 %v552, 0.0
        %v647 = vmax.f32 %v557, 0.0
        %v648 = vmax.f32 %v560, 0.0
        %v649 = vmax.f32 %v565, 0.0
        %v650 = vmax.f32 %v568, 0.0
        %v651 = vmax.f32 %v573, 0.0
        %v652 = vmax.f32 %v576, 0.0
        %v653 = vmax.f32 %v581, 0.0
        %v654 = vmax.f32 %v584, 0.0
        %v655 = vmax.f32 %v589, 0.0
        %v656 = vmax.f32 %v592, 0.0
        %v657 = vmax.f32 %v597, 0.0
        %v658 = vmax.f32 %v600, 0.0
        %v659 = vmax.f32 %v605, 0.0
        %v660 = vmax.f32 %v608, 0.0
        %v661 = vmax.f32 %v613, 0.0
        %v662 = vmax.f32 %v616, 0.0
        %v663 = vmax.f32 %v621, 0.0
        %v664 = vmax.f32 %v624, 0.0
        %v665 = vmax.f32 %v629, 0.0
        %v666 = vmax.f32 %v632, 0.0
        %vm667 = vcmask 60416
        %668 = vst.msk [vmem:[#allocation2] sm:$0xf] %vm667, 0
        %669 = vst.msk [vmem:[#allocation2 + $0x4] sm:$0xf] %vm667, 0
        %vm670 = vcmask 57344
        %671 = vst.msk [vmem:[#allocation2 + $0x8] sm:$0x1] %vm670, 0
        %s672 = scalar_lea.vmem [#allocation2], 204
        %673 = vst.msk [vmem:[%s672] sm:$0xf] %vm667, 0
        %674 = vst.msk [vmem:[%s672 + $0x4] sm:$0xf] %vm667, 0
        %675 = vst.msk [vmem:[%s672 + $0x8] sm:$0x1] %vm670, 0
        %s676 = scalar_lea.vmem [#allocation2], 12
        %vm677 = vcmask 57344
        %vm678 = vsmask.f32 256
        %vm679 = vmand %vm677, %vm678
        %v680 = vld [vmem:[%s676] sm:$0x1]
        %v681 = vsel %vm679, 0, %v680
        %682 = vst [vmem:[%s676] sm:$0x1] %v681
        %v683 = vld [vmem:[%s676 + $0xc] sm:$0x1]
        %v684 = vsel %vm679, 0, %v683
        %685 = vst [vmem:[%s676 + $0xc] sm:$0x1] %v684
        %v686 = vld [vmem:[%s676 + $0x18] sm:$0x1]
        %v687 = vsel %vm679, 0, %v686
        %688 = vst [vmem:[%s676 + $0x18] sm:$0x1] %v687
        %v689 = vld [vmem:[%s676 + $0x24] sm:$0x1]
        %v690 = vsel %vm679, 0, %v689
        %691 = vst [vmem:[%s676 + $0x24] sm:$0x1] %v690
        %v692 = vld [vmem:[%s676 + $0x30] sm:$0x1]
        %v693 = vsel %vm679, 0, %v692
        %694 = vst [vmem:[%s676 + $0x30] sm:$0x1] %v693
        %v695 = vld [vmem:[%s676 + $0x3c] sm:$0x1]
        %v696 = vsel %vm679, 0, %v695
        %697 = vst [vmem:[%s676 + $0x3c] sm:$0x1] %v696
        %v698 = vld [vmem:[%s676 + $0x48] sm:$0x1]
        %v699 = vsel %vm679, 0, %v698
        %700 = vst [vmem:[%s676 + $0x48] sm:$0x1] %v699
        %v701 = vld [vmem:[%s676 + $0x54] sm:$0x1]
        %v702 = vsel %vm679, 0, %v701
        %703 = vst [vmem:[%s676 + $0x54] sm:$0x1] %v702
        %v704 = vld [vmem:[%s676 + $0x60] sm:$0x1]
        %v705 = vsel %vm679, 0, %v704
        %706 = vst [vmem:[%s676 + $0x60] sm:$0x1] %v705
        %v707 = vld [vmem:[%s676 + $0x6c] sm:$0x1]
        %v708 = vsel %vm679, 0, %v707
        %709 = vst [vmem:[%s676 + $0x6c] sm:$0x1] %v708
        %v710 = vld [vmem:[%s676 + $0x78] sm:$0x1]
        %v711 = vsel %vm679, 0, %v710
        %712 = vst [vmem:[%s676 + $0x78] sm:$0x1] %v711
        %v713 = vld [vmem:[%s676 + $0x84] sm:$0x1]
        %v714 = vsel %vm679, 0, %v713
        %715 = vst [vmem:[%s676 + $0x84] sm:$0x1] %v714
        %v716 = vld [vmem:[%s676 + $0x90] sm:$0x1]
        %v717 = vsel %vm679, 0, %v716
        %718 = vst [vmem:[%s676 + $0x90] sm:$0x1] %v717
        %v719 = vld [vmem:[%s676 + $0x9c] sm:$0x1]
        %v720 = vsel %vm679, 0, %v719
        %721 = vst [vmem:[%s676 + $0x9c] sm:$0x1] %v720
        %v722 = vld [vmem:[%s676 + $0xa8] sm:$0x1]
        %v723 = vsel %vm679, 0, %v722
        %724 = vst [vmem:[%s676 + $0xa8] sm:$0x1] %v723
        %v725 = vld [vmem:[%s676 + $0xb4] sm:$0x1]
        %v726 = vsel %vm679, 0, %v725
        %727 = vst [vmem:[%s676 + $0xb4] sm:$0x1] %v726
        %vm728 = vsmask.f32 7938
        %vm729 = vmand %vm677, %vm728
        %v730 = vld [vmem:[%s676 + $0x8] sm:$0x1]
        %v731 = vsel %vm729, 0, %v730
        %732 = vst [vmem:[%s676 + $0x8] sm:$0x1] %v731
        %v733 = vld [vmem:[%s676 + $0x14] sm:$0x1]
        %v734 = vsel %vm729, 0, %v733
        %735 = vst [vmem:[%s676 + $0x14] sm:$0x1] %v734
        %v736 = vld [vmem:[%s676 + $0x20] sm:$0x1]
        %v737 = vsel %vm729, 0, %v736
        %738 = vst [vmem:[%s676 + $0x20] sm:$0x1] %v737
        %v739 = vld [vmem:[%s676 + $0x2c] sm:$0x1]
        %v740 = vsel %vm729, 0, %v739
        %741 = vst [vmem:[%s676 + $0x2c] sm:$0x1] %v740
        %v742 = vld [vmem:[%s676 + $0x38] sm:$0x1]
        %v743 = vsel %vm729, 0, %v742
        %744 = vst [vmem:[%s676 + $0x38] sm:$0x1] %v743
        %v745 = vld [vmem:[%s676 + $0x44] sm:$0x1]
        %v746 = vsel %vm729, 0, %v745
        %747 = vst [vmem:[%s676 + $0x44] sm:$0x1] %v746
        %v748 = vld [vmem:[%s676 + $0x50] sm:$0x1]
        %v749 = vsel %vm729, 0, %v748
        %750 = vst [vmem:[%s676 + $0x50] sm:$0x1] %v749
        %v751 = vld [vmem:[%s676 + $0x5c] sm:$0x1]
        %v752 = vsel %vm729, 0, %v751
        %753 = vst [vmem:[%s676 + $0x5c] sm:$0x1] %v752
        %v754 = vld [vmem:[%s676 + $0x68] sm:$0x1]
        %v755 = vsel %vm729, 0, %v754
        %756 = vst [vmem:[%s676 + $0x68] sm:$0x1] %v755
        %v757 = vld [vmem:[%s676 + $0x74] sm:$0x1]
        %v758 = vsel %vm729, 0, %v757
        %759 = vst [vmem:[%s676 + $0x74] sm:$0x1] %v758
        %v760 = vld [vmem:[%s676 + $0x80] sm:$0x1]
        %v761 = vsel %vm729, 0, %v760
        %762 = vst [vmem:[%s676 + $0x80] sm:$0x1] %v761
        %v763 = vld [vmem:[%s676 + $0x8c] sm:$0x1]
        %v764 = vsel %vm729, 0, %v763
        %765 = vst [vmem:[%s676 + $0x8c] sm:$0x1] %v764
        %v766 = vld [vmem:[%s676 + $0x98] sm:$0x1]
        %v767 = vsel %vm729, 0, %v766
        %768 = vst [vmem:[%s676 + $0x98] sm:$0x1] %v767
        %v769 = vld [vmem:[%s676 + $0xa4] sm:$0x1]
        %v770 = vsel %vm729, 0, %v769
        %771 = vst [vmem:[%s676 + $0xa4] sm:$0x1] %v770
        %v772 = vld [vmem:[%s676 + $0xb0] sm:$0x1]
        %v773 = vsel %vm729, 0, %v772
        %774 = vst [vmem:[%s676 + $0xb0] sm:$0x1] %v773
        %v775 = vld [vmem:[%s676 + $0xbc] sm:$0x1]
        %v776 = vsel %vm729, 0, %v775
        %777 = vst [vmem:[%s676 + $0xbc] sm:$0x1] %v776
        %v778 = vpack.c.bf16 %v636, %v635
        %v779 = vpack.c.bf16 %v638, %v637
        %v780 = vpack.c.bf16 %v640, %v639
        %v781 = vpack.c.bf16 %v642, %v641
        %v782 = vpack.c.bf16 %v644, %v643
        %v783 = vpack.c.bf16 %v646, %v645
        %v784 = vpack.c.bf16 %v648, %v647
        %v785 = vpack.c.bf16 %v650, %v649
        %v786 = vpack.c.bf16 %v652, %v651
        %v787 = vpack.c.bf16 %v654, %v653
        %v788 = vpack.c.bf16 %v656, %v655
        %v789 = vpack.c.bf16 %v658, %v657
        %v790 = vpack.c.bf16 %v660, %v659
        %v791 = vpack.c.bf16 %v662, %v661
        %v792 = vpack.c.bf16 %v664, %v663
        %v793 = vpack.c.bf16 %v666, %v665
        %v810 = vunpack.c.l.b16 %v778
        %v811 = vunpack.c.h.b16 %v778
        %v812 = vunpack.c.l.b16 %v779
        %v813 = vunpack.c.h.b16 %v779
        %v814 = vunpack.c.l.b16 %v780
        %v815 = vunpack.c.h.b16 %v780
        %v816 = vunpack.c.l.b16 %v781
        %v817 = vunpack.c.h.b16 %v781
        %v818 = vunpack.c.l.b16 %v782
        %v819 = vunpack.c.h.b16 %v782
        %v820 = vunpack.c.l.b16 %v783
        %v821 = vunpack.c.h.b16 %v783
        %v822 = vunpack.c.l.b16 %v784
        %v823 = vunpack.c.h.b16 %v784
        %v824 = vunpack.c.l.b16 %v785
        %v825 = vunpack.c.h.b16 %v785
        %v826 = vunpack.c.l.b16 %v786
        %v827 = vunpack.c.h.b16 %v786
        %v828 = vunpack.c.l.b16 %v787
        %v829 = vunpack.c.h.b16 %v787
        %v830 = vunpack.c.l.b16 %v788
        %v831 = vunpack.c.h.b16 %v788
        %v832 = vunpack.c.l.b16 %v789
        %v833 = vunpack.c.h.b16 %v789
        %v834 = vunpack.c.l.b16 %v790
        %v835 = vunpack.c.h.b16 %v790
        %v836 = vunpack.c.l.b16 %v791
        %v837 = vunpack.c.h.b16 %v791
        %v838 = vunpack.c.l.b16 %v792
        %v839 = vunpack.c.h.b16 %v792
        %v840 = vunpack.c.l.b16 %v793
        %v841 = vunpack.c.h.b16 %v793
        %v842 = vpack.c.b16 %v810, %v810
        %v843 = vpack.c.b16 %v811, %v811
        %v844 = vpack.c.b16 %v812, %v812
        %v845 = vpack.c.b16 %v813, %v813
        %v846 = vpack.c.b16 %v814, %v814
        %v847 = vpack.c.b16 %v815, %v815
        %v848 = vpack.c.b16 %v816, %v816
        %v849 = vpack.c.b16 %v817, %v817
        %v850 = vpack.c.b16 %v818, %v818
        %v851 = vpack.c.b16 %v819, %v819
        %v852 = vpack.c.b16 %v820, %v820
        %v853 = vpack.c.b16 %v821, %v821
        %v854 = vpack.c.b16 %v822, %v822
        %v855 = vpack.c.b16 %v823, %v823
        %v856 = vpack.c.b16 %v824, %v824
        %v857 = vpack.c.b16 %v825, %v825
        %v858 = vpack.c.b16 %v826, %v826
        %v859 = vpack.c.b16 %v827, %v827
        %v860 = vpack.c.b16 %v828, %v828
        %v861 = vpack.c.b16 %v829, %v829
        %v862 = vpack.c.b16 %v830, %v830
        %v863 = vpack.c.b16 %v831, %v831
        %v864 = vpack.c.b16 %v832, %v832
        %v865 = vpack.c.b16 %v833, %v833
        %v866 = vpack.c.b16 %v834, %v834
        %v867 = vpack.c.b16 %v835, %v835
        %v868 = vpack.c.b16 %v836, %v836
        %v869 = vpack.c.b16 %v837, %v837
        %v870 = vpack.c.b16 %v838, %v838
        %v871 = vpack.c.b16 %v839, %v839
        %v872 = vpack.c.b16 %v840, %v840
        %v873 = vpack.c.b16 %v841, %v841
        %vm874 = vsmask.f32 4368
        %vm875 = vmor %vm678, %vm874
        %v877 = vshrl.u32 %v842, 16
        %v879 = vrot.slane %v877, 7
        %v880 = vshll.u32 %v842, 16
        %v882 = vor.u32 %v879, %v880
        %v883 = vrot.slane %v879, 4
        %v885 = vshrl.u32 %v843, 16
        %v887 = vrot.slane %v885, 7
        %v888 = vshll.u32 %v843, 16
        %v890 = vor.u32 %v887, %v888
        %v891 = vsel %vm875, %v883, %v890
        %v892 = vrot.slane %v887, 4
        %v894 = vshrl.u32 %v844, 16
        %v896 = vrot.slane %v894, 7
        %v897 = vshll.u32 %v844, 16
        %v899 = vor.u32 %v896, %v897
        %v900 = vrot.slane %v896, 4
        %v902 = vshrl.u32 %v845, 16
        %v904 = vrot.slane %v902, 7
        %v905 = vshll.u32 %v845, 16
        %v907 = vor.u32 %v904, %v905
        %v908 = vsel %vm875, %v900, %v907
        %v909 = vrot.slane %v904, 4
        %v911 = vshrl.u32 %v846, 16
        %v913 = vrot.slane %v911, 7
        %v914 = vshll.u32 %v846, 16
        %v916 = vor.u32 %v913, %v914
        %v917 = vrot.slane %v913, 4
        %v919 = vshrl.u32 %v847, 16
        %v921 = vrot.slane %v919, 7
        %v922 = vshll.u32 %v847, 16
        %v924 = vor.u32 %v921, %v922
        %v925 = vsel %vm875, %v917, %v924
        %v926 = vrot.slane %v921, 4
        %v928 = vshrl.u32 %v848, 16
        %v930 = vrot.slane %v928, 7
        %v931 = vshll.u32 %v848, 16
        %v933 = vor.u32 %v930, %v931
        %v934 = vrot.slane %v930, 4
        %v936 = vshrl.u32 %v849, 16
        %v938 = vrot.slane %v936, 7
        %v939 = vshll.u32 %v849, 16
        %v941 = vor.u32 %v938, %v939
        %v942 = vsel %vm875, %v934, %v941
        %v943 = vrot.slane %v938, 4
        %v945 = vshrl.u32 %v850, 16
        %v947 = vrot.slane %v945, 7
        %v948 = vshll.u32 %v850, 16
        %v950 = vor.u32 %v947, %v948
        %v951 = vrot.slane %v947, 4
        %v953 = vshrl.u32 %v851, 16
        %v955 = vrot.slane %v953, 7
        %v956 = vshll.u32 %v851, 16
        %v958 = vor.u32 %v955, %v956
        %v959 = vsel %vm875, %v951, %v958
        %v960 = vrot.slane %v955, 4
        %v962 = vshrl.u32 %v852, 16
        %v964 = vrot.slane %v962, 7
        %v965 = vshll.u32 %v852, 16
        %v967 = vor.u32 %v964, %v965
        %v968 = vrot.slane %v964, 4
        %v970 = vshrl.u32 %v853, 16
        %v972 = vrot.slane %v970, 7
        %v973 = vshll.u32 %v853, 16
        %v975 = vor.u32 %v972, %v973
        %v976 = vsel %vm875, %v968, %v975
        %v977 = vrot.slane %v972, 4
        %v979 = vshrl.u32 %v854, 16
        %v981 = vrot.slane %v979, 7
        %v982 = vshll.u32 %v854, 16
        %v984 = vor.u32 %v981, %v982
        %v985 = vrot.slane %v981, 4
        %v987 = vshrl.u32 %v855, 16
        %v989 = vrot.slane %v987, 7
        %v990 = vshll.u32 %v855, 16
        %v992 = vor.u32 %v989, %v990
        %v993 = vsel %vm875, %v985, %v992
        %v994 = vrot.slane %v989, 4
        %v996 = vshrl.u32 %v856, 16
        %v998 = vrot.slane %v996, 7
        %v999 = vshll.u32 %v856, 16
        %v1001 = vor.u32 %v998, %v999
        %v1002 = vrot.slane %v998, 4
        %v1004 = vshrl.u32 %v857, 16
        %v1006 = vrot.slane %v1004, 7
        %v1007 = vshll.u32 %v857, 16
        %v1009 = vor.u32 %v1006, %v1007
        %v1010 = vsel %vm875, %v1002, %v1009
        %v1011 = vrot.slane %v1006, 4
        %v1013 = vshrl.u32 %v858, 16
        %v1015 = vrot.slane %v1013, 7
        %v1016 = vshll.u32 %v858, 16
        %v1018 = vor.u32 %v1015, %v1016
        %v1019 = vrot.slane %v1015, 4
        %v1021 = vshrl.u32 %v859, 16
        %v1023 = vrot.slane %v1021, 7
        %v1024 = vshll.u32 %v859, 16
        %v1026 = vor.u32 %v1023, %v1024
        %v1027 = vsel %vm875, %v1019, %v1026
        %v1028 = vrot.slane %v1023, 4
        %v1030 = vshrl.u32 %v860, 16
        %v1032 = vrot.slane %v1030, 7
        %v1033 = vshll.u32 %v860, 16
        %v1035 = vor.u32 %v1032, %v1033
        %v1036 = vrot.slane %v1032, 4
        %v1038 = vshrl.u32 %v861, 16
        %v1040 = vrot.slane %v1038, 7
        %v1041 = vshll.u32 %v861, 16
        %v1043 = vor.u32 %v1040, %v1041
        %v1044 = vsel %vm875, %v1036, %v1043
        %v1045 = vrot.slane %v1040, 4
        %v1047 = vshrl.u32 %v862, 16
        %v1049 = vrot.slane %v1047, 7
        %v1050 = vshll.u32 %v862, 16
        %v1052 = vor.u32 %v1049, %v1050
        %v1053 = vrot.slane %v1049, 4
        %v1055 = vshrl.u32 %v863, 16
        %v1057 = vrot.slane %v1055, 7
        %v1058 = vshll.u32 %v863, 16
        %v1060 = vor.u32 %v1057, %v1058
        %v1061 = vsel %vm875, %v1053, %v1060
        %v1062 = vrot.slane %v1057, 4
        %v1064 = vshrl.u32 %v864, 16
        %v1066 = vrot.slane %v1064, 7
        %v1067 = vshll.u32 %v864, 16
        %v1069 = vor.u32 %v1066, %v1067
        %v1070 = vrot.slane %v1066, 4
        %v1072 = vshrl.u32 %v865, 16
        %v1074 = vrot.slane %v1072, 7
        %v1075 = vshll.u32 %v865, 16
        %v1077 = vor.u32 %v1074, %v1075
        %v1078 = vsel %vm875, %v1070, %v1077
        %v1079 = vrot.slane %v1074, 4
        %v1081 = vshrl.u32 %v866, 16
        %v1083 = vrot.slane %v1081, 7
        %v1084 = vshll.u32 %v866, 16
        %v1086 = vor.u32 %v1083, %v1084
        %v1087 = vrot.slane %v1083, 4
        %v1089 = vshrl.u32 %v867, 16
        %v1091 = vrot.slane %v1089, 7
        %v1092 = vshll.u32 %v867, 16
        %v1094 = vor.u32 %v1091, %v1092
        %v1095 = vsel %vm875, %v1087, %v1094
        %v1096 = vrot.slane %v1091, 4
        %v1098 = vshrl.u32 %v868, 16
        %v1100 = vrot.slane %v1098, 7
        %v1101 = vshll.u32 %v868, 16
        %v1103 = vor.u32 %v1100, %v1101
        %v1104 = vrot.slane %v1100, 4
        %v1106 = vshrl.u32 %v869, 16
        %v1108 = vrot.slane %v1106, 7
        %v1109 = vshll.u32 %v869, 16
        %v1111 = vor.u32 %v1108, %v1109
        %v1112 = vsel %vm875, %v1104, %v1111
        %v1113 = vrot.slane %v1108, 4
        %v1115 = vshrl.u32 %v870, 16
        %v1117 = vrot.slane %v1115, 7
        %v1118 = vshll.u32 %v870, 16
        %v1120 = vor.u32 %v1117, %v1118
        %v1121 = vrot.slane %v1117, 4
        %v1123 = vshrl.u32 %v871, 16
        %v1125 = vrot.slane %v1123, 7
        %v1126 = vshll.u32 %v871, 16
        %v1128 = vor.u32 %v1125, %v1126
        %v1129 = vsel %vm875, %v1121, %v1128
        %v1130 = vrot.slane %v1125, 4
        %v1132 = vshrl.u32 %v872, 16
        %v1134 = vrot.slane %v1132, 7
        %v1135 = vshll.u32 %v872, 16
        %v1137 = vor.u32 %v1134, %v1135
        %v1138 = vrot.slane %v1134, 4
        %v1140 = vshrl.u32 %v873, 16
        %v1142 = vrot.slane %v1140, 7
        %v1143 = vshll.u32 %v873, 16
        %v1145 = vor.u32 %v1142, %v1143
        %v1146 = vsel %vm875, %v1138, %v1145
        %v1147 = vrot.slane %v1142, 4
        %vm1196 = vcmask 60416
        %vm1197 = vmand %vm1196, %vm728
        %v1198 = vld [vmem:[%s676] sm:$0xf]
        %v1199 = vsel %vm1197, %v882, %v1198
        %1200 = vst [vmem:[%s676] sm:$0xf] %v1199
        %1201 = vst.msk [vmem:[%s676 + $0x4] sm:$0xf] %vm667, %v891
        %v1202 = vld [vmem:[%s676 + $0x8] sm:$0x1]
        %v1203 = vsel %vm679, %v892, %v1202
        %1204 = vst [vmem:[%s676 + $0x8] sm:$0x1] %v1203
        %v1205 = vld [vmem:[%s676 + $0xc] sm:$0xf]
        %v1206 = vsel %vm1197, %v899, %v1205
        %1207 = vst [vmem:[%s676 + $0xc] sm:$0xf] %v1206
        %1208 = vst.msk [vmem:[%s676 + $0x10] sm:$0xf] %vm667, %v908
        %v1209 = vld [vmem:[%s676 + $0x14] sm:$0x1]
        %v1210 = vsel %vm679, %v909, %v1209
        %1211 = vst [vmem:[%s676 + $0x14] sm:$0x1] %v1210
        %v1212 = vld [vmem:[%s676 + $0x18] sm:$0xf]
        %v1213 = vsel %vm1197, %v916, %v1212
        %1214 = vst [vmem:[%s676 + $0x18] sm:$0xf] %v1213
        %1215 = vst.msk [vmem:[%s676 + $0x1c] sm:$0xf] %vm667, %v925
        %v1216 = vld [vmem:[%s676 + $0x20] sm:$0x1]
        %v1217 = vsel %vm679, %v926, %v1216
        %1218 = vst [vmem:[%s676 + $0x20] sm:$0x1] %v1217
        %v1219 = vld [vmem:[%s676 + $0x24] sm:$0xf]
        %v1220 = vsel %vm1197, %v933, %v1219
        %1221 = vst [vmem:[%s676 + $0x24] sm:$0xf] %v1220
        %1222 = vst.msk [vmem:[%s676 + $0x28] sm:$0xf] %vm667, %v942
        %v1223 = vld [vmem:[%s676 + $0x2c] sm:$0x1]
        %v1224 = vsel %vm679, %v943, %v1223
        %1225 = vst [vmem:[%s676 + $0x2c] sm:$0x1] %v1224
        %v1226 = vld [vmem:[%s676 + $0x30] sm:$0xf]
        %v1227 = vsel %vm1197, %v950, %v1226
        %1228 = vst [vmem:[%s676 + $0x30] sm:$0xf] %v1227
        %1229 = vst.msk [vmem:[%s676 + $0x34] sm:$0xf] %vm667, %v959
        %v1230 = vld [vmem:[%s676 + $0x38] sm:$0x1]
        %v1231 = vsel %vm679, %v960, %v1230
        %1232 = vst [vmem:[%s676 + $0x38] sm:$0x1] %v1231
        %v1233 = vld [vmem:[%s676 + $0x3c] sm:$0xf]
        %v1234 = vsel %vm1197, %v967, %v1233
        %1235 = vst [vmem:[%s676 + $0x3c] sm:$0xf] %v1234
        %1236 = vst.msk [vmem:[%s676 + $0x40] sm:$0xf] %vm667, %v976
        %v1237 = vld [vmem:[%s676 + $0x44] sm:$0x1]
        %v1238 = vsel %vm679, %v977, %v1237
        %1239 = vst [vmem:[%s676 + $0x44] sm:$0x1] %v1238
        %v1240 = vld [vmem:[%s676 + $0x48] sm:$0xf]
        %v1241 = vsel %vm1197, %v984, %v1240
        %1242 = vst [vmem:[%s676 + $0x48] sm:$0xf] %v1241
        %1243 = vst.msk [vmem:[%s676 + $0x4c] sm:$0xf] %vm667, %v993
        %v1244 = vld [vmem:[%s676 + $0x50] sm:$0x1]
        %v1245 = vsel %vm679, %v994, %v1244
        %1246 = vst [vmem:[%s676 + $0x50] sm:$0x1] %v1245
        %v1247 = vld [vmem:[%s676 + $0x54] sm:$0xf]
        %v1248 = vsel %vm1197, %v1001, %v1247
        %1249 = vst [vmem:[%s676 + $0x54] sm:$0xf] %v1248
        %1250 = vst.msk [vmem:[%s676 + $0x58] sm:$0xf] %vm667, %v1010
        %v1251 = vld [vmem:[%s676 + $0x5c] sm:$0x1]
        %v1252 = vsel %vm679, %v1011, %v1251
        %1253 = vst [vmem:[%s676 + $0x5c] sm:$0x1] %v1252
        %v1254 = vld [vmem:[%s676 + $0x60] sm:$0xf]
        %v1255 = vsel %vm1197, %v1018, %v1254
        %1256 = vst [vmem:[%s676 + $0x60] sm:$0xf] %v1255
        %1257 = vst.msk [vmem:[%s676 + $0x64] sm:$0xf] %vm667, %v1027
        %v1258 = vld [vmem:[%s676 + $0x68] sm:$0x1]
        %v1259 = vsel %vm679, %v1028, %v1258
        %1260 = vst [vmem:[%s676 + $0x68] sm:$0x1] %v1259
        %v1261 = vld [vmem:[%s676 + $0x6c] sm:$0xf]
        %v1262 = vsel %vm1197, %v1035, %v1261
        %1263 = vst [vmem:[%s676 + $0x6c] sm:$0xf] %v1262
        %1264 = vst.msk [vmem:[%s676 + $0x70] sm:$0xf] %vm667, %v1044
        %v1265 = vld [vmem:[%s676 + $0x74] sm:$0x1]
        %v1266 = vsel %vm679, %v1045, %v1265
        %1267 = vst [vmem:[%s676 + $0x74] sm:$0x1] %v1266
        %v1268 = vld [vmem:[%s676 + $0x78] sm:$0xf]
        %v1269 = vsel %vm1197, %v1052, %v1268
        %1270 = vst [vmem:[%s676 + $0x78] sm:$0xf] %v1269
        %1271 = vst.msk [vmem:[%s676 + $0x7c] sm:$0xf] %vm667, %v1061
        %v1272 = vld [vmem:[%s676 + $0x80] sm:$0x1]
        %v1273 = vsel %vm679, %v1062, %v1272
        %1274 = vst [vmem:[%s676 + $0x80] sm:$0x1] %v1273
        %v1275 = vld [vmem:[%s676 + $0x84] sm:$0xf]
        %v1276 = vsel %vm1197, %v1069, %v1275
        %1277 = vst [vmem:[%s676 + $0x84] sm:$0xf] %v1276
        %1278 = vst.msk [vmem:[%s676 + $0x88] sm:$0xf] %vm667, %v1078
        %v1279 = vld [vmem:[%s676 + $0x8c] sm:$0x1]
        %v1280 = vsel %vm679, %v1079, %v1279
        %1281 = vst [vmem:[%s676 + $0x8c] sm:$0x1] %v1280
        %v1282 = vld [vmem:[%s676 + $0x90] sm:$0xf]
        %v1283 = vsel %vm1197, %v1086, %v1282
        %1284 = vst [vmem:[%s676 + $0x90] sm:$0xf] %v1283
        %1285 = vst.msk [vmem:[%s676 + $0x94] sm:$0xf] %vm667, %v1095
        %v1286 = vld [vmem:[%s676 + $0x98] sm:$0x1]
        %v1287 = vsel %vm679, %v1096, %v1286
        %1288 = vst [vmem:[%s676 + $0x98] sm:$0x1] %v1287
        %v1289 = vld [vmem:[%s676 + $0x9c] sm:$0xf]
        %v1290 = vsel %vm1197, %v1103, %v1289
        %1291 = vst [vmem:[%s676 + $0x9c] sm:$0xf] %v1290
        %1292 = vst.msk [vmem:[%s676 + $0xa0] sm:$0xf] %vm667, %v1112
        %v1293 = vld [vmem:[%s676 + $0xa4] sm:$0x1]
        %v1294 = vsel %vm679, %v1113, %v1293
        %1295 = vst [vmem:[%s676 + $0xa4] sm:$0x1] %v1294
        %v1296 = vld [vmem:[%s676 + $0xa8] sm:$0xf]
        %v1297 = vsel %vm1197, %v1120, %v1296
        %1298 = vst [vmem:[%s676 + $0xa8] sm:$0xf] %v1297
        %1299 = vst.msk [vmem:[%s676 + $0xac] sm:$0xf] %vm667, %v1129
        %v1300 = vld [vmem:[%s676 + $0xb0] sm:$0x1]
        %v1301 = vsel %vm679, %v1130, %v1300
        %1302 = vst [vmem:[%s676 + $0xb0] sm:$0x1] %v1301
        %v1303 = vld [vmem:[%s676 + $0xb4] sm:$0xf]
        %v1304 = vsel %vm1197, %v1137, %v1303
        %1305 = vst [vmem:[%s676 + $0xb4] sm:$0xf] %v1304
        %1306 = vst.msk [vmem:[%s676 + $0xb8] sm:$0xf] %vm667, %v1146
        %v1307 = vld [vmem:[%s676 + $0xbc] sm:$0x1]
        %v1308 = vsel %vm679, %v1147, %v1307
        %1309 = vst [vmem:[%s676 + $0xbc] sm:$0x1] %v1308
        %v1310 = vld [vmem:[#allocation2] sm:$0xf]
        %v1311 = vld [vmem:[#allocation2 + $0x4] sm:$0xf]
        %v1312 = vld [vmem:[#allocation2 + $0x8] sm:$0x1]
        %v1313 = vld [vmem:[#allocation2 + $0xc] sm:$0xf]
        %v1314 = vld [vmem:[#allocation2 + $0x10] sm:$0xf]
        %v1315 = vld [vmem:[#allocation2 + $0x14] sm:$0x1]
        %v1316 = vld [vmem:[#allocation2 + $0x18] sm:$0xf]
        %v1317 = vld [vmem:[#allocation2 + $0x1c] sm:$0xf]
        %v1318 = vld [vmem:[#allocation2 + $0x20] sm:$0x1]
        %v1319 = vld [vmem:[#allocation2 + $0x24] sm:$0xf]
        %v1320 = vld [vmem:[#allocation2 + $0x28] sm:$0xf]
        %v1321 = vld [vmem:[#allocation2 + $0x2c] sm:$0x1]
        %v1322 = vld [vmem:[#allocation2 + $0x30] sm:$0xf]
        %v1323 = vld [vmem:[#allocation2 + $0x34] sm:$0xf]
        %v1324 = vld [vmem:[#allocation2 + $0x38] sm:$0x1]
        %v1325 = vld [vmem:[#allocation2 + $0x3c] sm:$0xf]
        %v1326 = vld [vmem:[#allocation2 + $0x40] sm:$0xf]
        %v1327 = vld [vmem:[#allocation2 + $0x44] sm:$0x1]
        %v1328 = vld [vmem:[#allocation2 + $0x48] sm:$0xf]
        %v1329 = vld [vmem:[#allocation2 + $0x4c] sm:$0xf]
        %v1330 = vld [vmem:[#allocation2 + $0x50] sm:$0x1]
        %v1331 = vld [vmem:[#allocation2 + $0x54] sm:$0xf]
        %v1332 = vld [vmem:[#allocation2 + $0x58] sm:$0xf]
        %v1333 = vld [vmem:[#allocation2 + $0x5c] sm:$0x1]
        %v1334 = vld [vmem:[#allocation2 + $0x60] sm:$0xf]
        %v1335 = vld [vmem:[#allocation2 + $0x64] sm:$0xf]
        %v1336 = vld [vmem:[#allocation2 + $0x68] sm:$0x1]
        %v1337 = vld [vmem:[#allocation2 + $0x6c] sm:$0xf]
        %v1338 = vld [vmem:[#allocation2 + $0x70] sm:$0xf]
        %v1339 = vld [vmem:[#allocation2 + $0x74] sm:$0x1]
        %v1340 = vld [vmem:[#allocation2 + $0x78] sm:$0xf]
        %v1341 = vld [vmem:[#allocation2 + $0x7c] sm:$0xf]
        %v1342 = vld [vmem:[#allocation2 + $0x80] sm:$0x1]
        %v1343 = vld [vmem:[#allocation2 + $0x84] sm:$0xf]
        %v1344 = vld [vmem:[#allocation2 + $0x88] sm:$0xf]
        %v1345 = vld [vmem:[#allocation2 + $0x8c] sm:$0x1]
        %v1346 = vld [vmem:[#allocation2 + $0x90] sm:$0xf]
        %v1347 = vld [vmem:[#allocation2 + $0x94] sm:$0xf]
        %v1348 = vld [vmem:[#allocation2 + $0x98] sm:$0x1]
        %v1349 = vld [vmem:[#allocation2 + $0x9c] sm:$0xf]
        %v1350 = vld [vmem:[#allocation2 + $0xa0] sm:$0xf]
        %v1351 = vld [vmem:[#allocation2 + $0xa4] sm:$0x1]
        %v1352 = vld [vmem:[#allocation2 + $0xa8] sm:$0xf]
        %v1353 = vld [vmem:[#allocation2 + $0xac] sm:$0xf]
        %v1354 = vld [vmem:[#allocation2 + $0xb0] sm:$0x1]
        %v1355 = vld [vmem:[#allocation2 + $0xb4] sm:$0xf]
        %v1356 = vld [vmem:[#allocation2 + $0xb8] sm:$0xf]
        %v1357 = vld [vmem:[#allocation2 + $0xbc] sm:$0x1]
        %v1358 = vld [vmem:[#allocation2 + $0xc0] sm:$0xf]
        %v1359 = vld [vmem:[#allocation2 + $0xc4] sm:$0xf]
        %v1360 = vld [vmem:[#allocation2 + $0xc8] sm:$0x1]
        %v1361 = vld [vmem:[#allocation2 + $0xcc] sm:$0xf]
        %v1362 = vld [vmem:[#allocation2 + $0xd0] sm:$0xf]
        %v1363 = vld [vmem:[#allocation2 + $0xd4] sm:$0x1]
        %v1364 = vld [vmem:[%s3] sm:$0xf]
        %vm1365 = vsmask.f32 3328
        %vm1366 = vsmask.f32 7440
        %vm1367 = vmor %vm1365, %vm1366
        %v1369 = vshrl.u32 %v1310, 16
        %v1371 = vrot.slane %v1369, 4
        %v1372 = vshll.u32 %v1310, 16
        %v1374 = vrot.slane %v1372, 5
        %v1375 = vor.u32 %v1371, %v1374
        %v1376 = vrot.slane %v1375, 4
        %v1378 = vshll.u32 %v1311, 16
        %v1380 = vrot.slane %v1378, 5
        %v1381 = vsel %vm1367, %v1376, %v1380
        %v1382 = vshrl.u32 %v1311, 16
        %v1384 = vrot.slane %v1382, 4
        %v1385 = vor.u32 %v1384, %v1380
        %v1386 = vrot.slane %v1385, 4
        %v1388 = vshll.u32 %v1312, 16
        %v1390 = vrot.slane %v1388, 5
        %v1391 = vsel %vm1367, %v1386, %v1390
        %v1393 = vshrl.u32 %v1313, 16
        %v1395 = vrot.slane %v1393, 4
        %v1396 = vshll.u32 %v1313, 16
        %v1398 = vrot.slane %v1396, 5
        %v1399 = vor.u32 %v1395, %v1398
        %v1400 = vrot.slane %v1399, 4
        %v1402 = vshll.u32 %v1314, 16
        %v1404 = vrot.slane %v1402, 5
        %v1405 = vsel %vm1367, %v1400, %v1404
        %v1406 = vshrl.u32 %v1314, 16
        %v1408 = vrot.slane %v1406, 4
        %v1409 = vor.u32 %v1408, %v1404
        %v1410 = vrot.slane %v1409, 4
        %v1412 = vshll.u32 %v1315, 16
        %v1414 = vrot.slane %v1412, 5
        %v1415 = vsel %vm1367, %v1410, %v1414
        %v1417 = vshrl.u32 %v1316, 16
        %v1419 = vrot.slane %v1417, 4
        %v1420 = vshll.u32 %v1316, 16
        %v1422 = vrot.slane %v1420, 5
        %v1423 = vor.u32 %v1419, %v1422
        %v1424 = vrot.slane %v1423, 4
        %v1426 = vshll.u32 %v1317, 16
        %v1428 = vrot.slane %v1426, 5
        %v1429 = vsel %vm1367, %v1424, %v1428
        %v1430 = vshrl.u32 %v1317, 16
        %v1432 = vrot.slane %v1430, 4
        %v1433 = vor.u32 %v1432, %v1428
        %v1434 = vrot.slane %v1433, 4
        %v1436 = vshll.u32 %v1318, 16
        %v1438 = vrot.slane %v1436, 5
        %v1439 = vsel %vm1367, %v1434, %v1438
        %v1441 = vshrl.u32 %v1319, 16
        %v1443 = vrot.slane %v1441, 4
        %v1444 = vshll.u32 %v1319, 16
        %v1446 = vrot.slane %v1444, 5
        %v1447 = vor.u32 %v1443, %v1446
        %v1448 = vrot.slane %v1447, 4
        %v1450 = vshll.u32 %v1320, 16
        %v1452 = vrot.slane %v1450, 5
        %v1453 = vsel %vm1367, %v1448, %v1452
        %v1454 = vshrl.u32 %v1320, 16
        %v1456 = vrot.slane %v1454, 4
        %v1457 = vor.u32 %v1456, %v1452
        %v1458 = vrot.slane %v1457, 4
        %v1460 = vshll.u32 %v1321, 16
        %v1462 = vrot.slane %v1460, 5
        %v1463 = vsel %vm1367, %v1458, %v1462
        %v1465 = vshrl.u32 %v1322, 16
        %v1467 = vrot.slane %v1465, 4
        %v1468 = vshll.u32 %v1322, 16
        %v1470 = vrot.slane %v1468, 5
        %v1471 = vor.u32 %v1467, %v1470
        %v1472 = vrot.slane %v1471, 4
        %v1474 = vshll.u32 %v1323, 16
        %v1476 = vrot.slane %v1474, 5
        %v1477 = vsel %vm1367, %v1472, %v1476
        %v1478 = vshrl.u32 %v1323, 16
        %v1480 = vrot.slane %v1478, 4
        %v1481 = vor.u32 %v1480, %v1476
        %v1482 = vrot.slane %v1481, 4
        %v1484 = vshll.u32 %v1324, 16
        %v1486 = vrot.slane %v1484, 5
        %v1487 = vsel %vm1367, %v1482, %v1486
        %v1489 = vshrl.u32 %v1325, 16
        %v1491 = vrot.slane %v1489, 4
        %v1492 = vshll.u32 %v1325, 16
        %v1494 = vrot.slane %v1492, 5
        %v1495 = vor.u32 %v1491, %v1494
        %v1496 = vrot.slane %v1495, 4
        %v1498 = vshll.u32 %v1326, 16
        %v1500 = vrot.slane %v1498, 5
        %v1501 = vsel %vm1367, %v1496, %v1500
        %v1502 = vshrl.u32 %v1326, 16
        %v1504 = vrot.slane %v1502, 4
        %v1505 = vor.u32 %v1504, %v1500
        %v1506 = vrot.slane %v1505, 4
        %v1508 = vshll.u32 %v1327, 16
        %v1510 = vrot.slane %v1508, 5
        %v1511 = vsel %vm1367, %v1506, %v1510
        %v1513 = vshrl.u32 %v1328, 16
        %v1515 = vrot.slane %v1513, 4
        %v1516 = vshll.u32 %v1328, 16
        %v1518 = vrot.slane %v1516, 5
        %v1519 = vor.u32 %v1515, %v1518
        %v1520 = vrot.slane %v1519, 4
        %v1522 = vshll.u32 %v1329, 16
        %v1524 = vrot.slane %v1522, 5
        %v1525 = vsel %vm1367, %v1520, %v1524
        %v1526 = vshrl.u32 %v1329, 16
        %v1528 = vrot.slane %v1526, 4
        %v1529 = vor.u32 %v1528, %v1524
        %v1530 = vrot.slane %v1529, 4
        %v1532 = vshll.u32 %v1330, 16
        %v1534 = vrot.slane %v1532, 5
        %v1535 = vsel %vm1367, %v1530, %v1534
        %v1537 = vshrl.u32 %v1331, 16
        %v1539 = vrot.slane %v1537, 4
        %v1540 = vshll.u32 %v1331, 16
        %v1542 = vrot.slane %v1540, 5
        %v1543 = vor.u32 %v1539, %v1542
        %v1544 = vrot.slane %v1543, 4
        %v1546 = vshll.u32 %v1332, 16
        %v1548 = vrot.slane %v1546, 5
        %v1549 = vsel %vm1367, %v1544, %v1548
        %v1550 = vshrl.u32 %v1332, 16
        %v1552 = vrot.slane %v1550, 4
        %v1553 = vor.u32 %v1552, %v1548
        %v1554 = vrot.slane %v1553, 4
        %v1556 = vshll.u32 %v1333, 16
        %v1558 = vrot.slane %v1556, 5
        %v1559 = vsel %vm1367, %v1554, %v1558
        %v1561 = vshrl.u32 %v1334, 16
        %v1563 = vrot.slane %v1561, 4
        %v1564 = vshll.u32 %v1334, 16
        %v1566 = vrot.slane %v1564, 5
        %v1567 = vor.u32 %v1563, %v1566
        %v1568 = vrot.slane %v1567, 4
        %v1570 = vshll.u32 %v1335, 16
        %v1572 = vrot.slane %v1570, 5
        %v1573 = vsel %vm1367, %v1568, %v1572
        %v1574 = vshrl.u32 %v1335, 16
        %v1576 = vrot.slane %v1574, 4
        %v1577 = vor.u32 %v1576, %v1572
        %v1578 = vrot.slane %v1577, 4
        %v1580 = vshll.u32 %v1336, 16
        %v1582 = vrot.slane %v1580, 5
        %v1583 = vsel %vm1367, %v1578, %v1582
        %v1585 = vshrl.u32 %v1337, 16
        %v1587 = vrot.slane %v1585, 4
        %v1588 = vshll.u32 %v1337, 16
        %v1590 = vrot.slane %v1588, 5
        %v1591 = vor.u32 %v1587, %v1590
        %v1592 = vrot.slane %v1591, 4
        %v1594 = vshll.u32 %v1338, 16
        %v1596 = vrot.slane %v1594, 5
        %v1597 = vsel %vm1367, %v1592, %v1596
        %v1598 = vshrl.u32 %v1338, 16
        %v1600 = vrot.slane %v1598, 4
        %v1601 = vor.u32 %v1600, %v1596
        %v1602 = vrot.slane %v1601, 4
        %v1604 = vshll.u32 %v1339, 16
        %v1606 = vrot.slane %v1604, 5
        %v1607 = vsel %vm1367, %v1602, %v1606
        %v1609 = vshrl.u32 %v1340, 16
        %v1611 = vrot.slane %v1609, 4
        %v1612 = vshll.u32 %v1340, 16
        %v1614 = vrot.slane %v1612, 5
        %v1615 = vor.u32 %v1611, %v1614
        %v1616 = vrot.slane %v1615, 4
        %v1618 = vshll.u32 %v1341, 16
        %v1620 = vrot.slane %v1618, 5
        %v1621 = vsel %vm1367, %v1616, %v1620
        %v1622 = vshrl.u32 %v1341, 16
        %v1624 = vrot.slane %v1622, 4
        %v1625 = vor.u32 %v1624, %v1620
        %v1626 = vrot.slane %v1625, 4
        %v1628 = vshll.u32 %v1342, 16
        %v1630 = vrot.slane %v1628, 5
        %v1631 = vsel %vm1367, %v1626, %v1630
        %v1633 = vshrl.u32 %v1343, 16
        %v1635 = vrot.slane %v1633, 4
        %v1636 = vshll.u32 %v1343, 16
        %v1638 = vrot.slane %v1636, 5
        %v1639 = vor.u32 %v1635, %v1638
        %v1640 = vrot.slane %v1639, 4
        %v1642 = vshll.u32 %v1344, 16
        %v1644 = vrot.slane %v1642, 5
        %v1645 = vsel %vm1367, %v1640, %v1644
        %v1646 = vshrl.u32 %v1344, 16
        %v1648 = vrot.slane %v1646, 4
        %v1649 = vor.u32 %v1648, %v1644
        %v1650 = vrot.slane %v1649, 4
        %v1652 = vshll.u32 %v1345, 16
        %v1654 = vrot.slane %v1652, 5
        %v1655 = vsel %vm1367, %v1650, %v1654
        %v1657 = vshrl.u32 %v1346, 16
        %v1659 = vrot.slane %v1657, 4
        %v1660 = vshll.u32 %v1346, 16
        %v1662 = vrot.slane %v1660, 5
        %v1663 = vor.u32 %v1659, %v1662
        %v1664 = vrot.slane %v1663, 4
        %v1666 = vshll.u32 %v1347, 16
        %v1668 = vrot.slane %v1666, 5
        %v1669 = vsel %vm1367, %v1664, %v1668
        %v1670 = vshrl.u32 %v1347, 16
        %v1672 = vrot.slane %v1670, 4
        %v1673 = vor.u32 %v1672, %v1668
        %v1674 = vrot.slane %v1673, 4
        %v1676 = vshll.u32 %v1348, 16
        %v1678 = vrot.slane %v1676, 5
        %v1679 = vsel %vm1367, %v1674, %v1678
        %v1681 = vshrl.u32 %v1349, 16
        %v1683 = vrot.slane %v1681, 4
        %v1684 = vshll.u32 %v1349, 16
        %v1686 = vrot.slane %v1684, 5
        %v1687 = vor.u32 %v1683, %v1686
        %v1688 = vrot.slane %v1687, 4
        %v1690 = vshll.u32 %v1350, 16
        %v1692 = vrot.slane %v1690, 5
        %v1693 = vsel %vm1367, %v1688, %v1692
        %v1694 = vshrl.u32 %v1350, 16
        %v1696 = vrot.slane %v1694, 4
        %v1697 = vor.u32 %v1696, %v1692
        %v1698 = vrot.slane %v1697, 4
        %v1700 = vshll.u32 %v1351, 16
        %v1702 = vrot.slane %v1700, 5
        %v1703 = vsel %vm1367, %v1698, %v1702
        %v1705 = vshrl.u32 %v1352, 16
        %v1707 = vrot.slane %v1705, 4
        %v1708 = vshll.u32 %v1352, 16
        %v1710 = vrot.slane %v1708, 5
        %v1711 = vor.u32 %v1707, %v1710
        %v1712 = vrot.slane %v1711, 4
        %v1714 = vshll.u32 %v1353, 16
        %v1716 = vrot.slane %v1714, 5
        %v1717 = vsel %vm1367, %v1712, %v1716
        %v1718 = vshrl.u32 %v1353, 16
        %v1720 = vrot.slane %v1718, 4
        %v1721 = vor.u32 %v1720, %v1716
        %v1722 = vrot.slane %v1721, 4
        %v1724 = vshll.u32 %v1354, 16
        %v1726 = vrot.slane %v1724, 5
        %v1727 = vsel %vm1367, %v1722, %v1726
        %v1729 = vshrl.u32 %v1355, 16
        %v1731 = vrot.slane %v1729, 4
        %v1732 = vshll.u32 %v1355, 16
        %v1734 = vrot.slane %v1732, 5
        %v1735 = vor.u32 %v1731, %v1734
        %v1736 = vrot.slane %v1735, 4
        %v1738 = vshll.u32 %v1356, 16
        %v1740 = vrot.slane %v1738, 5
        %v1741 = vsel %vm1367, %v1736, %v1740
        %v1742 = vshrl.u32 %v1356, 16
        %v1744 = vrot.slane %v1742, 4
        %v1745 = vor.u32 %v1744, %v1740
        %v1746 = vrot.slane %v1745, 4
        %v1748 = vshll.u32 %v1357, 16
        %v1750 = vrot.slane %v1748, 5
        %v1751 = vsel %vm1367, %v1746, %v1750
        %v1752 = vld [vmem:[%s3 + $0x4] sm:$0xf]
        %v1753 = vunpack.c.l.b16 %v1381
        %v1754 = vunpack.c.l.b16 %v1391
        %v1755 = vunpack.c.l.b16 %v1405
        %v1756 = vunpack.c.l.b16 %v1415
        %v1757 = vunpack.c.l.b16 %v1429
        %v1758 = vunpack.c.l.b16 %v1439
        %v1759 = vunpack.c.l.b16 %v1453
        %v1760 = vunpack.c.l.b16 %v1463
        %v1761 = vunpack.c.l.b16 %v1477
        %v1762 = vunpack.c.l.b16 %v1487
        %v1763 = vunpack.c.l.b16 %v1501
        %v1764 = vunpack.c.l.b16 %v1511
        %v1765 = vunpack.c.l.b16 %v1525
        %v1766 = vunpack.c.l.b16 %v1535
        %v1767 = vunpack.c.l.b16 %v1549
        %v1768 = vunpack.c.l.b16 %v1559
        %v1769 = vunpack.c.l.b16 %v1573
        %v1770 = vunpack.c.l.b16 %v1583
        %v1771 = vunpack.c.l.b16 %v1597
        %v1772 = vunpack.c.l.b16 %v1607
        %v1773 = vunpack.c.l.b16 %v1621
        %v1774 = vunpack.c.l.b16 %v1631
        %v1775 = vunpack.c.l.b16 %v1645
        %v1776 = vunpack.c.l.b16 %v1655
        %v1777 = vunpack.c.l.b16 %v1669
        %v1778 = vunpack.c.l.b16 %v1679
        %v1779 = vunpack.c.l.b16 %v1693
        %v1780 = vunpack.c.l.b16 %v1703
        %v1781 = vunpack.c.l.b16 %v1717
        %v1782 = vunpack.c.l.b16 %v1727
        %v1783 = vunpack.c.l.b16 %v1741
        %v1784 = vunpack.c.l.b16 %v1751
        %v1785 = vpack.c.b16 %v1754, %v1753
        %v1786 = vpack.c.b16 %v1756, %v1755
        %v1787 = vpack.c.b16 %v1758, %v1757
        %v1788 = vpack.c.b16 %v1760, %v1759
        %v1789 = vpack.c.b16 %v1762, %v1761
        %v1790 = vpack.c.b16 %v1764, %v1763
        %v1791 = vpack.c.b16 %v1766, %v1765
        %v1792 = vpack.c.b16 %v1768, %v1767
        %v1793 = vpack.c.b16 %v1770, %v1769
        %v1794 = vpack.c.b16 %v1772, %v1771
        %v1795 = vpack.c.b16 %v1774, %v1773
        %v1796 = vpack.c.b16 %v1776, %v1775
        %v1797 = vpack.c.b16 %v1778, %v1777
        %v1798 = vpack.c.b16 %v1780, %v1779
        %v1799 = vpack.c.b16 %v1782, %v1781
        %v1800 = vpack.c.b16 %v1784, %v1783
        %vm1801 = vcmask 64512
        %v1803 = vsel %vm1801, %v1785, 0
        %v1806 = vsel %vm1801, %v1786, 0
        %v1809 = vsel %vm1801, %v1787, 0
        %v1812 = vsel %vm1801, %v1788, 0
        %v1815 = vsel %vm1801, %v1789, 0
        %v1818 = vsel %vm1801, %v1790, 0
        %v1821 = vsel %vm1801, %v1791, 0
        %v1824 = vsel %vm1801, %v1792, 0
        %v1827 = vsel %vm1801, %v1793, 0
        %v1830 = vsel %vm1801, %v1794, 0
        %v1833 = vsel %vm1801, %v1795, 0
        %v1836 = vsel %vm1801, %v1796, 0
        %v1839 = vsel %vm1801, %v1797, 0
        %v1842 = vsel %vm1801, %v1798, 0
        %v1845 = vsel %vm1801, %v1799, 0
        %v1848 = vsel %vm1801, %v1800, 0
        %vm1850 = vcmask 1043456
        %v1852 = vsel %vm1850, %v1752, 0
        %1854 = vmatprep.subr.bf16.mxu0 0
        %1855 = vmatpush1.bf16.msra.mxu0 %v1852
        %1856 = vmatprep.subr.bf16.mxu0 0
        %1857 = vmatpush1.bf16.msra.mxu0 0
        %1858 = vmatprep.subr.bf16.mxu0 0
        %1859 = vmatpush1.bf16.msra.mxu0 0
        %1860 = vmatprep.subr.bf16.mxu0 0
        %1861 = vmatpush1.bf16.msra.mxu0 0
        %1862 = vmatprep.subr.bf16.mxu0 0
        %1863 = vmatpush1.bf16.msra.mxu0 0
        %1864 = vmatprep.subr.bf16.mxu0 0
        %1865 = vmatpush1.bf16.msra.mxu0 0
        %1866 = vmatprep.subr.bf16.mxu0 0
        %1867 = vmatpush1.bf16.msra.mxu0 0
        %1868 = vmatprep.subr.bf16.mxu0 0
        %1869 = vmatpush1.bf16.msra.mxu0 0
        %1870 = vmatprep.subr.bf16.mxu0 0
        %1871 = vmatpush1.bf16.msra.mxu0 0
        %1872 = vmatprep.subr.bf16.mxu0 0
        %1873 = vmatpush1.bf16.msra.mxu0 0
        %1874 = vmatprep.subr.bf16.mxu0 0
        %1875 = vmatpush1.bf16.msra.mxu0 0
        %1876 = vmatprep.subr.bf16.mxu0 0
        %1877 = vmatpush1.bf16.msra.mxu0 0
        %1878 = vmatprep.subr.bf16.mxu0 0
        %1879 = vmatpush1.bf16.msra.mxu0 0
        %1880 = vmatprep.subr.bf16.mxu0 0
        %1881 = vmatpush1.bf16.msra.mxu0 0
        %1882 = vmatprep.subr.bf16.mxu0 0
        %1883 = vmatpush1.bf16.msra.mxu0 0
        %1884 = vmatprep.subr.bf16.mxu0 0
        %1885 = vmatpush1.bf16.msra.mxu0 0
        %1886 = vmatprep.mubr.bf16.mxu0 0
        %1887 = vmatmul.mubr.bf16.gmra.mrb[0].mxu0 %v1803
        %v1888 = vpop.f32.mrb[0].mxu0
        %v1889 = vadd.f32 0.0, %v1888
        %v1890 = vpop.f32.mrb[0].mxu0
        %v1891 = vpop.f32.mrb[0].mxu0
        %v1892 = vadd.f32 0.0, %v1891
        %v1893 = vpop.f32.mrb[0].mxu0
        %1894 = vmatprep.mubr.bf16.mxu0 0
        %1895 = vmatmul.mubr.bf16.gmra.mrb[0].mxu0 %v1806
        %v1896 = vpop.f32.mrb[0].mxu0
        %v1897 = vpop.f32.mrb[0].mxu0
        %v1898 = vpop.f32.mrb[0].mxu0
        %v1899 = vpop.f32.mrb[0].mxu0
        %1900 = vmatprep.mubr.bf16.mxu0 0
        %1901 = vmatmul.mubr.bf16.gmra.mrb[0].mxu0 %v1809
        %v1902 = vpop.f32.mrb[0].mxu0
        %v1903 = vadd.f32 0.0, %v1902
        %v1904 = vpop.f32.mrb[0].mxu0
        %v1905 = vpop.f32.mrb[0].mxu0
        %v1906 = vadd.f32 0.0, %v1905
        %v1907 = vpop.f32.mrb[0].mxu0
        %1908 = vmatprep.mubr.bf16.mxu0 0
        %1909 = vmatmul.mubr.bf16.gmra.mrb[0].mxu0 %v1812
        %v1910 = vpop.f32.mrb[0].mxu0
        %v1911 = vpop.f32.mrb[0].mxu0
        %v1912 = vpop.f32.mrb[0].mxu0
        %v1913 = vpop.f32.mrb[0].mxu0
        %1914 = vmatprep.mubr.bf16.mxu0 0
        %1915 = vmatmul.mubr.bf16.gmra.mrb[0].mxu0 %v1815
        %v1916 = vpop.f32.mrb[0].mxu0
        %v1917 = vadd.f32 0.0, %v1916
        %v1918 = vpop.f32.mrb[0].mxu0
        %v1919 = vpop.f32.mrb[0].mxu0
        %v1920 = vadd.f32 0.0, %v1919
        %v1921 = vpop.f32.mrb[0].mxu0
        %1922 = vmatprep.mubr.bf16.mxu0 0
        %1923 = vmatmul.mubr.bf16.gmra.mrb[0].mxu0 %v1818
        %v1924 = vpop.f32.mrb[0].mxu0
        %v1925 = vpop.f32.mrb[0].mxu0
        %v1926 = vpop.f32.mrb[0].mxu0
        %v1927 = vpop.f32.mrb[0].mxu0
        %1928 = vmatprep.mubr.bf16.mxu0 0
        %1929 = vmatmul.mubr.bf16.gmra.mrb[0].mxu0 %v1821
        %v1930 = vpop.f32.mrb[0].mxu0
        %v1931 = vadd.f32 0.0, %v1930
        %v1932 = vpop.f32.mrb[0].mxu0
        %v1933 = vpop.f32.mrb[0].mxu0
        %v1934 = vadd.f32 0.0, %v1933
        %v1935 = vpop.f32.mrb[0].mxu0
        %1936 = vmatprep.mubr.bf16.mxu0 0
        %1937 = vmatmul.mubr.bf16.gmra.mrb[0].mxu0 %v1824
        %v1938 = vpop.f32.mrb[0].mxu0
        %v1939 = vpop.f32.mrb[0].mxu0
        %v1940 = vpop.f32.mrb[0].mxu0
        %v1941 = vpop.f32.mrb[0].mxu0
        %1942 = vmatprep.mubr.bf16.mxu0 0
        %1943 = vmatmul.mubr.bf16.gmra.mrb[0].mxu0 %v1827
        %v1944 = vpop.f32.mrb[0].mxu0
        %v1945 = vadd.f32 0.0, %v1944
        %v1946 = vpop.f32.mrb[0].mxu0
        %v1947 = vpop.f32.mrb[0].mxu0
        %v1948 = vadd.f32 0.0, %v1947
        %v1949 = vpop.f32.mrb[0].mxu0
        %1950 = vmatprep.mubr.bf16.mxu0 0
        %1951 = vmatmul.mubr.bf16.gmra.mrb[0].mxu0 %v1830
        %v1952 = vpop.f32.mrb[0].mxu0
        %v1953 = vpop.f32.mrb[0].mxu0
        %v1954 = vpop.f32.mrb[0].mxu0
        %v1955 = vpop.f32.mrb[0].mxu0
        %1956 = vmatprep.mubr.bf16.mxu0 0
        %1957 = vmatmul.mubr.bf16.gmra.mrb[0].mxu0 %v1833
        %v1958 = vpop.f32.mrb[0].mxu0
        %v1959 = vadd.f32 0.0, %v1958
        %v1960 = vpop.f32.mrb[0].mxu0
        %v1961 = vpop.f32.mrb[0].mxu0
        %v1962 = vadd.f32 0.0, %v1961
        %v1963 = vpop.f32.mrb[0].mxu0
        %1964 = vmatprep.mubr.bf16.mxu0 0
        %1965 = vmatmul.mubr.bf16.gmra.mrb[0].mxu0 %v1836
        %v1966 = vpop.f32.mrb[0].mxu0
        %v1967 = vpop.f32.mrb[0].mxu0
        %v1968 = vpop.f32.mrb[0].mxu0
        %v1969 = vpop.f32.mrb[0].mxu0
        %1970 = vmatprep.mubr.bf16.mxu0 0
        %1971 = vmatmul.mubr.bf16.gmra.mrb[0].mxu0 %v1839
        %v1972 = vpop.f32.mrb[0].mxu0
        %v1973 = vadd.f32 0.0, %v1972
        %v1974 = vpop.f32.mrb[0].mxu0
        %v1975 = vpop.f32.mrb[0].mxu0
        %v1976 = vadd.f32 0.0, %v1975
        %v1977 = vpop.f32.mrb[0].mxu0
        %1978 = vmatprep.mubr.bf16.mxu0 0
        %1979 = vmatmul.mubr.bf16.gmra.mrb[0].mxu0 %v1842
        %v1980 = vpop.f32.mrb[0].mxu0
        %v1981 = vpop.f32.mrb[0].mxu0
        %v1982 = vpop.f32.mrb[0].mxu0
        %v1983 = vpop.f32.mrb[0].mxu0
        %1984 = vmatprep.mubr.bf16.mxu0 0
        %1985 = vmatmul.mubr.bf16.gmra.mrb[0].mxu0 %v1845
        %v1986 = vpop.f32.mrb[0].mxu0
        %v1987 = vadd.f32 0.0, %v1986
        %v1988 = vpop.f32.mrb[0].mxu0
        %v1989 = vpop.f32.mrb[0].mxu0
        %v1990 = vadd.f32 0.0, %v1989
        %v1991 = vpop.f32.mrb[0].mxu0
        %1992 = vmatprep.mubr.bf16.mxu0 0
        %1993 = vmatmul.mubr.bf16.gmra.mrb[0].mxu0 %v1848
        %v1994 = vpop.f32.mrb[0].mxu0
        %v1995 = vpop.f32.mrb[0].mxu0
        %v1996 = vpop.f32.mrb[0].mxu0
        %v1997 = vpop.f32.mrb[0].mxu0
        %1998 = vdwg.mxu0
        %v2031 = vunpack.c.l.b16 %v1310
        %v2032 = vunpack.c.l.b16 %v1311
        %v2033 = vunpack.c.l.b16 %v1313
        %v2034 = vunpack.c.l.b16 %v1314
        %v2035 = vunpack.c.l.b16 %v1316
        %v2036 = vunpack.c.l.b16 %v1317
        %v2037 = vunpack.c.l.b16 %v1319
        %v2038 = vunpack.c.l.b16 %v1320
        %v2039 = vunpack.c.l.b16 %v1322
        %v2040 = vunpack.c.l.b16 %v1323
        %v2041 = vunpack.c.l.b16 %v1325
        %v2042 = vunpack.c.l.b16 %v1326
        %v2043 = vunpack.c.l.b16 %v1328
        %v2044 = vunpack.c.l.b16 %v1329
        %v2045 = vunpack.c.l.b16 %v1331
        %v2046 = vunpack.c.l.b16 %v1332
        %v2047 = vunpack.c.l.b16 %v1334
        %v2048 = vunpack.c.l.b16 %v1335
        %v2049 = vunpack.c.l.b16 %v1337
        %v2050 = vunpack.c.l.b16 %v1338
        %v2051 = vunpack.c.l.b16 %v1340
        %v2052 = vunpack.c.l.b16 %v1341
        %v2053 = vunpack.c.l.b16 %v1343
        %v2054 = vunpack.c.l.b16 %v1344
        %v2055 = vunpack.c.l.b16 %v1346
        %v2056 = vunpack.c.l.b16 %v1347
        %v2057 = vunpack.c.l.b16 %v1349
        %v2058 = vunpack.c.l.b16 %v1350
        %v2059 = vunpack.c.l.b16 %v1352
        %v2060 = vunpack.c.l.b16 %v1353
        %v2061 = vunpack.c.l.b16 %v1355
        %v2062 = vunpack.c.l.b16 %v1356
        %v2063 = vpack.c.b16 %v2032, %v2031
        %v2064 = vpack.c.b16 %v2034, %v2033
        %v2065 = vpack.c.b16 %v2036, %v2035
        %v2066 = vpack.c.b16 %v2038, %v2037
        %v2067 = vpack.c.b16 %v2040, %v2039
        %v2068 = vpack.c.b16 %v2042, %v2041
        %v2069 = vpack.c.b16 %v2044, %v2043
        %v2070 = vpack.c.b16 %v2046, %v2045
        %v2071 = vpack.c.b16 %v2048, %v2047
        %v2072 = vpack.c.b16 %v2050, %v2049
        %v2073 = vpack.c.b16 %v2052, %v2051
        %v2074 = vpack.c.b16 %v2054, %v2053
        %v2075 = vpack.c.b16 %v2056, %v2055
        %v2076 = vpack.c.b16 %v2058, %v2057
        %v2077 = vpack.c.b16 %v2060, %v2059
        %v2078 = vpack.c.b16 %v2062, %v2061
        %v2080 = vsel %vm1801, %v2063, 0
        %v2083 = vsel %vm1801, %v2064, 0
        %v2086 = vsel %vm1801, %v2065, 0
        %v2089 = vsel %vm1801, %v2066, 0
        %v2092 = vsel %vm1801, %v2067, 0
        %v2095 = vsel %vm1801, %v2068, 0
        %v2098 = vsel %vm1801, %v2069, 0
        %v2101 = vsel %vm1801, %v2070, 0
        %v2104 = vsel %vm1801, %v2071, 0
        %v2107 = vsel %vm1801, %v2072, 0
        %v2110 = vsel %vm1801, %v2073, 0
        %v2113 = vsel %vm1801, %v2074, 0
        %v2116 = vsel %vm1801, %v2075, 0
        %v2119 = vsel %vm1801, %v2076, 0
        %v2122 = vsel %vm1801, %v2077, 0
        %v2125 = vsel %vm1801, %v2078, 0
        %v2128 = vsel %vm1850, %v1364, 0
        %2130 = vmatprep.subr.bf16.mxu0 0
        %2131 = vmatpush1.bf16.msra.mxu0 %v2128
        %2132 = vmatprep.subr.bf16.mxu0 0
        %2133 = vmatpush1.bf16.msra.mxu0 0
        %2134 = vmatprep.subr.bf16.mxu0 0
        %2135 = vmatpush1.bf16.msra.mxu0 0
        %2136 = vmatprep.subr.bf16.mxu0 0
        %2137 = vmatpush1.bf16.msra.mxu0 0
        %2138 = vmatprep.subr.bf16.mxu0 0
        %2139 = vmatpush1.bf16.msra.mxu0 0
        %2140 = vmatprep.subr.bf16.mxu0 0
        %2141 = vmatpush1.bf16.msra.mxu0 0
        %2142 = vmatprep.subr.bf16.mxu0 0
        %2143 = vmatpush1.bf16.msra.mxu0 0
        %2144 = vmatprep.subr.bf16.mxu0 0
        %2145 = vmatpush1.bf16.msra.mxu0 0
        %2146 = vmatprep.subr.bf16.mxu0 0
        %2147 = vmatpush1.bf16.msra.mxu0 0
        %2148 = vmatprep.subr.bf16.mxu0 0
        %2149 = vmatpush1.bf16.msra.mxu0 0
        %2150 = vmatprep.subr.bf16.mxu0 0
        %2151 = vmatpush1.bf16.msra.mxu0 0
        %2152 = vmatprep.subr.bf16.mxu0 0
        %2153 = vmatpush1.bf16.msra.mxu0 0
        %2154 = vmatprep.subr.bf16.mxu0 0
        %2155 = vmatpush1.bf16.msra.mxu0 0
        %2156 = vmatprep.subr.bf16.mxu0 0
        %2157 = vmatpush1.bf16.msra.mxu0 0
        %2158 = vmatprep.subr.bf16.mxu0 0
        %2159 = vmatpush1.bf16.msra.mxu0 0
        %2160 = vmatprep.subr.bf16.mxu0 0
        %2161 = vmatpush1.bf16.msra.mxu0 0
        %2162 = vmatprep.mubr.bf16.mxu0 0
        %2163 = vmatmul.mubr.bf16.gmra.mrb[0].mxu0 %v2080
        %v2164 = vpop.f32.mrb[0].mxu0
        %v2165 = vadd.f32 %v1889, %v2164
        %v2166 = vpop.f32.mrb[0].mxu0
        %v2167 = vpop.f32.mrb[0].mxu0
        %v2168 = vadd.f32 %v1892, %v2167
        %v2169 = vpop.f32.mrb[0].mxu0
        %2170 = vmatprep.mubr.bf16.mxu0 0
        %2171 = vmatmul.mubr.bf16.gmra.mrb[0].mxu0 %v2083
        %v2172 = vpop.f32.mrb[0].mxu0
        %v2173 = vpop.f32.mrb[0].mxu0
        %v2174 = vpop.f32.mrb[0].mxu0
        %v2175 = vpop.f32.mrb[0].mxu0
        %2176 = vmatprep.mubr.bf16.mxu0 0
        %2177 = vmatmul.mubr.bf16.gmra.mrb[0].mxu0 %v2086
        %v2178 = vpop.f32.mrb[0].mxu0
        %v2179 = vadd.f32 %v1903, %v2178
        %v2180 = vpop.f32.mrb[0].mxu0
        %v2181 = vpop.f32.mrb[0].mxu0
        %v2182 = vadd.f32 %v1906, %v2181
        %v2183 = vpop.f32.mrb[0].mxu0
        %2184 = vmatprep.mubr.bf16.mxu0 0
        %2185 = vmatmul.mubr.bf16.gmra.mrb[0].mxu0 %v2089
        %v2186 = vpop.f32.mrb[0].mxu0
        %v2187 = vpop.f32.mrb[0].mxu0
        %v2188 = vpop.f32.mrb[0].mxu0
        %v2189 = vpop.f32.mrb[0].mxu0
        %2190 = vmatprep.mubr.bf16.mxu0 0
        %2191 = vmatmul.mubr.bf16.gmra.mrb[0].mxu0 %v2092
        %v2192 = vpop.f32.mrb[0].mxu0
        %v2193 = vadd.f32 %v1917, %v2192
        %v2194 = vpop.f32.mrb[0].mxu0
        %v2195 = vpop.f32.mrb[0].mxu0
        %v2196 = vadd.f32 %v1920, %v2195
        %v2197 = vpop.f32.mrb[0].mxu0
        %2198 = vmatprep.mubr.bf16.mxu0 0
        %2199 = vmatmul.mubr.bf16.gmra.mrb[0].mxu0 %v2095
        %v2200 = vpop.f32.mrb[0].mxu0
        %v2201 = vpop.f32.mrb[0].mxu0
        %v2202 = vpop.f32.mrb[0].mxu0
        %v2203 = vpop.f32.mrb[0].mxu0
        %2204 = vmatprep.mubr.bf16.mxu0 0
        %2205 = vmatmul.mubr.bf16.gmra.mrb[0].mxu0 %v2098
        %v2206 = vpop.f32.mrb[0].mxu0
        %v2207 = vadd.f32 %v1931, %v2206
        %v2208 = vpop.f32.mrb[0].mxu0
        %v2209 = vpop.f32.mrb[0].mxu0
        %v2210 = vadd.f32 %v1934, %v2209
        %v2211 = vpop.f32.mrb[0].mxu0
        %2212 = vmatprep.mubr.bf16.mxu0 0
        %2213 = vmatmul.mubr.bf16.gmra.mrb[0].mxu0 %v2101
        %v2214 = vpop.f32.mrb[0].mxu0
        %v2215 = vpop.f32.mrb[0].mxu0
        %v2216 = vpop.f32.mrb[0].mxu0
        %v2217 = vpop.f32.mrb[0].mxu0
        %2218 = vmatprep.mubr.bf16.mxu0 0
        %2219 = vmatmul.mubr.bf16.gmra.mrb[0].mxu0 %v2104
        %v2220 = vpop.f32.mrb[0].mxu0
        %v2221 = vadd.f32 %v1945, %v2220
        %v2222 = vpop.f32.mrb[0].mxu0
        %v2223 = vpop.f32.mrb[0].mxu0
        %v2224 = vadd.f32 %v1948, %v2223
        %v2225 = vpop.f32.mrb[0].mxu0
        %2226 = vmatprep.mubr.bf16.mxu0 0
        %2227 = vmatmul.mubr.bf16.gmra.mrb[0].mxu0 %v2107
        %v2228 = vpop.f32.mrb[0].mxu0
        %v2229 = vpop.f32.mrb[0].mxu0
        %v2230 = vpop.f32.mrb[0].mxu0
        %v2231 = vpop.f32.mrb[0].mxu0
        %2232 = vmatprep.mubr.bf16.mxu0 0
        %2233 = vmatmul.mubr.bf16.gmra.mrb[0].mxu0 %v2110
        %v2234 = vpop.f32.mrb[0].mxu0
        %v2235 = vadd.f32 %v1959, %v2234
        %v2236 = vpop.f32.mrb[0].mxu0
        %v2237 = vpop.f32.mrb[0].mxu0
        %v2238 = vadd.f32 %v1962, %v2237
        %v2239 = vpop.f32.mrb[0].mxu0
        %2240 = vmatprep.mubr.bf16.mxu0 0
        %2241 = vmatmul.mubr.bf16.gmra.mrb[0].mxu0 %v2113
        %v2242 = vpop.f32.mrb[0].mxu0
        %v2243 = vpop.f32.mrb[0].mxu0
        %v2244 = vpop.f32.mrb[0].mxu0
        %v2245 = vpop.f32.mrb[0].mxu0
        %2246 = vmatprep.mubr.bf16.mxu0 0
        %2247 = vmatmul.mubr.bf16.gmra.mrb[0].mxu0 %v2116
        %v2248 = vpop.f32.mrb[0].mxu0
        %v2249 = vadd.f32 %v1973, %v2248
        %v2250 = vpop.f32.mrb[0].mxu0
        %v2251 = vpop.f32.mrb[0].mxu0
        %v2252 = vadd.f32 %v1976, %v2251
        %v2253 = vpop.f32.mrb[0].mxu0
        %2254 = vmatprep.mubr.bf16.mxu0 0
        %2255 = vmatmul.mubr.bf16.gmra.mrb[0].mxu0 %v2119
        %v2256 = vpop.f32.mrb[0].mxu0
        %v2257 = vpop.f32.mrb[0].mxu0
        %v2258 = vpop.f32.mrb[0].mxu0
        %v2259 = vpop.f32.mrb[0].mxu0
        %2260 = vmatprep.mubr.bf16.mxu0 0
        %2261 = vmatmul.mubr.bf16.gmra.mrb[0].mxu0 %v2122
        %v2262 = vpop.f32.mrb[0].mxu0
        %v2263 = vadd.f32 %v1987, %v2262
        %v2264 = vpop.f32.mrb[0].mxu0
        %v2265 = vpop.f32.mrb[0].mxu0
        %v2266 = vadd.f32 %v1990, %v2265
        %v2267 = vpop.f32.mrb[0].mxu0
        %2268 = vmatprep.mubr.bf16.mxu0 0
        %2269 = vmatmul.mubr.bf16.gmra.mrb[0].mxu0 %v2125
        %v2270 = vpop.f32.mrb[0].mxu0
        %v2271 = vpop.f32.mrb[0].mxu0
        %v2272 = vpop.f32.mrb[0].mxu0
        %v2273 = vpop.f32.mrb[0].mxu0
        %2274 = vdwg.mxu0
        %vm2291 = vcmask 1042432
        %vm2292 = vcmask 1046532
        %vm2293 = vmor %vm2291, %vm2292
        %v2294 = vrot.slane %v1310, 5
        %v2295 = vrot.slane %v2294, 4
        %v2296 = vrot.slane %v1311, 5
        %v2297 = vsel %vm2293, %v2295, %v2296
        %v2298 = vrot.slane %v2296, 4
        %v2299 = vrot.slane %v1312, 5
        %v2300 = vsel %vm2293, %v2298, %v2299
        %v2301 = vrot.slane %v1313, 5
        %v2302 = vrot.slane %v2301, 4
        %v2303 = vrot.slane %v1314, 5
        %v2304 = vsel %vm2293, %v2302, %v2303
        %v2305 = vrot.slane %v2303, 4
        %v2306 = vrot.slane %v1315, 5
        %v2307 = vsel %vm2293, %v2305, %v2306
        %v2308 = vrot.slane %v1316, 5
        %v2309 = vrot.slane %v2308, 4
        %v2310 = vrot.slane %v1317, 5
        %v2311 = vsel %vm2293, %v2309, %v2310
        %v2312 = vrot.slane %v2310, 4
        %v2313 = vrot.slane %v1318, 5
        %v2314 = vsel %vm2293, %v2312, %v2313
        %v2315 = vrot.slane %v1319, 5
        %v2316 = vrot.slane %v2315, 4
        %v2317 = vrot.slane %v1320, 5
        %v2318 = vsel %vm2293, %v2316, %v2317
        %v2319 = vrot.slane %v2317, 4
        %v2320 = vrot.slane %v1321, 5
        %v2321 = vsel %vm2293, %v2319, %v2320
        %v2322 = vrot.slane %v1322, 5
        %v2323 = vrot.slane %v2322, 4
        %v2324 = vrot.slane %v1323, 5
        %v2325 = vsel %vm2293, %v2323, %v2324
        %v2326 = vrot.slane %v2324, 4
        %v2327 = vrot.slane %v1324, 5
        %v2328 = vsel %vm2293, %v2326, %v2327
        %v2329 = vrot.slane %v1325, 5
        %v2330 = vrot.slane %v2329, 4
        %v2331 = vrot.slane %v1326, 5
        %v2332 = vsel %vm2293, %v2330, %v2331
        %v2333 = vrot.slane %v2331, 4
        %v2334 = vrot.slane %v1327, 5
        %v2335 = vsel %vm2293, %v2333, %v2334
        %v2336 = vrot.slane %v1328, 5
        %v2337 = vrot.slane %v2336, 4
        %v2338 = vrot.slane %v1329, 5
        %v2339 = vsel %vm2293, %v2337, %v2338
        %v2340 = vrot.slane %v2338, 4
        %v2341 = vrot.slane %v1330, 5
        %v2342 = vsel %vm2293, %v2340, %v2341
        %v2343 = vrot.slane %v1331, 5
        %v2344 = vrot.slane %v2343, 4
        %v2345 = vrot.slane %v1332, 5
        %v2346 = vsel %vm2293, %v2344, %v2345
        %v2347 = vrot.slane %v2345, 4
        %v2348 = vrot.slane %v1333, 5
        %v2349 = vsel %vm2293, %v2347, %v2348
        %v2350 = vrot.slane %v1334, 5
        %v2351 = vrot.slane %v2350, 4
        %v2352 = vrot.slane %v1335, 5
        %v2353 = vsel %vm2293, %v2351, %v2352
        %v2354 = vrot.slane %v2352, 4
        %v2355 = vrot.slane %v1336, 5
        %v2356 = vsel %vm2293, %v2354, %v2355
        %v2357 = vrot.slane %v1337, 5
        %v2358 = vrot.slane %v2357, 4
        %v2359 = vrot.slane %v1338, 5
        %v2360 = vsel %vm2293, %v2358, %v2359
        %v2361 = vrot.slane %v2359, 4
        %v2362 = vrot.slane %v1339, 5
        %v2363 = vsel %vm2293, %v2361, %v2362
        %v2364 = vrot.slane %v1340, 5
        %v2365 = vrot.slane %v2364, 4
        %v2366 = vrot.slane %v1341, 5
        %v2367 = vsel %vm2293, %v2365, %v2366
        %v2368 = vrot.slane %v2366, 4
        %v2369 = vrot.slane %v1342, 5
        %v2370 = vsel %vm2293, %v2368, %v2369
        %v2371 = vrot.slane %v1343, 5
        %v2372 = vrot.slane %v2371, 4
        %v2373 = vrot.slane %v1344, 5
        %v2374 = vsel %vm2293, %v2372, %v2373
        %v2375 = vrot.slane %v2373, 4
        %v2376 = vrot.slane %v1345, 5
        %v2377 = vsel %vm2293, %v2375, %v2376
        %v2378 = vrot.slane %v1346, 5
        %v2379 = vrot.slane %v2378, 4
        %v2380 = vrot.slane %v1347, 5
        %v2381 = vsel %vm2293, %v2379, %v2380
        %v2382 = vrot.slane %v2380, 4
        %v2383 = vrot.slane %v1348, 5
        %v2384 = vsel %vm2293, %v2382, %v2383
        %v2385 = vrot.slane %v1349, 5
        %v2386 = vrot.slane %v2385, 4
        %v2387 = vrot.slane %v1350, 5
        %v2388 = vsel %vm2293, %v2386, %v2387
        %v2389 = vrot.slane %v2387, 4
        %v2390 = vrot.slane %v1351, 5
        %v2391 = vsel %vm2293, %v2389, %v2390
        %v2392 = vrot.slane %v1352, 5
        %v2393 = vrot.slane %v2392, 4
        %v2394 = vrot.slane %v1353, 5
        %v2395 = vsel %vm2293, %v2393, %v2394
        %v2396 = vrot.slane %v2394, 4
        %v2397 = vrot.slane %v1354, 5
        %v2398 = vsel %vm2293, %v2396, %v2397
        %v2399 = vrot.slane %v1355, 5
        %v2400 = vrot.slane %v2399, 4
        %v2401 = vrot.slane %v1356, 5
        %v2402 = vsel %vm2293, %v2400, %v2401
        %v2403 = vrot.slane %v2401, 4
        %v2404 = vrot.slane %v1357, 5
        %v2405 = vsel %vm2293, %v2403, %v2404
        %v2406 = vld [vmem:[%s3 + $0x8] sm:$0xf]
        %v2407 = vunpack.c.l.b16 %v2297
        %v2408 = vunpack.c.l.b16 %v2300
        %v2409 = vunpack.c.l.b16 %v2304
        %v2410 = vunpack.c.l.b16 %v2307
        %v2411 = vunpack.c.l.b16 %v2311
        %v2412 = vunpack.c.l.b16 %v2314
        %v2413 = vunpack.c.l.b16 %v2318
        %v2414 = vunpack.c.l.b16 %v2321
        %v2415 = vunpack.c.l.b16 %v2325
        %v2416 = vunpack.c.l.b16 %v2328
        %v2417 = vunpack.c.l.b16 %v2332
        %v2418 = vunpack.c.l.b16 %v2335
        %v2419 = vunpack.c.l.b16 %v2339
        %v2420 = vunpack.c.l.b16 %v2342
        %v2421 = vunpack.c.l.b16 %v2346
        %v2422 = vunpack.c.l.b16 %v2349
        %v2423 = vunpack.c.l.b16 %v2353
        %v2424 = vunpack.c.l.b16 %v2356
        %v2425 = vunpack.c.l.b16 %v2360
        %v2426 = vunpack.c.l.b16 %v2363
        %v2427 = vunpack.c.l.b16 %v2367
        %v2428 = vunpack.c.l.b16 %v2370
        %v2429 = vunpack.c.l.b16 %v2374
        %v2430 = vunpack.c.l.b16 %v2377
        %v2431 = vunpack.c.l.b16 %v2381
        %v2432 = vunpack.c.l.b16 %v2384
        %v2433 = vunpack.c.l.b16 %v2388
        %v2434 = vunpack.c.l.b16 %v2391
        %v2435 = vunpack.c.l.b16 %v2395
        %v2436 = vunpack.c.l.b16 %v2398
        %v2437 = vunpack.c.l.b16 %v2402
        %v2438 = vunpack.c.l.b16 %v2405
        %v2439 = vpack.c.b16 %v2408, %v2407
        %v2440 = vpack.c.b16 %v2410, %v2409
        %v2441 = vpack.c.b16 %v2412, %v2411
        %v2442 = vpack.c.b16 %v2414, %v2413
        %v2443 = vpack.c.b16 %v2416, %v2415
        %v2444 = vpack.c.b16 %v2418, %v2417
        %v2445 = vpack.c.b16 %v2420, %v2419
        %v2446 = vpack.c.b16 %v2422, %v2421
        %v2447 = vpack.c.b16 %v2424, %v2423
        %v2448 = vpack.c.b16 %v2426, %v2425
        %v2449 = vpack.c.b16 %v2428, %v2427
        %v2450 = vpack.c.b16 %v2430, %v2429
        %v2451 = vpack.c.b16 %v2432, %v2431
        %v2452 = vpack.c.b16 %v2434, %v2433
        %v2453 = vpack.c.b16 %v2436, %v2435
        %v2454 = vpack.c.b16 %v2438, %v2437
        %v2456 = vsel %vm1801, %v2439, 0
        %v2459 = vsel %vm1801, %v2440, 0
        %v2462 = vsel %vm1801, %v2441, 0
        %v2465 = vsel %vm1801, %v2442, 0
        %v2468 = vsel %vm1801, %v2443, 0
        %v2471 = vsel %vm1801, %v2444, 0
        %v2474 = vsel %vm1801, %v2445, 0
        %v2477 = vsel %vm1801, %v2446, 0
        %v2480 = vsel %vm1801, %v2447, 0
        %v2483 = vsel %vm1801, %v2448, 0
        %v2486 = vsel %vm1801, %v2449, 0
        %v2489 = vsel %vm1801, %v2450, 0
        %v2492 = vsel %vm1801, %v2451, 0
        %v2495 = vsel %vm1801, %v2452, 0
        %v2498 = vsel %vm1801, %v2453, 0
        %v2501 = vsel %vm1801, %v2454, 0
        %v2504 = vsel %vm1850, %v2406, 0
        %2506 = vmatprep.subr.bf16.mxu0 0
        %2507 = vmatpush1.bf16.msra.mxu0 %v2504
        %2508 = vmatprep.subr.bf16.mxu0 0
        %2509 = vmatpush1.bf16.msra.mxu0 0
        %2510 = vmatprep.subr.bf16.mxu0 0
        %2511 = vmatpush1.bf16.msra.mxu0 0
        %2512 = vmatprep.subr.bf16.mxu0 0
        %2513 = vmatpush1.bf16.msra.mxu0 0
        %2514 = vmatprep.subr.bf16.mxu0 0
        %2515 = vmatpush1.bf16.msra.mxu0 0
        %2516 = vmatprep.subr.bf16.mxu0 0
        %2517 = vmatpush1.bf16.msra.mxu0 0
        %2518 = vmatprep.subr.bf16.mxu0 0
        %2519 = vmatpush1.bf16.msra.mxu0 0
        %2520 = vmatprep.subr.bf16.mxu0 0
        %2521 = vmatpush1.bf16.msra.mxu0 0
        %2522 = vmatprep.subr.bf16.mxu0 0
        %2523 = vmatpush1.bf16.msra.mxu0 0
        %2524 = vmatprep.subr.bf16.mxu0 0
        %2525 = vmatpush1.bf16.msra.mxu0 0
        %2526 = vmatprep.subr.bf16.mxu0 0
        %2527 = vmatpush1.bf16.msra.mxu0 0
        %2528 = vmatprep.subr.bf16.mxu0 0
        %2529 = vmatpush1.bf16.msra.mxu0 0
        %2530 = vmatprep.subr.bf16.mxu0 0
        %2531 = vmatpush1.bf16.msra.mxu0 0
        %2532 = vmatprep.subr.bf16.mxu0 0
        %2533 = vmatpush1.bf16.msra.mxu0 0
        %2534 = vmatprep.subr.bf16.mxu0 0
        %2535 = vmatpush1.bf16.msra.mxu0 0
        %2536 = vmatprep.subr.bf16.mxu0 0
        %2537 = vmatpush1.bf16.msra.mxu0 0
        %2538 = vmatprep.mubr.bf16.mxu0 0
        %2539 = vmatmul.mubr.bf16.gmra.mrb[0].mxu0 %v2456
        %v2540 = vpop.f32.mrb[0].mxu0
        %v2541 = vadd.f32 0.0, %v2540
        %v2542 = vpop.f32.mrb[0].mxu0
        %v2543 = vpop.f32.mrb[0].mxu0
        %v2544 = vadd.f32 0.0, %v2543
        %v2545 = vpop.f32.mrb[0].mxu0
        %2546 = vmatprep.mubr.bf16.mxu0 0
        %2547 = vmatmul.mubr.bf16.gmra.mrb[0].mxu0 %v2459
        %v2548 = vpop.f32.mrb[0].mxu0
        %v2549 = vpop.f32.mrb[0].mxu0
        %v2550 = vpop.f32.mrb[0].mxu0
        %v2551 = vpop.f32.mrb[0].mxu0
        %2552 = vmatprep.mubr.bf16.mxu0 0
        %2553 = vmatmul.mubr.bf16.gmra.mrb[0].mxu0 %v2462
        %v2554 = vpop.f32.mrb[0].mxu0
        %v2555 = vadd.f32 0.0, %v2554
        %v2556 = vpop.f32.mrb[0].mxu0
        %v2557 = vpop.f32.mrb[0].mxu0
        %v2558 = vadd.f32 0.0, %v2557
        %v2559 = vpop.f32.mrb[0].mxu0
        %2560 = vmatprep.mubr.bf16.mxu0 0
        %2561 = vmatmul.mubr.bf16.gmra.mrb[0].mxu0 %v2465
        %v2562 = vpop.f32.mrb[0].mxu0
        %v2563 = vpop.f32.mrb[0].mxu0
        %v2564 = vpop.f32.mrb[0].mxu0
        %v2565 = vpop.f32.mrb[0].mxu0
        %2566 = vmatprep.mubr.bf16.mxu0 0
        %2567 = vmatmul.mubr.bf16.gmra.mrb[0].mxu0 %v2468
        %v2568 = vpop.f32.mrb[0].mxu0
        %v2569 = vadd.f32 0.0, %v2568
        %v2570 = vpop.f32.mrb[0].mxu0
        %v2571 = vpop.f32.mrb[0].mxu0
        %v2572 = vadd.f32 0.0, %v2571
        %v2573 = vpop.f32.mrb[0].mxu0
        %2574 = vmatprep.mubr.bf16.mxu0 0
        %2575 = vmatmul.mubr.bf16.gmra.mrb[0].mxu0 %v2471
        %v2576 = vpop.f32.mrb[0].mxu0
        %v2577 = vpop.f32.mrb[0].mxu0
        %v2578 = vpop.f32.mrb[0].mxu0
        %v2579 = vpop.f32.mrb[0].mxu0
        %2580 = vmatprep.mubr.bf16.mxu0 0
        %2581 = vmatmul.mubr.bf16.gmra.mrb[0].mxu0 %v2474
        %v2582 = vpop.f32.mrb[0].mxu0
        %v2583 = vadd.f32 0.0, %v2582
        %v2584 = vpop.f32.mrb[0].mxu0
        %v2585 = vpop.f32.mrb[0].mxu0
        %v2586 = vadd.f32 0.0, %v2585
        %v2587 = vpop.f32.mrb[0].mxu0
        %2588 = vmatprep.mubr.bf16.mxu0 0
        %2589 = vmatmul.mubr.bf16.gmra.mrb[0].mxu0 %v2477
        %v2590 = vpop.f32.mrb[0].mxu0
        %v2591 = vpop.f32.mrb[0].mxu0
        %v2592 = vpop.f32.mrb[0].mxu0
        %v2593 = vpop.f32.mrb[0].mxu0
        %2594 = vmatprep.mubr.bf16.mxu0 0
        %2595 = vmatmul.mubr.bf16.gmra.mrb[0].mxu0 %v2480
        %v2596 = vpop.f32.mrb[0].mxu0
        %v2597 = vadd.f32 0.0, %v2596
        %v2598 = vpop.f32.mrb[0].mxu0
        %v2599 = vpop.f32.mrb[0].mxu0
        %v2600 = vadd.f32 0.0, %v2599
        %v2601 = vpop.f32.mrb[0].mxu0
        %2602 = vmatprep.mubr.bf16.mxu0 0
        %2603 = vmatmul.mubr.bf16.gmra.mrb[0].mxu0 %v2483
        %v2604 = vpop.f32.mrb[0].mxu0
        %v2605 = vpop.f32.mrb[0].mxu0
        %v2606 = vpop.f32.mrb[0].mxu0
        %v2607 = vpop.f32.mrb[0].mxu0
        %2608 = vmatprep.mubr.bf16.mxu0 0
        %2609 = vmatmul.mubr.bf16.gmra.mrb[0].mxu0 %v2486
        %v2610 = vpop.f32.mrb[0].mxu0
        %v2611 = vadd.f32 0.0, %v2610
        %v2612 = vpop.f32.mrb[0].mxu0
        %v2613 = vpop.f32.mrb[0].mxu0
        %v2614 = vadd.f32 0.0, %v2613
        %v2615 = vpop.f32.mrb[0].mxu0
        %2616 = vmatprep.mubr.bf16.mxu0 0
        %2617 = vmatmul.mubr.bf16.gmra.mrb[0].mxu0 %v2489
        %v2618 = vpop.f32.mrb[0].mxu0
        %v2619 = vpop.f32.mrb[0].mxu0
        %v2620 = vpop.f32.mrb[0].mxu0
        %v2621 = vpop.f32.mrb[0].mxu0
        %2622 = vmatprep.mubr.bf16.mxu0 0
        %2623 = vmatmul.mubr.bf16.gmra.mrb[0].mxu0 %v2492
        %v2624 = vpop.f32.mrb[0].mxu0
        %v2625 = vadd.f32 0.0, %v2624
        %v2626 = vpop.f32.mrb[0].mxu0
        %v2627 = vpop.f32.mrb[0].mxu0
        %v2628 = vadd.f32 0.0, %v2627
        %v2629 = vpop.f32.mrb[0].mxu0
        %2630 = vmatprep.mubr.bf16.mxu0 0
        %2631 = vmatmul.mubr.bf16.gmra.mrb[0].mxu0 %v2495
        %v2632 = vpop.f32.mrb[0].mxu0
        %v2633 = vpop.f32.mrb[0].mxu0
        %v2634 = vpop.f32.mrb[0].mxu0
        %v2635 = vpop.f32.mrb[0].mxu0
        %2636 = vmatprep.mubr.bf16.mxu0 0
        %2637 = vmatmul.mubr.bf16.gmra.mrb[0].mxu0 %v2498
        %v2638 = vpop.f32.mrb[0].mxu0
        %v2639 = vadd.f32 0.0, %v2638
        %v2640 = vpop.f32.mrb[0].mxu0
        %v2641 = vpop.f32.mrb[0].mxu0
        %v2642 = vadd.f32 0.0, %v2641
        %v2643 = vpop.f32.mrb[0].mxu0
        %2644 = vmatprep.mubr.bf16.mxu0 0
        %2645 = vmatmul.mubr.bf16.gmra.mrb[0].mxu0 %v2501
        %v2646 = vpop.f32.mrb[0].mxu0
        %v2647 = vpop.f32.mrb[0].mxu0
        %v2648 = vpop.f32.mrb[0].mxu0
        %v2649 = vpop.f32.mrb[0].mxu0
        %2650 = vdwg.mxu0
        %v2651 = vadd.f32 %v2165, %v2541
        %v2652 = vadd.f32 %v2168, %v2544
        %v2653 = vadd.f32 %v2179, %v2555
        %v2654 = vadd.f32 %v2182, %v2558
        %v2655 = vadd.f32 %v2193, %v2569
        %v2656 = vadd.f32 %v2196, %v2572
        %v2657 = vadd.f32 %v2207, %v2583
        %v2658 = vadd.f32 %v2210, %v2586
        %v2659 = vadd.f32 %v2221, %v2597
        %v2660 = vadd.f32 %v2224, %v2600
        %v2661 = vadd.f32 %v2235, %v2611
        %v2662 = vadd.f32 %v2238, %v2614
        %v2663 = vadd.f32 %v2249, %v2625
        %v2664 = vadd.f32 %v2252, %v2628
        %v2665 = vadd.f32 %v2263, %v2639
        %v2666 = vadd.f32 %v2266, %v2642
        %v2667 = vld [vmem:[%s3 + $0xc] sm:$0xf]
        %v2670 = vunpack.c.l.b16 %v1358
        %v2671 = vunpack.c.l.b16 %v1359
        %v2672 = vpack.c.b16 %v2671, %v2670
        %v2674 = vsel %vm1801, %v2672, 0
        %v2677 = vsel %vm1850, %v2667, 0
        %2679 = vmatprep.subr.bf16.mxu0 0
        %2680 = vmatpush1.bf16.msra.mxu0 %v2677
        %2681 = vmatprep.subr.bf16.mxu0 0
        %2682 = vmatpush1.bf16.msra.mxu0 0
        %2683 = vmatprep.subr.bf16.mxu0 0
        %2684 = vmatpush1.bf16.msra.mxu0 0
        %2685 = vmatprep.subr.bf16.mxu0 0
        %2686 = vmatpush1.bf16.msra.mxu0 0
        %2687 = vmatprep.subr.bf16.mxu0 0
        %2688 = vmatpush1.bf16.msra.mxu0 0
        %2689 = vmatprep.subr.bf16.mxu0 0
        %2690 = vmatpush1.bf16.msra.mxu0 0
        %2691 = vmatprep.subr.bf16.mxu0 0
        %2692 = vmatpush1.bf16.msra.mxu0 0
        %2693 = vmatprep.subr.bf16.mxu0 0
        %2694 = vmatpush1.bf16.msra.mxu0 0
        %2695 = vmatprep.subr.bf16.mxu0 0
        %2696 = vmatpush1.bf16.msra.mxu0 0
        %2697 = vmatprep.subr.bf16.mxu0 0
        %2698 = vmatpush1.bf16.msra.mxu0 0
        %2699 = vmatprep.subr.bf16.mxu0 0
        %2700 = vmatpush1.bf16.msra.mxu0 0
        %2701 = vmatprep.subr.bf16.mxu0 0
        %2702 = vmatpush1.bf16.msra.mxu0 0
        %2703 = vmatprep.subr.bf16.mxu0 0
        %2704 = vmatpush1.bf16.msra.mxu0 0
        %2705 = vmatprep.subr.bf16.mxu0 0
        %2706 = vmatpush1.bf16.msra.mxu0 0
        %2707 = vmatprep.subr.bf16.mxu0 0
        %2708 = vmatpush1.bf16.msra.mxu0 0
        %2709 = vmatprep.subr.bf16.mxu0 0
        %2710 = vmatpush1.bf16.msra.mxu0 0
        %2711 = vmatprep.mubr.bf16.mxu0 0
        %2712 = vmatmul.mubr.bf16.gmra.mrb[0].mxu0 %v2083
        %v2713 = vpop.f32.mrb[0].mxu0
        %v2714 = vadd.f32 0.0, %v2713
        %v2715 = vpop.f32.mrb[0].mxu0
        %v2716 = vpop.f32.mrb[0].mxu0
        %v2717 = vadd.f32 0.0, %v2716
        %v2718 = vpop.f32.mrb[0].mxu0
        %2719 = vmatprep.mubr.bf16.mxu0 0
        %2720 = vmatmul.mubr.bf16.gmra.mrb[0].mxu0 %v2086
        %v2721 = vpop.f32.mrb[0].mxu0
        %v2722 = vpop.f32.mrb[0].mxu0
        %v2723 = vpop.f32.mrb[0].mxu0
        %v2724 = vpop.f32.mrb[0].mxu0
        %2725 = vmatprep.mubr.bf16.mxu0 0
        %2726 = vmatmul.mubr.bf16.gmra.mrb[0].mxu0 %v2089
        %v2727 = vpop.f32.mrb[0].mxu0
        %v2728 = vadd.f32 0.0, %v2727
        %v2729 = vpop.f32.mrb[0].mxu0
        %v2730 = vpop.f32.mrb[0].mxu0
        %v2731 = vadd.f32 0.0, %v2730
        %v2732 = vpop.f32.mrb[0].mxu0
        %2733 = vmatprep.mubr.bf16.mxu0 0
        %2734 = vmatmul.mubr.bf16.gmra.mrb[0].mxu0 %v2092
        %v2735 = vpop.f32.mrb[0].mxu0
        %v2736 = vpop.f32.mrb[0].mxu0
        %v2737 = vpop.f32.mrb[0].mxu0
        %v2738 = vpop.f32.mrb[0].mxu0
        %2739 = vmatprep.mubr.bf16.mxu0 0
        %2740 = vmatmul.mubr.bf16.gmra.mrb[0].mxu0 %v2095
        %v2741 = vpop.f32.mrb[0].mxu0
        %v2742 = vadd.f32 0.0, %v2741
        %v2743 = vpop.f32.mrb[0].mxu0
        %v2744 = vpop.f32.mrb[0].mxu0
        %v2745 = vadd.f32 0.0, %v2744
        %v2746 = vpop.f32.mrb[0].mxu0
        %2747 = vmatprep.mubr.bf16.mxu0 0
        %2748 = vmatmul.mubr.bf16.gmra.mrb[0].mxu0 %v2098
        %v2749 = vpop.f32.mrb[0].mxu0
        %v2750 = vpop.f32.mrb[0].mxu0
        %v2751 = vpop.f32.mrb[0].mxu0
        %v2752 = vpop.f32.mrb[0].mxu0
        %2753 = vmatprep.mubr.bf16.mxu0 0
        %2754 = vmatmul.mubr.bf16.gmra.mrb[0].mxu0 %v2101
        %v2755 = vpop.f32.mrb[0].mxu0
        %v2756 = vadd.f32 0.0, %v2755
        %v2757 = vpop.f32.mrb[0].mxu0
        %v2758 = vpop.f32.mrb[0].mxu0
        %v2759 = vadd.f32 0.0, %v2758
        %v2760 = vpop.f32.mrb[0].mxu0
        %2761 = vmatprep.mubr.bf16.mxu0 0
        %2762 = vmatmul.mubr.bf16.gmra.mrb[0].mxu0 %v2104
        %v2763 = vpop.f32.mrb[0].mxu0
        %v2764 = vpop.f32.mrb[0].mxu0
        %v2765 = vpop.f32.mrb[0].mxu0
        %v2766 = vpop.f32.mrb[0].mxu0
        %2767 = vmatprep.mubr.bf16.mxu0 0
        %2768 = vmatmul.mubr.bf16.gmra.mrb[0].mxu0 %v2107
        %v2769 = vpop.f32.mrb[0].mxu0
        %v2770 = vadd.f32 0.0, %v2769
        %v2771 = vpop.f32.mrb[0].mxu0
        %v2772 = vpop.f32.mrb[0].mxu0
        %v2773 = vadd.f32 0.0, %v2772
        %v2774 = vpop.f32.mrb[0].mxu0
        %2775 = vmatprep.mubr.bf16.mxu0 0
        %2776 = vmatmul.mubr.bf16.gmra.mrb[0].mxu0 %v2110
        %v2777 = vpop.f32.mrb[0].mxu0
        %v2778 = vpop.f32.mrb[0].mxu0
        %v2779 = vpop.f32.mrb[0].mxu0
        %v2780 = vpop.f32.mrb[0].mxu0
        %2781 = vmatprep.mubr.bf16.mxu0 0
        %2782 = vmatmul.mubr.bf16.gmra.mrb[0].mxu0 %v2113
        %v2783 = vpop.f32.mrb[0].mxu0
        %v2784 = vadd.f32 0.0, %v2783
        %v2785 = vpop.f32.mrb[0].mxu0
        %v2786 = vpop.f32.mrb[0].mxu0
        %v2787 = vadd.f32 0.0, %v2786
        %v2788 = vpop.f32.mrb[0].mxu0
        %2789 = vmatprep.mubr.bf16.mxu0 0
        %2790 = vmatmul.mubr.bf16.gmra.mrb[0].mxu0 %v2116
        %v2791 = vpop.f32.mrb[0].mxu0
        %v2792 = vpop.f32.mrb[0].mxu0
        %v2793 = vpop.f32.mrb[0].mxu0
        %v2794 = vpop.f32.mrb[0].mxu0
        %2795 = vmatprep.mubr.bf16.mxu0 0
        %2796 = vmatmul.mubr.bf16.gmra.mrb[0].mxu0 %v2119
        %v2797 = vpop.f32.mrb[0].mxu0
        %v2798 = vadd.f32 0.0, %v2797
        %v2799 = vpop.f32.mrb[0].mxu0
        %v2800 = vpop.f32.mrb[0].mxu0
        %v2801 = vadd.f32 0.0, %v2800
        %v2802 = vpop.f32.mrb[0].mxu0
        %2803 = vmatprep.mubr.bf16.mxu0 0
        %2804 = vmatmul.mubr.bf16.gmra.mrb[0].mxu0 %v2122
        %v2805 = vpop.f32.mrb[0].mxu0
        %v2806 = vpop.f32.mrb[0].mxu0
        %v2807 = vpop.f32.mrb[0].mxu0
        %v2808 = vpop.f32.mrb[0].mxu0
        %2809 = vmatprep.mubr.bf16.mxu0 0
        %2810 = vmatmul.mubr.bf16.gmra.mrb[0].mxu0 %v2125
        %v2811 = vpop.f32.mrb[0].mxu0
        %v2812 = vadd.f32 0.0, %v2811
        %v2813 = vpop.f32.mrb[0].mxu0
        %v2814 = vpop.f32.mrb[0].mxu0
        %v2815 = vadd.f32 0.0, %v2814
        %v2816 = vpop.f32.mrb[0].mxu0
        %2817 = vmatprep.mubr.bf16.mxu0 0
        %2818 = vmatmul.mubr.bf16.gmra.mrb[0].mxu0 %v2674
        %v2819 = vpop.f32.mrb[0].mxu0
        %v2820 = vpop.f32.mrb[0].mxu0
        %v2821 = vpop.f32.mrb[0].mxu0
        %v2822 = vpop.f32.mrb[0].mxu0
        %2823 = vdwg.mxu0
        %v2824 = vadd.f32 %v2651, %v2714
        %v2825 = vadd.f32 %v2652, %v2717
        %v2826 = vadd.f32 %v2653, %v2728
        %v2827 = vadd.f32 %v2654, %v2731
        %v2828 = vadd.f32 %v2655, %v2742
        %v2829 = vadd.f32 %v2656, %v2745
        %v2830 = vadd.f32 %v2657, %v2756
        %v2831 = vadd.f32 %v2658, %v2759
        %v2832 = vadd.f32 %v2659, %v2770
        %v2833 = vadd.f32 %v2660, %v2773
        %v2834 = vadd.f32 %v2661, %v2784
        %v2835 = vadd.f32 %v2662, %v2787
        %v2836 = vadd.f32 %v2663, %v2798
        %v2837 = vadd.f32 %v2664, %v2801
        %v2838 = vadd.f32 %v2665, %v2812
        %v2839 = vadd.f32 %v2666, %v2815
        %v2841 = vshrl.u32 %v1358, 16
        %v2843 = vrot.slane %v2841, 4
        %v2844 = vshll.u32 %v1358, 16
        %v2846 = vrot.slane %v2844, 5
        %v2847 = vor.u32 %v2843, %v2846
        %v2848 = vrot.slane %v2847, 4
        %v2850 = vshll.u32 %v1359, 16
        %v2852 = vrot.slane %v2850, 5
        %v2853 = vsel %vm1367, %v2848, %v2852
        %v2854 = vshrl.u32 %v1359, 16
        %v2856 = vrot.slane %v2854, 4
        %v2857 = vor.u32 %v2856, %v2852
        %v2858 = vrot.slane %v2857, 4
        %v2860 = vshll.u32 %v1360, 16
        %v2862 = vrot.slane %v2860, 5
        %v2863 = vsel %vm1367, %v2858, %v2862
        %v2864 = vld [vmem:[%s3 + $0x10] sm:$0xf]
        %v2865 = vunpack.c.l.b16 %v2853
        %v2866 = vunpack.c.l.b16 %v2863
        %v2867 = vpack.c.b16 %v2866, %v2865
        %v2869 = vsel %vm1801, %v2867, 0
        %v2872 = vsel %vm1850, %v2864, 0
        %2874 = vmatprep.subr.bf16.mxu0 0
        %2875 = vmatpush1.bf16.msra.mxu0 %v2872
        %2876 = vmatprep.subr.bf16.mxu0 0
        %2877 = vmatpush1.bf16.msra.mxu0 0
        %2878 = vmatprep.subr.bf16.mxu0 0
        %2879 = vmatpush1.bf16.msra.mxu0 0
        %2880 = vmatprep.subr.bf16.mxu0 0
        %2881 = vmatpush1.bf16.msra.mxu0 0
        %2882 = vmatprep.subr.bf16.mxu0 0
        %2883 = vmatpush1.bf16.msra.mxu0 0
        %2884 = vmatprep.subr.bf16.mxu0 0
        %2885 = vmatpush1.bf16.msra.mxu0 0
        %2886 = vmatprep.subr.bf16.mxu0 0
        %2887 = vmatpush1.bf16.msra.mxu0 0
        %2888 = vmatprep.subr.bf16.mxu0 0
        %2889 = vmatpush1.bf16.msra.mxu0 0
        %2890 = vmatprep.subr.bf16.mxu0 0
        %2891 = vmatpush1.bf16.msra.mxu0 0
        %2892 = vmatprep.subr.bf16.mxu0 0
        %2893 = vmatpush1.bf16.msra.mxu0 0
        %2894 = vmatprep.subr.bf16.mxu0 0
        %2895 = vmatpush1.bf16.msra.mxu0 0
        %2896 = vmatprep.subr.bf16.mxu0 0
        %2897 = vmatpush1.bf16.msra.mxu0 0
        %2898 = vmatprep.subr.bf16.mxu0 0
        %2899 = vmatpush1.bf16.msra.mxu0 0
        %2900 = vmatprep.subr.bf16.mxu0 0
        %2901 = vmatpush1.bf16.msra.mxu0 0
        %2902 = vmatprep.subr.bf16.mxu0 0
        %2903 = vmatpush1.bf16.msra.mxu0 0
        %2904 = vmatprep.subr.bf16.mxu0 0
        %2905 = vmatpush1.bf16.msra.mxu0 0
        %2906 = vmatprep.mubr.bf16.mxu0 0
        %2907 = vmatmul.mubr.bf16.gmra.mrb[0].mxu0 %v1806
        %v2908 = vpop.f32.mrb[0].mxu0
        %v2909 = vadd.f32 0.0, %v2908
        %v2910 = vpop.f32.mrb[0].mxu0
        %v2911 = vpop.f32.mrb[0].mxu0
        %v2912 = vadd.f32 0.0, %v2911
        %v2913 = vpop.f32.mrb[0].mxu0
        %2914 = vmatprep.mubr.bf16.mxu0 0
        %2915 = vmatmul.mubr.bf16.gmra.mrb[0].mxu0 %v1809
        %v2916 = vpop.f32.mrb[0].mxu0
        %v2917 = vpop.f32.mrb[0].mxu0
        %v2918 = vpop.f32.mrb[0].mxu0
        %v2919 = vpop.f32.mrb[0].mxu0
        %2920 = vmatprep.mubr.bf16.mxu0 0
        %2921 = vmatmul.mubr.bf16.gmra.mrb[0].mxu0 %v1812
        %v2922 = vpop.f32.mrb[0].mxu0
        %v2923 = vadd.f32 0.0, %v2922
        %v2924 = vpop.f32.mrb[0].mxu0
        %v2925 = vpop.f32.mrb[0].mxu0
        %v2926 = vadd.f32 0.0, %v2925
        %v2927 = vpop.f32.mrb[0].mxu0
        %2928 = vmatprep.mubr.bf16.mxu0 0
        %2929 = vmatmul.mubr.bf16.gmra.mrb[0].mxu0 %v1815
        %v2930 = vpop.f32.mrb[0].mxu0
        %v2931 = vpop.f32.mrb[0].mxu0
        %v2932 = vpop.f32.mrb[0].mxu0
        %v2933 = vpop.f32.mrb[0].mxu0
        %2934 = vmatprep.mubr.bf16.mxu0 0
        %2935 = vmatmul.mubr.bf16.gmra.mrb[0].mxu0 %v1818
        %v2936 = vpop.f32.mrb[0].mxu0
        %v2937 = vadd.f32 0.0, %v2936
        %v2938 = vpop.f32.mrb[0].mxu0
        %v2939 = vpop.f32.mrb[0].mxu0
        %v2940 = vadd.f32 0.0, %v2939
        %v2941 = vpop.f32.mrb[0].mxu0
        %2942 = vmatprep.mubr.bf16.mxu0 0
        %2943 = vmatmul.mubr.bf16.gmra.mrb[0].mxu0 %v1821
        %v2944 = vpop.f32.mrb[0].mxu0
        %v2945 = vpop.f32.mrb[0].mxu0
        %v2946 = vpop.f32.mrb[0].mxu0
        %v2947 = vpop.f32.mrb[0].mxu0
        %2948 = vmatprep.mubr.bf16.mxu0 0
        %2949 = vmatmul.mubr.bf16.gmra.mrb[0].mxu0 %v1824
        %v2950 = vpop.f32.mrb[0].mxu0
        %v2951 = vadd.f32 0.0, %v2950
        %v2952 = vpop.f32.mrb[0].mxu0
        %v2953 = vpop.f32.mrb[0].mxu0
        %v2954 = vadd.f32 0.0, %v2953
        %v2955 = vpop.f32.mrb[0].mxu0
        %2956 = vmatprep.mubr.bf16.mxu0 0
        %2957 = vmatmul.mubr.bf16.gmra.mrb[0].mxu0 %v1827
        %v2958 = vpop.f32.mrb[0].mxu0
        %v2959 = vpop.f32.mrb[0].mxu0
        %v2960 = vpop.f32.mrb[0].mxu0
        %v2961 = vpop.f32.mrb[0].mxu0
        %2962 = vmatprep.mubr.bf16.mxu0 0
        %2963 = vmatmul.mubr.bf16.gmra.mrb[0].mxu0 %v1830
        %v2964 = vpop.f32.mrb[0].mxu0
        %v2965 = vadd.f32 0.0, %v2964
        %v2966 = vpop.f32.mrb[0].mxu0
        %v2967 = vpop.f32.mrb[0].mxu0
        %v2968 = vadd.f32 0.0, %v2967
        %v2969 = vpop.f32.mrb[0].mxu0
        %2970 = vmatprep.mubr.bf16.mxu0 0
        %2971 = vmatmul.mubr.bf16.gmra.mrb[0].mxu0 %v1833
        %v2972 = vpop.f32.mrb[0].mxu0
        %v2973 = vpop.f32.mrb[0].mxu0
        %v2974 = vpop.f32.mrb[0].mxu0
        %v2975 = vpop.f32.mrb[0].mxu0
        %2976 = vmatprep.mubr.bf16.mxu0 0
        %2977 = vmatmul.mubr.bf16.gmra.mrb[0].mxu0 %v1836
        %v2978 = vpop.f32.mrb[0].mxu0
        %v2979 = vadd.f32 0.0, %v2978
        %v2980 = vpop.f32.mrb[0].mxu0
        %v2981 = vpop.f32.mrb[0].mxu0
        %v2982 = vadd.f32 0.0, %v2981
        %v2983 = vpop.f32.mrb[0].mxu0
        %2984 = vmatprep.mubr.bf16.mxu0 0
        %2985 = vmatmul.mubr.bf16.gmra.mrb[0].mxu0 %v1839
        %v2986 = vpop.f32.mrb[0].mxu0
        %v2987 = vpop.f32.mrb[0].mxu0
        %v2988 = vpop.f32.mrb[0].mxu0
        %v2989 = vpop.f32.mrb[0].mxu0
        %2990 = vmatprep.mubr.bf16.mxu0 0
        %2991 = vmatmul.mubr.bf16.gmra.mrb[0].mxu0 %v1842
        %v2992 = vpop.f32.mrb[0].mxu0
        %v2993 = vadd.f32 0.0, %v2992
        %v2994 = vpop.f32.mrb[0].mxu0
        %v2995 = vpop.f32.mrb[0].mxu0
        %v2996 = vadd.f32 0.0, %v2995
        %v2997 = vpop.f32.mrb[0].mxu0
        %2998 = vmatprep.mubr.bf16.mxu0 0
        %2999 = vmatmul.mubr.bf16.gmra.mrb[0].mxu0 %v1845
        %v3000 = vpop.f32.mrb[0].mxu0
        %v3001 = vpop.f32.mrb[0].mxu0
        %v3002 = vpop.f32.mrb[0].mxu0
        %v3003 = vpop.f32.mrb[0].mxu0
        %3004 = vmatprep.mubr.bf16.mxu0 0
        %3005 = vmatmul.mubr.bf16.gmra.mrb[0].mxu0 %v1848
        %v3006 = vpop.f32.mrb[0].mxu0
        %v3007 = vadd.f32 0.0, %v3006
        %v3008 = vpop.f32.mrb[0].mxu0
        %v3009 = vpop.f32.mrb[0].mxu0
        %v3010 = vadd.f32 0.0, %v3009
        %v3011 = vpop.f32.mrb[0].mxu0
        %3012 = vmatprep.mubr.bf16.mxu0 0
        %3013 = vmatmul.mubr.bf16.gmra.mrb[0].mxu0 %v2869
        %v3014 = vpop.f32.mrb[0].mxu0
        %v3015 = vpop.f32.mrb[0].mxu0
        %v3016 = vpop.f32.mrb[0].mxu0
        %v3017 = vpop.f32.mrb[0].mxu0
        %3018 = vdwg.mxu0
        %v3019 = vadd.f32 %v2824, %v2909
        %v3020 = vadd.f32 %v2825, %v2912
        %v3021 = vadd.f32 %v2826, %v2923
        %v3022 = vadd.f32 %v2827, %v2926
        %v3023 = vadd.f32 %v2828, %v2937
        %v3024 = vadd.f32 %v2829, %v2940
        %v3025 = vadd.f32 %v2830, %v2951
        %v3026 = vadd.f32 %v2831, %v2954
        %v3027 = vadd.f32 %v2832, %v2965
        %v3028 = vadd.f32 %v2833, %v2968
        %v3029 = vadd.f32 %v2834, %v2979
        %v3030 = vadd.f32 %v2835, %v2982
        %v3031 = vadd.f32 %v2836, %v2993
        %v3032 = vadd.f32 %v2837, %v2996
        %v3033 = vadd.f32 %v2838, %v3007
        %v3034 = vadd.f32 %v2839, %v3010
        %v3036 = vrot.slane %v1358, 5
        %v3037 = vrot.slane %v3036, 4
        %v3038 = vrot.slane %v1359, 5
        %v3039 = vsel %vm2293, %v3037, %v3038
        %v3040 = vrot.slane %v3038, 4
        %v3041 = vrot.slane %v1360, 5
        %v3042 = vsel %vm2293, %v3040, %v3041
        %v3043 = vld [vmem:[%s3 + $0x14] sm:$0xf]
        %v3044 = vunpack.c.l.b16 %v3039
        %v3045 = vunpack.c.l.b16 %v3042
        %v3046 = vpack.c.b16 %v3045, %v3044
        %v3048 = vsel %vm1801, %v3046, 0
        %v3051 = vsel %vm1850, %v3043, 0
        %3053 = vmatprep.subr.bf16.mxu0 0
        %3054 = vmatpush1.bf16.msra.mxu0 %v3051
        %3055 = vmatprep.subr.bf16.mxu0 0
        %3056 = vmatpush1.bf16.msra.mxu0 0
        %3057 = vmatprep.subr.bf16.mxu0 0
        %3058 = vmatpush1.bf16.msra.mxu0 0
        %3059 = vmatprep.subr.bf16.mxu0 0
        %3060 = vmatpush1.bf16.msra.mxu0 0
        %3061 = vmatprep.subr.bf16.mxu0 0
        %3062 = vmatpush1.bf16.msra.mxu0 0
        %3063 = vmatprep.subr.bf16.mxu0 0
        %3064 = vmatpush1.bf16.msra.mxu0 0
        %3065 = vmatprep.subr.bf16.mxu0 0
        %3066 = vmatpush1.bf16.msra.mxu0 0
        %3067 = vmatprep.subr.bf16.mxu0 0
        %3068 = vmatpush1.bf16.msra.mxu0 0
        %3069 = vmatprep.subr.bf16.mxu0 0
        %3070 = vmatpush1.bf16.msra.mxu0 0
        %3071 = vmatprep.subr.bf16.mxu0 0
        %3072 = vmatpush1.bf16.msra.mxu0 0
        %3073 = vmatprep.subr.bf16.mxu0 0
        %3074 = vmatpush1.bf16.msra.mxu0 0
        %3075 = vmatprep.subr.bf16.mxu0 0
        %3076 = vmatpush1.bf16.msra.mxu0 0
        %3077 = vmatprep.subr.bf16.mxu0 0
        %3078 = vmatpush1.bf16.msra.mxu0 0
        %3079 = vmatprep.subr.bf16.mxu0 0
        %3080 = vmatpush1.bf16.msra.mxu0 0
        %3081 = vmatprep.subr.bf16.mxu0 0
        %3082 = vmatpush1.bf16.msra.mxu0 0
        %3083 = vmatprep.subr.bf16.mxu0 0
        %3084 = vmatpush1.bf16.msra.mxu0 0
        %3085 = vmatprep.mubr.bf16.mxu0 0
        %3086 = vmatmul.mubr.bf16.gmra.mrb[0].mxu0 %v2459
        %v3087 = vpop.f32.mrb[0].mxu0
        %v3088 = vadd.f32 0.0, %v3087
        %v3089 = vpop.f32.mrb[0].mxu0
        %v3090 = vpop.f32.mrb[0].mxu0
        %v3091 = vadd.f32 0.0, %v3090
        %v3092 = vpop.f32.mrb[0].mxu0
        %3093 = vmatprep.mubr.bf16.mxu0 0
        %3094 = vmatmul.mubr.bf16.gmra.mrb[0].mxu0 %v2462
        %v3095 = vpop.f32.mrb[0].mxu0
        %v3096 = vpop.f32.mrb[0].mxu0
        %v3097 = vpop.f32.mrb[0].mxu0
        %v3098 = vpop.f32.mrb[0].mxu0
        %3099 = vmatprep.mubr.bf16.mxu0 0
        %3100 = vmatmul.mubr.bf16.gmra.mrb[0].mxu0 %v2465
        %v3101 = vpop.f32.mrb[0].mxu0
        %v3102 = vadd.f32 0.0, %v3101
        %v3103 = vpop.f32.mrb[0].mxu0
        %v3104 = vpop.f32.mrb[0].mxu0
        %v3105 = vadd.f32 0.0, %v3104
        %v3106 = vpop.f32.mrb[0].mxu0
        %3107 = vmatprep.mubr.bf16.mxu0 0
        %3108 = vmatmul.mubr.bf16.gmra.mrb[0].mxu0 %v2468
        %v3109 = vpop.f32.mrb[0].mxu0
        %v3110 = vpop.f32.mrb[0].mxu0
        %v3111 = vpop.f32.mrb[0].mxu0
        %v3112 = vpop.f32.mrb[0].mxu0
        %3113 = vmatprep.mubr.bf16.mxu0 0
        %3114 = vmatmul.mubr.bf16.gmra.mrb[0].mxu0 %v2471
        %v3115 = vpop.f32.mrb[0].mxu0
        %v3116 = vadd.f32 0.0, %v3115
        %v3117 = vpop.f32.mrb[0].mxu0
        %v3118 = vpop.f32.mrb[0].mxu0
        %v3119 = vadd.f32 0.0, %v3118
        %v3120 = vpop.f32.mrb[0].mxu0
        %3121 = vmatprep.mubr.bf16.mxu0 0
        %3122 = vmatmul.mubr.bf16.gmra.mrb[0].mxu0 %v2474
        %v3123 = vpop.f32.mrb[0].mxu0
        %v3124 = vpop.f32.mrb[0].mxu0
        %v3125 = vpop.f32.mrb[0].mxu0
        %v3126 = vpop.f32.mrb[0].mxu0
        %3127 = vmatprep.mubr.bf16.mxu0 0
        %3128 = vmatmul.mubr.bf16.gmra.mrb[0].mxu0 %v2477
        %v3129 = vpop.f32.mrb[0].mxu0
        %v3130 = vadd.f32 0.0, %v3129
        %v3131 = vpop.f32.mrb[0].mxu0
        %v3132 = vpop.f32.mrb[0].mxu0
        %v3133 = vadd.f32 0.0, %v3132
        %v3134 = vpop.f32.mrb[0].mxu0
        %3135 = vmatprep.mubr.bf16.mxu0 0
        %3136 = vmatmul.mubr.bf16.gmra.mrb[0].mxu0 %v2480
        %v3137 = vpop.f32.mrb[0].mxu0
        %v3138 = vpop.f32.mrb[0].mxu0
        %v3139 = vpop.f32.mrb[0].mxu0
        %v3140 = vpop.f32.mrb[0].mxu0
        %3141 = vmatprep.mubr.bf16.mxu0 0
        %3142 = vmatmul.mubr.bf16.gmra.mrb[0].mxu0 %v2483
        %v3143 = vpop.f32.mrb[0].mxu0
        %v3144 = vadd.f32 0.0, %v3143
        %v3145 = vpop.f32.mrb[0].mxu0
        %v3146 = vpop.f32.mrb[0].mxu0
        %v3147 = vadd.f32 0.0, %v3146
        %v3148 = vpop.f32.mrb[0].mxu0
        %3149 = vmatprep.mubr.bf16.mxu0 0
        %3150 = vmatmul.mubr.bf16.gmra.mrb[0].mxu0 %v2486
        %v3151 = vpop.f32.mrb[0].mxu0
        %v3152 = vpop.f32.mrb[0].mxu0
        %v3153 = vpop.f32.mrb[0].mxu0
        %v3154 = vpop.f32.mrb[0].mxu0
        %3155 = vmatprep.mubr.bf16.mxu0 0
        %3156 = vmatmul.mubr.bf16.gmra.mrb[0].mxu0 %v2489
        %v3157 = vpop.f32.mrb[0].mxu0
        %v3158 = vadd.f32 0.0, %v3157
        %v3159 = vpop.f32.mrb[0].mxu0
        %v3160 = vpop.f32.mrb[0].mxu0
        %v3161 = vadd.f32 0.0, %v3160
        %v3162 = vpop.f32.mrb[0].mxu0
        %3163 = vmatprep.mubr.bf16.mxu0 0
        %3164 = vmatmul.mubr.bf16.gmra.mrb[0].mxu0 %v2492
        %v3165 = vpop.f32.mrb[0].mxu0
        %v3166 = vpop.f32.mrb[0].mxu0
        %v3167 = vpop.f32.mrb[0].mxu0
        %v3168 = vpop.f32.mrb[0].mxu0
        %3169 = vmatprep.mubr.bf16.mxu0 0
        %3170 = vmatmul.mubr.bf16.gmra.mrb[0].mxu0 %v2495
        %v3171 = vpop.f32.mrb[0].mxu0
        %v3172 = vadd.f32 0.0, %v3171
        %v3173 = vpop.f32.mrb[0].mxu0
        %v3174 = vpop.f32.mrb[0].mxu0
        %v3175 = vadd.f32 0.0, %v3174
        %v3176 = vpop.f32.mrb[0].mxu0
        %3177 = vmatprep.mubr.bf16.mxu0 0
        %3178 = vmatmul.mubr.bf16.gmra.mrb[0].mxu0 %v2498
        %v3179 = vpop.f32.mrb[0].mxu0
        %v3180 = vpop.f32.mrb[0].mxu0
        %v3181 = vpop.f32.mrb[0].mxu0
        %v3182 = vpop.f32.mrb[0].mxu0
        %3183 = vmatprep.mubr.bf16.mxu0 0
        %3184 = vmatmul.mubr.bf16.gmra.mrb[0].mxu0 %v2501
        %v3185 = vpop.f32.mrb[0].mxu0
        %v3186 = vadd.f32 0.0, %v3185
        %v3187 = vpop.f32.mrb[0].mxu0
        %v3188 = vpop.f32.mrb[0].mxu0
        %v3189 = vadd.f32 0.0, %v3188
        %v3190 = vpop.f32.mrb[0].mxu0
        %3191 = vmatprep.mubr.bf16.mxu0 0
        %3192 = vmatmul.mubr.bf16.gmra.mrb[0].mxu0 %v3048
        %v3193 = vpop.f32.mrb[0].mxu0
        %v3194 = vpop.f32.mrb[0].mxu0
        %v3195 = vpop.f32.mrb[0].mxu0
        %v3196 = vpop.f32.mrb[0].mxu0
        %3197 = vdwg.mxu0
        %v3198 = vadd.f32 %v3019, %v3088
        %v3199 = vadd.f32 %v3020, %v3091
        %v3200 = vadd.f32 %v3021, %v3102
        %v3201 = vadd.f32 %v3022, %v3105
        %v3202 = vadd.f32 %v3023, %v3116
        %v3203 = vadd.f32 %v3024, %v3119
        %v3204 = vadd.f32 %v3025, %v3130
        %v3205 = vadd.f32 %v3026, %v3133
        %v3206 = vadd.f32 %v3027, %v3144
        %v3207 = vadd.f32 %v3028, %v3147
        %v3208 = vadd.f32 %v3029, %v3158
        %v3209 = vadd.f32 %v3030, %v3161
        %v3210 = vadd.f32 %v3031, %v3172
        %v3211 = vadd.f32 %v3032, %v3175
        %v3212 = vadd.f32 %v3033, %v3186
        %v3213 = vadd.f32 %v3034, %v3189
        %v3214 = vld [vmem:[%s3 + $0x18] sm:$0xf]
        %v3217 = vunpack.c.l.b16 %v1361
        %v3218 = vunpack.c.l.b16 %v1362
        %v3219 = vpack.c.b16 %v3218, %v3217
        %v3221 = vsel %vm1801, %v3219, 0
        %v3224 = vsel %vm1850, %v3214, 0
        %3226 = vmatprep.subr.bf16.mxu0 0
        %3227 = vmatpush1.bf16.msra.mxu0 %v3224
        %3228 = vmatprep.subr.bf16.mxu0 0
        %3229 = vmatpush1.bf16.msra.mxu0 0
        %3230 = vmatprep.subr.bf16.mxu0 0
        %3231 = vmatpush1.bf16.msra.mxu0 0
        %3232 = vmatprep.subr.bf16.mxu0 0
        %3233 = vmatpush1.bf16.msra.mxu0 0
        %3234 = vmatprep.subr.bf16.mxu0 0
        %3235 = vmatpush1.bf16.msra.mxu0 0
        %3236 = vmatprep.subr.bf16.mxu0 0
        %3237 = vmatpush1.bf16.msra.mxu0 0
        %3238 = vmatprep.subr.bf16.mxu0 0
        %3239 = vmatpush1.bf16.msra.mxu0 0
        %3240 = vmatprep.subr.bf16.mxu0 0
        %3241 = vmatpush1.bf16.msra.mxu0 0
        %3242 = vmatprep.subr.bf16.mxu0 0
        %3243 = vmatpush1.bf16.msra.mxu0 0
        %3244 = vmatprep.subr.bf16.mxu0 0
        %3245 = vmatpush1.bf16.msra.mxu0 0
        %3246 = vmatprep.subr.bf16.mxu0 0
        %3247 = vmatpush1.bf16.msra.mxu0 0
        %3248 = vmatprep.subr.bf16.mxu0 0
        %3249 = vmatpush1.bf16.msra.mxu0 0
        %3250 = vmatprep.subr.bf16.mxu0 0
        %3251 = vmatpush1.bf16.msra.mxu0 0
        %3252 = vmatprep.subr.bf16.mxu0 0
        %3253 = vmatpush1.bf16.msra.mxu0 0
        %3254 = vmatprep.subr.bf16.mxu0 0
        %3255 = vmatpush1.bf16.msra.mxu0 0
        %3256 = vmatprep.subr.bf16.mxu0 0
        %3257 = vmatpush1.bf16.msra.mxu0 0
        %3258 = vmatprep.mubr.bf16.mxu0 0
        %3259 = vmatmul.mubr.bf16.gmra.mrb[0].mxu0 %v2086
        %v3260 = vpop.f32.mrb[0].mxu0
        %v3261 = vadd.f32 0.0, %v3260
        %v3262 = vpop.f32.mrb[0].mxu0
        %v3263 = vpop.f32.mrb[0].mxu0
        %v3264 = vadd.f32 0.0, %v3263
        %v3265 = vpop.f32.mrb[0].mxu0
        %3266 = vmatprep.mubr.bf16.mxu0 0
        %3267 = vmatmul.mubr.bf16.gmra.mrb[0].mxu0 %v2089
        %v3268 = vpop.f32.mrb[0].mxu0
        %v3269 = vpop.f32.mrb[0].mxu0
        %v3270 = vpop.f32.mrb[0].mxu0
        %v3271 = vpop.f32.mrb[0].mxu0
        %3272 = vmatprep.mubr.bf16.mxu0 0
        %3273 = vmatmul.mubr.bf16.gmra.mrb[0].mxu0 %v2092
        %v3274 = vpop.f32.mrb[0].mxu0
        %v3275 = vadd.f32 0.0, %v3274
        %v3276 = vpop.f32.mrb[0].mxu0
        %v3277 = vpop.f32.mrb[0].mxu0
        %v3278 = vadd.f32 0.0, %v3277
        %v3279 = vpop.f32.mrb[0].mxu0
        %3280 = vmatprep.mubr.bf16.mxu0 0
        %3281 = vmatmul.mubr.bf16.gmra.mrb[0].mxu0 %v2095
        %v3282 = vpop.f32.mrb[0].mxu0
        %v3283 = vpop.f32.mrb[0].mxu0
        %v3284 = vpop.f32.mrb[0].mxu0
        %v3285 = vpop.f32.mrb[0].mxu0
        %3286 = vmatprep.mubr.bf16.mxu0 0
        %3287 = vmatmul.mubr.bf16.gmra.mrb[0].mxu0 %v2098
        %v3288 = vpop.f32.mrb[0].mxu0
        %v3289 = vadd.f32 0.0, %v3288
        %v3290 = vpop.f32.mrb[0].mxu0
        %v3291 = vpop.f32.mrb[0].mxu0
        %v3292 = vadd.f32 0.0, %v3291
        %v3293 = vpop.f32.mrb[0].mxu0
        %3294 = vmatprep.mubr.bf16.mxu0 0
        %3295 = vmatmul.mubr.bf16.gmra.mrb[0].mxu0 %v2101
        %v3296 = vpop.f32.mrb[0].mxu0
        %v3297 = vpop.f32.mrb[0].mxu0
        %v3298 = vpop.f32.mrb[0].mxu0
        %v3299 = vpop.f32.mrb[0].mxu0
        %3300 = vmatprep.mubr.bf16.mxu0 0
        %3301 = vmatmul.mubr.bf16.gmra.mrb[0].mxu0 %v2104
        %v3302 = vpop.f32.mrb[0].mxu0
        %v3303 = vadd.f32 0.0, %v3302
        %v3304 = vpop.f32.mrb[0].mxu0
        %v3305 = vpop.f32.mrb[0].mxu0
        %v3306 = vadd.f32 0.0, %v3305
        %v3307 = vpop.f32.mrb[0].mxu0
        %3308 = vmatprep.mubr.bf16.mxu0 0
        %3309 = vmatmul.mubr.bf16.gmra.mrb[0].mxu0 %v2107
        %v3310 = vpop.f32.mrb[0].mxu0
        %v3311 = vpop.f32.mrb[0].mxu0
        %v3312 = vpop.f32.mrb[0].mxu0
        %v3313 = vpop.f32.mrb[0].mxu0
        %3314 = vmatprep.mubr.bf16.mxu0 0
        %3315 = vmatmul.mubr.bf16.gmra.mrb[0].mxu0 %v2110
        %v3316 = vpop.f32.mrb[0].mxu0
        %v3317 = vadd.f32 0.0, %v3316
        %v3318 = vpop.f32.mrb[0].mxu0
        %v3319 = vpop.f32.mrb[0].mxu0
        %v3320 = vadd.f32 0.0, %v3319
        %v3321 = vpop.f32.mrb[0].mxu0
        %3322 = vmatprep.mubr.bf16.mxu0 0
        %3323 = vmatmul.mubr.bf16.gmra.mrb[0].mxu0 %v2113
        %v3324 = vpop.f32.mrb[0].mxu0
        %v3325 = vpop.f32.mrb[0].mxu0
        %v3326 = vpop.f32.mrb[0].mxu0
        %v3327 = vpop.f32.mrb[0].mxu0
        %3328 = vmatprep.mubr.bf16.mxu0 0
        %3329 = vmatmul.mubr.bf16.gmra.mrb[0].mxu0 %v2116
        %v3330 = vpop.f32.mrb[0].mxu0
        %v3331 = vadd.f32 0.0, %v3330
        %v3332 = vpop.f32.mrb[0].mxu0
        %v3333 = vpop.f32.mrb[0].mxu0
        %v3334 = vadd.f32 0.0, %v3333
        %v3335 = vpop.f32.mrb[0].mxu0
        %3336 = vmatprep.mubr.bf16.mxu0 0
        %3337 = vmatmul.mubr.bf16.gmra.mrb[0].mxu0 %v2119
        %v3338 = vpop.f32.mrb[0].mxu0
        %v3339 = vpop.f32.mrb[0].mxu0
        %v3340 = vpop.f32.mrb[0].mxu0
        %v3341 = vpop.f32.mrb[0].mxu0
        %3342 = vmatprep.mubr.bf16.mxu0 0
        %3343 = vmatmul.mubr.bf16.gmra.mrb[0].mxu0 %v2122
        %v3344 = vpop.f32.mrb[0].mxu0
        %v3345 = vadd.f32 0.0, %v3344
        %v3346 = vpop.f32.mrb[0].mxu0
        %v3347 = vpop.f32.mrb[0].mxu0
        %v3348 = vadd.f32 0.0, %v3347
        %v3349 = vpop.f32.mrb[0].mxu0
        %3350 = vmatprep.mubr.bf16.mxu0 0
        %3351 = vmatmul.mubr.bf16.gmra.mrb[0].mxu0 %v2125
        %v3352 = vpop.f32.mrb[0].mxu0
        %v3353 = vpop.f32.mrb[0].mxu0
        %v3354 = vpop.f32.mrb[0].mxu0
        %v3355 = vpop.f32.mrb[0].mxu0
        %3356 = vmatprep.mubr.bf16.mxu0 0
        %3357 = vmatmul.mubr.bf16.gmra.mrb[0].mxu0 %v2674
        %v3358 = vpop.f32.mrb[0].mxu0
        %v3359 = vadd.f32 0.0, %v3358
        %v3360 = vpop.f32.mrb[0].mxu0
        %v3361 = vpop.f32.mrb[0].mxu0
        %v3362 = vadd.f32 0.0, %v3361
        %v3363 = vpop.f32.mrb[0].mxu0
        %3364 = vmatprep.mubr.bf16.mxu0 0
        %3365 = vmatmul.mubr.bf16.gmra.mrb[0].mxu0 %v3221
        %v3366 = vpop.f32.mrb[0].mxu0
        %v3367 = vpop.f32.mrb[0].mxu0
        %v3368 = vpop.f32.mrb[0].mxu0
        %v3369 = vpop.f32.mrb[0].mxu0
        %3370 = vdwg.mxu0
        %v3371 = vadd.f32 %v3198, %v3261
        %v3372 = vadd.f32 %v3199, %v3264
        %v3373 = vadd.f32 %v3200, %v3275
        %v3374 = vadd.f32 %v3201, %v3278
        %v3375 = vadd.f32 %v3202, %v3289
        %v3376 = vadd.f32 %v3203, %v3292
        %v3377 = vadd.f32 %v3204, %v3303
        %v3378 = vadd.f32 %v3205, %v3306
        %v3379 = vadd.f32 %v3206, %v3317
        %v3380 = vadd.f32 %v3207, %v3320
        %v3381 = vadd.f32 %v3208, %v3331
        %v3382 = vadd.f32 %v3209, %v3334
        %v3383 = vadd.f32 %v3210, %v3345
        %v3384 = vadd.f32 %v3211, %v3348
        %v3385 = vadd.f32 %v3212, %v3359
        %v3386 = vadd.f32 %v3213, %v3362
        %v3388 = vshrl.u32 %v1361, 16
        %v3390 = vrot.slane %v3388, 4
        %v3391 = vshll.u32 %v1361, 16
        %v3393 = vrot.slane %v3391, 5
        %v3394 = vor.u32 %v3390, %v3393
        %v3395 = vrot.slane %v3394, 4
        %v3397 = vshll.u32 %v1362, 16
        %v3399 = vrot.slane %v3397, 5
        %v3400 = vsel %vm1367, %v3395, %v3399
        %v3401 = vshrl.u32 %v1362, 16
        %v3403 = vrot.slane %v3401, 4
        %v3404 = vor.u32 %v3403, %v3399
        %v3405 = vrot.slane %v3404, 4
        %v3407 = vshll.u32 %v1363, 16
        %v3409 = vrot.slane %v3407, 5
        %v3410 = vsel %vm1367, %v3405, %v3409
        %v3411 = vld [vmem:[%s3 + $0x1c] sm:$0xf]
        %v3412 = vunpack.c.l.b16 %v3400
        %v3413 = vunpack.c.l.b16 %v3410
        %v3414 = vpack.c.b16 %v3413, %v3412
        %v3416 = vsel %vm1801, %v3414, 0
        %v3419 = vsel %vm1850, %v3411, 0
        %3421 = vmatprep.subr.bf16.mxu0 0
        %3422 = vmatpush1.bf16.msra.mxu0 %v3419
        %3423 = vmatprep.subr.bf16.mxu0 0
        %3424 = vmatpush1.bf16.msra.mxu0 0
        %3425 = vmatprep.subr.bf16.mxu0 0
        %3426 = vmatpush1.bf16.msra.mxu0 0
        %3427 = vmatprep.subr.bf16.mxu0 0
        %3428 = vmatpush1.bf16.msra.mxu0 0
        %3429 = vmatprep.subr.bf16.mxu0 0
        %3430 = vmatpush1.bf16.msra.mxu0 0
        %3431 = vmatprep.subr.bf16.mxu0 0
        %3432 = vmatpush1.bf16.msra.mxu0 0
        %3433 = vmatprep.subr.bf16.mxu0 0
        %3434 = vmatpush1.bf16.msra.mxu0 0
        %3435 = vmatprep.subr.bf16.mxu0 0
        %3436 = vmatpush1.bf16.msra.mxu0 0
        %3437 = vmatprep.subr.bf16.mxu0 0
        %3438 = vmatpush1.bf16.msra.mxu0 0
        %3439 = vmatprep.subr.bf16.mxu0 0
        %3440 = vmatpush1.bf16.msra.mxu0 0
        %3441 = vmatprep.subr.bf16.mxu0 0
        %3442 = vmatpush1.bf16.msra.mxu0 0
        %3443 = vmatprep.subr.bf16.mxu0 0
        %3444 = vmatpush1.bf16.msra.mxu0 0
        %3445 = vmatprep.subr.bf16.mxu0 0
        %3446 = vmatpush1.bf16.msra.mxu0 0
        %3447 = vmatprep.subr.bf16.mxu0 0
        %3448 = vmatpush1.bf16.msra.mxu0 0
        %3449 = vmatprep.subr.bf16.mxu0 0
        %3450 = vmatpush1.bf16.msra.mxu0 0
        %3451 = vmatprep.subr.bf16.mxu0 0
        %3452 = vmatpush1.bf16.msra.mxu0 0
        %3453 = vmatprep.mubr.bf16.mxu0 0
        %3454 = vmatmul.mubr.bf16.gmra.mrb[0].mxu0 %v1809
        %v3455 = vpop.f32.mrb[0].mxu0
        %v3456 = vadd.f32 0.0, %v3455
        %v3457 = vpop.f32.mrb[0].mxu0
        %v3458 = vpop.f32.mrb[0].mxu0
        %v3459 = vadd.f32 0.0, %v3458
        %v3460 = vpop.f32.mrb[0].mxu0
        %3461 = vmatprep.mubr.bf16.mxu0 0
        %3462 = vmatmul.mubr.bf16.gmra.mrb[0].mxu0 %v1812
        %v3463 = vpop.f32.mrb[0].mxu0
        %v3464 = vpop.f32.mrb[0].mxu0
        %v3465 = vpop.f32.mrb[0].mxu0
        %v3466 = vpop.f32.mrb[0].mxu0
        %3467 = vmatprep.mubr.bf16.mxu0 0
        %3468 = vmatmul.mubr.bf16.gmra.mrb[0].mxu0 %v1815
        %v3469 = vpop.f32.mrb[0].mxu0
        %v3470 = vadd.f32 0.0, %v3469
        %v3471 = vpop.f32.mrb[0].mxu0
        %v3472 = vpop.f32.mrb[0].mxu0
        %v3473 = vadd.f32 0.0, %v3472
        %v3474 = vpop.f32.mrb[0].mxu0
        %3475 = vmatprep.mubr.bf16.mxu0 0
        %3476 = vmatmul.mubr.bf16.gmra.mrb[0].mxu0 %v1818
        %v3477 = vpop.f32.mrb[0].mxu0
        %v3478 = vpop.f32.mrb[0].mxu0
        %v3479 = vpop.f32.mrb[0].mxu0
        %v3480 = vpop.f32.mrb[0].mxu0
        %3481 = vmatprep.mubr.bf16.mxu0 0
        %3482 = vmatmul.mubr.bf16.gmra.mrb[0].mxu0 %v1821
        %v3483 = vpop.f32.mrb[0].mxu0
        %v3484 = vadd.f32 0.0, %v3483
        %v3485 = vpop.f32.mrb[0].mxu0
        %v3486 = vpop.f32.mrb[0].mxu0
        %v3487 = vadd.f32 0.0, %v3486
        %v3488 = vpop.f32.mrb[0].mxu0
        %3489 = vmatprep.mubr.bf16.mxu0 0
        %3490 = vmatmul.mubr.bf16.gmra.mrb[0].mxu0 %v1824
        %v3491 = vpop.f32.mrb[0].mxu0
        %v3492 = vpop.f32.mrb[0].mxu0
        %v3493 = vpop.f32.mrb[0].mxu0
        %v3494 = vpop.f32.mrb[0].mxu0
        %3495 = vmatprep.mubr.bf16.mxu0 0
        %3496 = vmatmul.mubr.bf16.gmra.mrb[0].mxu0 %v1827
        %v3497 = vpop.f32.mrb[0].mxu0
        %v3498 = vadd.f32 0.0, %v3497
        %v3499 = vpop.f32.mrb[0].mxu0
        %v3500 = vpop.f32.mrb[0].mxu0
        %v3501 = vadd.f32 0.0, %v3500
        %v3502 = vpop.f32.mrb[0].mxu0
        %3503 = vmatprep.mubr.bf16.mxu0 0
        %3504 = vmatmul.mubr.bf16.gmra.mrb[0].mxu0 %v1830
        %v3505 = vpop.f32.mrb[0].mxu0
        %v3506 = vpop.f32.mrb[0].mxu0
        %v3507 = vpop.f32.mrb[0].mxu0
        %v3508 = vpop.f32.mrb[0].mxu0
        %3509 = vmatprep.mubr.bf16.mxu0 0
        %3510 = vmatmul.mubr.bf16.gmra.mrb[0].mxu0 %v1833
        %v3511 = vpop.f32.mrb[0].mxu0
        %v3512 = vadd.f32 0.0, %v3511
        %v3513 = vpop.f32.mrb[0].mxu0
        %v3514 = vpop.f32.mrb[0].mxu0
        %v3515 = vadd.f32 0.0, %v3514
        %v3516 = vpop.f32.mrb[0].mxu0
        %3517 = vmatprep.mubr.bf16.mxu0 0
        %3518 = vmatmul.mubr.bf16.gmra.mrb[0].mxu0 %v1836
        %v3519 = vpop.f32.mrb[0].mxu0
        %v3520 = vpop.f32.mrb[0].mxu0
        %v3521 = vpop.f32.mrb[0].mxu0
        %v3522 = vpop.f32.mrb[0].mxu0
        %3523 = vmatprep.mubr.bf16.mxu0 0
        %3524 = vmatmul.mubr.bf16.gmra.mrb[0].mxu0 %v1839
        %v3525 = vpop.f32.mrb[0].mxu0
        %v3526 = vadd.f32 0.0, %v3525
        %v3527 = vpop.f32.mrb[0].mxu0
        %v3528 = vpop.f32.mrb[0].mxu0
        %v3529 = vadd.f32 0.0, %v3528
        %v3530 = vpop.f32.mrb[0].mxu0
        %3531 = vmatprep.mubr.bf16.mxu0 0
        %3532 = vmatmul.mubr.bf16.gmra.mrb[0].mxu0 %v1842
        %v3533 = vpop.f32.mrb[0].mxu0
        %v3534 = vpop.f32.mrb[0].mxu0
        %v3535 = vpop.f32.mrb[0].mxu0
        %v3536 = vpop.f32.mrb[0].mxu0
        %3537 = vmatprep.mubr.bf16.mxu0 0
        %3538 = vmatmul.mubr.bf16.gmra.mrb[0].mxu0 %v1845
        %v3539 = vpop.f32.mrb[0].mxu0
        %v3540 = vadd.f32 0.0, %v3539
        %v3541 = vpop.f32.mrb[0].mxu0
        %v3542 = vpop.f32.mrb[0].mxu0
        %v3543 = vadd.f32 0.0, %v3542
        %v3544 = vpop.f32.mrb[0].mxu0
        %3545 = vmatprep.mubr.bf16.mxu0 0
        %3546 = vmatmul.mubr.bf16.gmra.mrb[0].mxu0 %v1848
        %v3547 = vpop.f32.mrb[0].mxu0
        %v3548 = vpop.f32.mrb[0].mxu0
        %v3549 = vpop.f32.mrb[0].mxu0
        %v3550 = vpop.f32.mrb[0].mxu0
        %3551 = vmatprep.mubr.bf16.mxu0 0
        %3552 = vmatmul.mubr.bf16.gmra.mrb[0].mxu0 %v2869
        %v3553 = vpop.f32.mrb[0].mxu0
        %v3554 = vadd.f32 0.0, %v3553
        %v3555 = vpop.f32.mrb[0].mxu0
        %v3556 = vpop.f32.mrb[0].mxu0
        %v3557 = vadd.f32 0.0, %v3556
        %v3558 = vpop.f32.mrb[0].mxu0
        %3559 = vmatprep.mubr.bf16.mxu0 0
        %3560 = vmatmul.mubr.bf16.gmra.mrb[0].mxu0 %v3416
        %v3561 = vpop.f32.mrb[0].mxu0
        %v3562 = vpop.f32.mrb[0].mxu0
        %v3563 = vpop.f32.mrb[0].mxu0
        %v3564 = vpop.f32.mrb[0].mxu0
        %3565 = vdwg.mxu0
        %v3566 = vadd.f32 %v3371, %v3456
        %v3567 = vadd.f32 %v3372, %v3459
        %v3568 = vadd.f32 %v3373, %v3470
        %v3569 = vadd.f32 %v3374, %v3473
        %v3570 = vadd.f32 %v3375, %v3484
        %v3571 = vadd.f32 %v3376, %v3487
        %v3572 = vadd.f32 %v3377, %v3498
        %v3573 = vadd.f32 %v3378, %v3501
        %v3574 = vadd.f32 %v3379, %v3512
        %v3575 = vadd.f32 %v3380, %v3515
        %v3576 = vadd.f32 %v3381, %v3526
        %v3577 = vadd.f32 %v3382, %v3529
        %v3578 = vadd.f32 %v3383, %v3540
        %v3579 = vadd.f32 %v3384, %v3543
        %v3580 = vadd.f32 %v3385, %v3554
        %v3581 = vadd.f32 %v3386, %v3557
        %v3583 = vrot.slane %v1361, 5
        %v3584 = vrot.slane %v3583, 4
        %v3585 = vrot.slane %v1362, 5
        %v3586 = vsel %vm2293, %v3584, %v3585
        %v3587 = vrot.slane %v3585, 4
        %v3588 = vrot.slane %v1363, 5
        %v3589 = vsel %vm2293, %v3587, %v3588
        %v3590 = vld [vmem:[%s3 + $0x20] sm:$0xf]
        %v3591 = vunpack.c.l.b16 %v3586
        %v3592 = vunpack.c.l.b16 %v3589
        %v3593 = vpack.c.b16 %v3592, %v3591
        %v3595 = vsel %vm1801, %v3593, 0
        %v3598 = vsel %vm1850, %v3590, 0
        %3600 = vmatprep.subr.bf16.mxu0 0
        %3601 = vmatpush1.bf16.msra.mxu0 %v3598
        %3602 = vmatprep.subr.bf16.mxu0 0
        %3603 = vmatpush1.bf16.msra.mxu0 0
        %3604 = vmatprep.subr.bf16.mxu0 0
        %3605 = vmatpush1.bf16.msra.mxu0 0
        %3606 = vmatprep.subr.bf16.mxu0 0
        %3607 = vmatpush1.bf16.msra.mxu0 0
        %3608 = vmatprep.subr.bf16.mxu0 0
        %3609 = vmatpush1.bf16.msra.mxu0 0
        %3610 = vmatprep.subr.bf16.mxu0 0
        %3611 = vmatpush1.bf16.msra.mxu0 0
        %3612 = vmatprep.subr.bf16.mxu0 0
        %3613 = vmatpush1.bf16.msra.mxu0 0
        %3614 = vmatprep.subr.bf16.mxu0 0
        %3615 = vmatpush1.bf16.msra.mxu0 0
        %3616 = vmatprep.subr.bf16.mxu0 0
        %3617 = vmatpush1.bf16.msra.mxu0 0
        %3618 = vmatprep.subr.bf16.mxu0 0
        %3619 = vmatpush1.bf16.msra.mxu0 0
        %3620 = vmatprep.subr.bf16.mxu0 0
        %3621 = vmatpush1.bf16.msra.mxu0 0
        %3622 = vmatprep.subr.bf16.mxu0 0
        %3623 = vmatpush1.bf16.msra.mxu0 0
        %3624 = vmatprep.subr.bf16.mxu0 0
        %3625 = vmatpush1.bf16.msra.mxu0 0
        %3626 = vmatprep.subr.bf16.mxu0 0
        %3627 = vmatpush1.bf16.msra.mxu0 0
        %3628 = vmatprep.subr.bf16.mxu0 0
        %3629 = vmatpush1.bf16.msra.mxu0 0
        %3630 = vmatprep.subr.bf16.mxu0 0
        %3631 = vmatpush1.bf16.msra.mxu0 0
        %3632 = vmatprep.mubr.bf16.mxu0 0
        %3633 = vmatmul.mubr.bf16.gmra.mrb[0].mxu0 %v2462
        %v3634 = vpop.f32.mrb[0].mxu0
        %v3635 = vadd.f32 0.0, %v3634
        %v3636 = vpop.f32.mrb[0].mxu0
        %v3637 = vpop.f32.mrb[0].mxu0
        %v3638 = vadd.f32 0.0, %v3637
        %v3639 = vpop.f32.mrb[0].mxu0
        %3640 = vmatprep.mubr.bf16.mxu0 0
        %3641 = vmatmul.mubr.bf16.gmra.mrb[0].mxu0 %v2465
        %v3642 = vpop.f32.mrb[0].mxu0
        %v3643 = vpop.f32.mrb[0].mxu0
        %v3644 = vpop.f32.mrb[0].mxu0
        %v3645 = vpop.f32.mrb[0].mxu0
        %3646 = vmatprep.mubr.bf16.mxu0 0
        %3647 = vmatmul.mubr.bf16.gmra.mrb[0].mxu0 %v2468
        %v3648 = vpop.f32.mrb[0].mxu0
        %v3649 = vadd.f32 0.0, %v3648
        %v3650 = vpop.f32.mrb[0].mxu0
        %v3651 = vpop.f32.mrb[0].mxu0
        %v3652 = vadd.f32 0.0, %v3651
        %v3653 = vpop.f32.mrb[0].mxu0
        %3654 = vmatprep.mubr.bf16.mxu0 0
        %3655 = vmatmul.mubr.bf16.gmra.mrb[0].mxu0 %v2471
        %v3656 = vpop.f32.mrb[0].mxu0
        %v3657 = vpop.f32.mrb[0].mxu0
        %v3658 = vpop.f32.mrb[0].mxu0
        %v3659 = vpop.f32.mrb[0].mxu0
        %3660 = vmatprep.mubr.bf16.mxu0 0
        %3661 = vmatmul.mubr.bf16.gmra.mrb[0].mxu0 %v2474
        %v3662 = vpop.f32.mrb[0].mxu0
        %v3663 = vadd.f32 0.0, %v3662
        %v3664 = vpop.f32.mrb[0].mxu0
        %v3665 = vpop.f32.mrb[0].mxu0
        %v3666 = vadd.f32 0.0, %v3665
        %v3667 = vpop.f32.mrb[0].mxu0
        %3668 = vmatprep.mubr.bf16.mxu0 0
        %3669 = vmatmul.mubr.bf16.gmra.mrb[0].mxu0 %v2477
        %v3670 = vpop.f32.mrb[0].mxu0
        %v3671 = vpop.f32.mrb[0].mxu0
        %v3672 = vpop.f32.mrb[0].mxu0
        %v3673 = vpop.f32.mrb[0].mxu0
        %3674 = vmatprep.mubr.bf16.mxu0 0
        %3675 = vmatmul.mubr.bf16.gmra.mrb[0].mxu0 %v2480
        %v3676 = vpop.f32.mrb[0].mxu0
        %v3677 = vadd.f32 0.0, %v3676
        %v3678 = vpop.f32.mrb[0].mxu0
        %v3679 = vpop.f32.mrb[0].mxu0
        %v3680 = vadd.f32 0.0, %v3679
        %v3681 = vpop.f32.mrb[0].mxu0
        %3682 = vmatprep.mubr.bf16.mxu0 0
        %3683 = vmatmul.mubr.bf16.gmra.mrb[0].mxu0 %v2483
        %v3684 = vpop.f32.mrb[0].mxu0
        %v3685 = vpop.f32.mrb[0].mxu0
        %v3686 = vpop.f32.mrb[0].mxu0
        %v3687 = vpop.f32.mrb[0].mxu0
        %3688 = vmatprep.mubr.bf16.mxu0 0
        %3689 = vmatmul.mubr.bf16.gmra.mrb[0].mxu0 %v2486
        %v3690 = vpop.f32.mrb[0].mxu0
        %v3691 = vadd.f32 0.0, %v3690
        %v3692 = vpop.f32.mrb[0].mxu0
        %v3693 = vpop.f32.mrb[0].mxu0
        %v3694 = vadd.f32 0.0, %v3693
        %v3695 = vpop.f32.mrb[0].mxu0
        %3696 = vmatprep.mubr.bf16.mxu0 0
        %3697 = vmatmul.mubr.bf16.gmra.mrb[0].mxu0 %v2489
        %v3698 = vpop.f32.mrb[0].mxu0
        %v3699 = vpop.f32.mrb[0].mxu0
        %v3700 = vpop.f32.mrb[0].mxu0
        %v3701 = vpop.f32.mrb[0].mxu0
        %3702 = vmatprep.mubr.bf16.mxu0 0
        %3703 = vmatmul.mubr.bf16.gmra.mrb[0].mxu0 %v2492
        %v3704 = vpop.f32.mrb[0].mxu0
        %v3705 = vadd.f32 0.0, %v3704
        %v3706 = vpop.f32.mrb[0].mxu0
        %v3707 = vpop.f32.mrb[0].mxu0
        %v3708 = vadd.f32 0.0, %v3707
        %v3709 = vpop.f32.mrb[0].mxu0
        %3710 = vmatprep.mubr.bf16.mxu0 0
        %3711 = vmatmul.mubr.bf16.gmra.mrb[0].mxu0 %v2495
        %v3712 = vpop.f32.mrb[0].mxu0
        %v3713 = vpop.f32.mrb[0].mxu0
        %v3714 = vpop.f32.mrb[0].mxu0
        %v3715 = vpop.f32.mrb[0].mxu0
        %3716 = vmatprep.mubr.bf16.mxu0 0
        %3717 = vmatmul.mubr.bf16.gmra.mrb[0].mxu0 %v2498
        %v3718 = vpop.f32.mrb[0].mxu0
        %v3719 = vadd.f32 0.0, %v3718
        %v3720 = vpop.f32.mrb[0].mxu0
        %v3721 = vpop.f32.mrb[0].mxu0
        %v3722 = vadd.f32 0.0, %v3721
        %v3723 = vpop.f32.mrb[0].mxu0
        %3724 = vmatprep.mubr.bf16.mxu0 0
        %3725 = vmatmul.mubr.bf16.gmra.mrb[0].mxu0 %v2501
        %v3726 = vpop.f32.mrb[0].mxu0
        %v3727 = vpop.f32.mrb[0].mxu0
        %v3728 = vpop.f32.mrb[0].mxu0
        %v3729 = vpop.f32.mrb[0].mxu0
        %3730 = vmatprep.mubr.bf16.mxu0 0
        %3731 = vmatmul.mubr.bf16.gmra.mrb[0].mxu0 %v3048
        %v3732 = vpop.f32.mrb[0].mxu0
        %v3733 = vadd.f32 0.0, %v3732
        %v3734 = vpop.f32.mrb[0].mxu0
        %v3735 = vpop.f32.mrb[0].mxu0
        %v3736 = vadd.f32 0.0, %v3735
        %v3737 = vpop.f32.mrb[0].mxu0
        %3738 = vmatprep.mubr.bf16.mxu0 0
        %3739 = vmatmul.mubr.bf16.gmra.mrb[0].mxu0 %v3595
        %v3740 = vpop.f32.mrb[0].mxu0
        %v3741 = vpop.f32.mrb[0].mxu0
        %v3742 = vpop.f32.mrb[0].mxu0
        %v3743 = vpop.f32.mrb[0].mxu0
        %3744 = vdwg.mxu0
        %v3745 = vadd.f32 %v3566, %v3635
        %v3746 = vadd.f32 %v3567, %v3638
        %v3747 = vadd.f32 %v3568, %v3649
        %v3748 = vadd.f32 %v3569, %v3652
        %v3749 = vadd.f32 %v3570, %v3663
        %v3750 = vadd.f32 %v3571, %v3666
        %v3751 = vadd.f32 %v3572, %v3677
        %v3752 = vadd.f32 %v3573, %v3680
        %v3753 = vadd.f32 %v3574, %v3691
        %v3754 = vadd.f32 %v3575, %v3694
        %v3755 = vadd.f32 %v3576, %v3705
        %v3756 = vadd.f32 %v3577, %v3708
        %v3757 = vadd.f32 %v3578, %v3719
        %v3758 = vadd.f32 %v3579, %v3722
        %v3759 = vadd.f32 %v3580, %v3733
        %v3760 = vadd.f32 %v3581, %v3736
        %v3777 = vcombine.high %v3745, %v3745
        %v3779 = vunpack.c.l.s4 1983009808
        %v3780 = vunpack.c.0.s8 %v3779
        %v3781 = vlaneseq
        %v3782 = vshrl.u32 %v3781, 7
        %v3783 = vsub.s32 %v3780, %v3782
        %v3784 = vrot.slane %v3745, %v3783
        %v3786 = vunpack.c.l.s4 1983009808
        %v3787 = vunpack.c.0.s8 %v3786
        %v3788 = vlaneseq
        %v3789 = vshrl.u32 %v3788, 7
        %v3790 = vsub.s32 %v3787, %v3789
        %v3791 = vrot.slane %v3777, %v3790
        %v3792 = vcombine.high %v3784, %v3784
        %v3793 = vcombine.high %v3791, %v3791
        %v3794 = vcombine.high %v3746, %v3746
        %v3796 = vunpack.c.l.s4 1983009808
        %v3797 = vunpack.c.0.s8 %v3796
        %v3798 = vlaneseq
        %v3799 = vshrl.u32 %v3798, 7
        %v3800 = vsub.s32 %v3797, %v3799
        %v3801 = vrot.slane %v3746, %v3800
        %v3803 = vunpack.c.l.s4 1983009808
        %v3804 = vunpack.c.0.s8 %v3803
        %v3805 = vlaneseq
        %v3806 = vshrl.u32 %v3805, 7
        %v3807 = vsub.s32 %v3804, %v3806
        %v3808 = vrot.slane %v3794, %v3807
        %v3809 = vcombine.high %v3801, %v3801
        %v3810 = vcombine.high %v3808, %v3808
        %v3811 = vcombine.high %v3747, %v3747
        %v3813 = vunpack.c.l.s4 1983009808
        %v3814 = vunpack.c.0.s8 %v3813
        %v3815 = vlaneseq
        %v3816 = vshrl.u32 %v3815, 7
        %v3817 = vsub.s32 %v3814, %v3816
        %v3818 = vrot.slane %v3747, %v3817
        %v3820 = vunpack.c.l.s4 1983009808
        %v3821 = vunpack.c.0.s8 %v3820
        %v3822 = vlaneseq
        %v3823 = vshrl.u32 %v3822, 7
        %v3824 = vsub.s32 %v3821, %v3823
        %v3825 = vrot.slane %v3811, %v3824
        %v3826 = vcombine.high %v3818, %v3818
        %v3827 = vcombine.high %v3825, %v3825
        %v3828 = vcombine.high %v3748, %v3748
        %v3830 = vunpack.c.l.s4 1983009808
        %v3831 = vunpack.c.0.s8 %v3830
        %v3832 = vlaneseq
        %v3833 = vshrl.u32 %v3832, 7
        %v3834 = vsub.s32 %v3831, %v3833
        %v3835 = vrot.slane %v3748, %v3834
        %v3837 = vunpack.c.l.s4 1983009808
        %v3838 = vunpack.c.0.s8 %v3837
        %v3839 = vlaneseq
        %v3840 = vshrl.u32 %v3839, 7
        %v3841 = vsub.s32 %v3838, %v3840
        %v3842 = vrot.slane %v3828, %v3841
        %v3843 = vcombine.high %v3835, %v3835
        %v3844 = vcombine.high %v3842, %v3842
        %v3845 = vcombine.high %v3749, %v3749
        %v3847 = vunpack.c.l.s4 1983009808
        %v3848 = vunpack.c.0.s8 %v3847
        %v3849 = vlaneseq
        %v3850 = vshrl.u32 %v3849, 7
        %v3851 = vsub.s32 %v3848, %v3850
        %v3852 = vrot.slane %v3749, %v3851
        %v3854 = vunpack.c.l.s4 1983009808
        %v3855 = vunpack.c.0.s8 %v3854
        %v3856 = vlaneseq
        %v3857 = vshrl.u32 %v3856, 7
        %v3858 = vsub.s32 %v3855, %v3857
        %v3859 = vrot.slane %v3845, %v3858
        %v3860 = vcombine.high %v3852, %v3852
        %v3861 = vcombine.high %v3859, %v3859
        %v3862 = vcombine.high %v3750, %v3750
        %v3864 = vunpack.c.l.s4 1983009808
        %v3865 = vunpack.c.0.s8 %v3864
        %v3866 = vlaneseq
        %v3867 = vshrl.u32 %v3866, 7
        %v3868 = vsub.s32 %v3865, %v3867
        %v3869 = vrot.slane %v3750, %v3868
        %v3871 = vunpack.c.l.s4 1983009808
        %v3872 = vunpack.c.0.s8 %v3871
        %v3873 = vlaneseq
        %v3874 = vshrl.u32 %v3873, 7
        %v3875 = vsub.s32 %v3872, %v3874
        %v3876 = vrot.slane %v3862, %v3875
        %v3877 = vcombine.high %v3869, %v3869
        %v3878 = vcombine.high %v3876, %v3876
        %v3879 = vcombine.high %v3751, %v3751
        %v3881 = vunpack.c.l.s4 1983009808
        %v3882 = vunpack.c.0.s8 %v3881
        %v3883 = vlaneseq
        %v3884 = vshrl.u32 %v3883, 7
        %v3885 = vsub.s32 %v3882, %v3884
        %v3886 = vrot.slane %v3751, %v3885
        %v3888 = vunpack.c.l.s4 1983009808
        %v3889 = vunpack.c.0.s8 %v3888
        %v3890 = vlaneseq
        %v3891 = vshrl.u32 %v3890, 7
        %v3892 = vsub.s32 %v3889, %v3891
        %v3893 = vrot.slane %v3879, %v3892
        %v3894 = vcombine.high %v3886, %v3886
        %v3895 = vcombine.high %v3893, %v3893
        %v3896 = vcombine.high %v3752, %v3752
        %v3898 = vunpack.c.l.s4 1983009808
        %v3899 = vunpack.c.0.s8 %v3898
        %v3900 = vlaneseq
        %v3901 = vshrl.u32 %v3900, 7
        %v3902 = vsub.s32 %v3899, %v3901
        %v3903 = vrot.slane %v3752, %v3902
        %v3905 = vunpack.c.l.s4 1983009808
        %v3906 = vunpack.c.0.s8 %v3905
        %v3907 = vlaneseq
        %v3908 = vshrl.u32 %v3907, 7
        %v3909 = vsub.s32 %v3906, %v3908
        %v3910 = vrot.slane %v3896, %v3909
        %v3911 = vcombine.high %v3903, %v3903
        %v3912 = vcombine.high %v3910, %v3910
        %v3913 = vcombine.high %v3753, %v3753
        %v3915 = vunpack.c.l.s4 1983009808
        %v3916 = vunpack.c.0.s8 %v3915
        %v3917 = vlaneseq
        %v3918 = vshrl.u32 %v3917, 7
        %v3919 = vsub.s32 %v3916, %v3918
        %v3920 = vrot.slane %v3753, %v3919
        %v3922 = vunpack.c.l.s4 1983009808
        %v3923 = vunpack.c.0.s8 %v3922
        %v3924 = vlaneseq
        %v3925 = vshrl.u32 %v3924, 7
        %v3926 = vsub.s32 %v3923, %v3925
        %v3927 = vrot.slane %v3913, %v3926
        %v3928 = vcombine.high %v3920, %v3920
        %v3929 = vcombine.high %v3927, %v3927
        %v3930 = vcombine.high %v3754, %v3754
        %v3932 = vunpack.c.l.s4 1983009808
        %v3933 = vunpack.c.0.s8 %v3932
        %v3934 = vlaneseq
        %v3935 = vshrl.u32 %v3934, 7
        %v3936 = vsub.s32 %v3933, %v3935
        %v3937 = vrot.slane %v3754, %v3936
        %v3939 = vunpack.c.l.s4 1983009808
        %v3940 = vunpack.c.0.s8 %v3939
        %v3941 = vlaneseq
        %v3942 = vshrl.u32 %v3941, 7
        %v3943 = vsub.s32 %v3940, %v3942
        %v3944 = vrot.slane %v3930, %v3943
        %v3945 = vcombine.high %v3937, %v3937
        %v3946 = vcombine.high %v3944, %v3944
        %v3947 = vcombine.high %v3755, %v3755
        %v3949 = vunpack.c.l.s4 1983009808
        %v3950 = vunpack.c.0.s8 %v3949
        %v3951 = vlaneseq
        %v3952 = vshrl.u32 %v3951, 7
        %v3953 = vsub.s32 %v3950, %v3952
        %v3954 = vrot.slane %v3755, %v3953
        %v3956 = vunpack.c.l.s4 1983009808
        %v3957 = vunpack.c.0.s8 %v3956
        %v3958 = vlaneseq
        %v3959 = vshrl.u32 %v3958, 7
        %v3960 = vsub.s32 %v3957, %v3959
        %v3961 = vrot.slane %v3947, %v3960
        %v3962 = vcombine.high %v3954, %v3954
        %v3963 = vcombine.high %v3961, %v3961
        %v3964 = vcombine.high %v3756, %v3756
        %v3966 = vunpack.c.l.s4 1983009808
        %v3967 = vunpack.c.0.s8 %v3966
        %v3968 = vlaneseq
        %v3969 = vshrl.u32 %v3968, 7
        %v3970 = vsub.s32 %v3967, %v3969
        %v3971 = vrot.slane %v3756, %v3970
        %v3973 = vunpack.c.l.s4 1983009808
        %v3974 = vunpack.c.0.s8 %v3973
        %v3975 = vlaneseq
        %v3976 = vshrl.u32 %v3975, 7
        %v3977 = vsub.s32 %v3974, %v3976
        %v3978 = vrot.slane %v3964, %v3977
        %v3979 = vcombine.high %v3971, %v3971
        %v3980 = vcombine.high %v3978, %v3978
        %v3981 = vcombine.high %v3757, %v3757
        %v3983 = vunpack.c.l.s4 1983009808
        %v3984 = vunpack.c.0.s8 %v3983
        %v3985 = vlaneseq
        %v3986 = vshrl.u32 %v3985, 7
        %v3987 = vsub.s32 %v3984, %v3986
        %v3988 = vrot.slane %v3757, %v3987
        %v3990 = vunpack.c.l.s4 1983009808
        %v3991 = vunpack.c.0.s8 %v3990
        %v3992 = vlaneseq
        %v3993 = vshrl.u32 %v3992, 7
        %v3994 = vsub.s32 %v3991, %v3993
        %v3995 = vrot.slane %v3981, %v3994
        %v3996 = vcombine.high %v3988, %v3988
        %v3997 = vcombine.high %v3995, %v3995
        %v3998 = vcombine.high %v3758, %v3758
        %v4000 = vunpack.c.l.s4 1983009808
        %v4001 = vunpack.c.0.s8 %v4000
        %v4002 = vlaneseq
        %v4003 = vshrl.u32 %v4002, 7
        %v4004 = vsub.s32 %v4001, %v4003
        %v4005 = vrot.slane %v3758, %v4004
        %v4007 = vunpack.c.l.s4 1983009808
        %v4008 = vunpack.c.0.s8 %v4007
        %v4009 = vlaneseq
        %v4010 = vshrl.u32 %v4009, 7
        %v4011 = vsub.s32 %v4008, %v4010
        %v4012 = vrot.slane %v3998, %v4011
        %v4013 = vcombine.high %v4005, %v4005
        %v4014 = vcombine.high %v4012, %v4012
        %v4015 = vcombine.high %v3759, %v3759
        %v4017 = vunpack.c.l.s4 1983009808
        %v4018 = vunpack.c.0.s8 %v4017
        %v4019 = vlaneseq
        %v4020 = vshrl.u32 %v4019, 7
        %v4021 = vsub.s32 %v4018, %v4020
        %v4022 = vrot.slane %v3759, %v4021
        %v4024 = vunpack.c.l.s4 1983009808
        %v4025 = vunpack.c.0.s8 %v4024
        %v4026 = vlaneseq
        %v4027 = vshrl.u32 %v4026, 7
        %v4028 = vsub.s32 %v4025, %v4027
        %v4029 = vrot.slane %v4015, %v4028
        %v4030 = vcombine.high %v4022, %v4022
        %v4031 = vcombine.high %v4029, %v4029
        %v4032 = vcombine.high %v3760, %v3760
        %v4034 = vunpack.c.l.s4 1983009808
        %v4035 = vunpack.c.0.s8 %v4034
        %v4036 = vlaneseq
        %v4037 = vshrl.u32 %v4036, 7
        %v4038 = vsub.s32 %v4035, %v4037
        %v4039 = vrot.slane %v3760, %v4038
        %v4041 = vunpack.c.l.s4 1983009808
        %v4042 = vunpack.c.0.s8 %v4041
        %v4043 = vlaneseq
        %v4044 = vshrl.u32 %v4043, 7
        %v4045 = vsub.s32 %v4042, %v4044
        %v4046 = vrot.slane %v4032, %v4045
        %v4047 = vcombine.high %v4039, %v4039
        %v4048 = vcombine.high %v4046, %v4046
        %v4113 = vld [vmem:[%s4] sm:$0x1]
        %v4115 = vlaneseq
        %v4116 = vshrl.u32 %v4115, 7
        %v4117 = vsub.s32 0, %v4116
        %v4118 = vrot.slane %v4113, %v4117
        %v4119 = vcombine.high %v4118, %v4118
        %v4121 = vunpack.c.l.s4 1983009808
        %v4122 = vunpack.c.0.s8 %v4121
        %v4123 = vlaneseq
        %v4124 = vshrl.u32 %v4123, 7
        %v4125 = vsub.s32 %v4122, %v4124
        %v4126 = vrot.slane %v4118, %v4125
        %v4128 = vunpack.c.l.s4 1983009808
        %v4129 = vunpack.c.0.s8 %v4128
        %v4130 = vlaneseq
        %v4131 = vshrl.u32 %v4130, 7
        %v4132 = vsub.s32 %v4129, %v4131
        %v4133 = vrot.slane %v4119, %v4132
        %v4134 = vcombine.high %v4126, %v4126
        %v4135 = vcombine.high %v4133, %v4133
        %v4136 = vrot.slane %v4126, 1
        %v4137 = vrot.slane %v4134, 1
        %v4138 = vrot.slane %v4133, 1
        %v4139 = vrot.slane %v4135, 1
        %v4148 = vadd.f32 %v3784, %v4126
        %v4149 = vadd.f32 %v3792, %v4136
        %v4150 = vadd.f32 %v3791, %v4134
        %v4151 = vadd.f32 %v3793, %v4137
        %v4152 = vadd.f32 %v3801, %v4133
        %v4153 = vadd.f32 %v3809, %v4138
        %v4154 = vadd.f32 %v3808, %v4135
        %v4155 = vadd.f32 %v3810, %v4139
        %v4156 = vadd.f32 %v3818, %v4126
        %v4157 = vadd.f32 %v3826, %v4136
        %v4158 = vadd.f32 %v3825, %v4134
        %v4159 = vadd.f32 %v3827, %v4137
        %v4160 = vadd.f32 %v3835, %v4133
        %v4161 = vadd.f32 %v3843, %v4138
        %v4162 = vadd.f32 %v3842, %v4135
        %v4163 = vadd.f32 %v3844, %v4139
        %v4164 = vadd.f32 %v3852, %v4126
        %v4165 = vadd.f32 %v3860, %v4136
        %v4166 = vadd.f32 %v3859, %v4134
        %v4167 = vadd.f32 %v3861, %v4137
        %v4168 = vadd.f32 %v3869, %v4133
        %v4169 = vadd.f32 %v3877, %v4138
        %v4170 = vadd.f32 %v3876, %v4135
        %v4171 = vadd.f32 %v3878, %v4139
        %v4172 = vadd.f32 %v3886, %v4126
        %v4173 = vadd.f32 %v3894, %v4136
        %v4174 = vadd.f32 %v3893, %v4134
        %v4175 = vadd.f32 %v3895, %v4137
        %v4176 = vadd.f32 %v3903, %v4133
        %v4177 = vadd.f32 %v3911, %v4138
        %v4178 = vadd.f32 %v3910, %v4135
        %v4179 = vadd.f32 %v3912, %v4139
        %v4180 = vadd.f32 %v3920, %v4126
        %v4181 = vadd.f32 %v3928, %v4136
        %v4182 = vadd.f32 %v3927, %v4134
        %v4183 = vadd.f32 %v3929, %v4137
        %v4184 = vadd.f32 %v3937, %v4133
        %v4185 = vadd.f32 %v3945, %v4138
        %v4186 = vadd.f32 %v3944, %v4135
        %v4187 = vadd.f32 %v3946, %v4139
        %v4188 = vadd.f32 %v3954, %v4126
        %v4189 = vadd.f32 %v3962, %v4136
        %v4190 = vadd.f32 %v3961, %v4134
        %v4191 = vadd.f32 %v3963, %v4137
        %v4192 = vadd.f32 %v3971, %v4133
        %v4193 = vadd.f32 %v3979, %v4138
        %v4194 = vadd.f32 %v3978, %v4135
        %v4195 = vadd.f32 %v3980, %v4139
        %v4196 = vadd.f32 %v3988, %v4126
        %v4197 = vadd.f32 %v3996, %v4136
        %v4198 = vadd.f32 %v3995, %v4134
        %v4199 = vadd.f32 %v3997, %v4137
        %v4200 = vadd.f32 %v4005, %v4133
        %v4201 = vadd.f32 %v4013, %v4138
        %v4202 = vadd.f32 %v4012, %v4135
        %v4203 = vadd.f32 %v4014, %v4139
        %v4204 = vadd.f32 %v4022, %v4126
        %v4205 = vadd.f32 %v4030, %v4136
        %v4206 = vadd.f32 %v4029, %v4134
        %v4207 = vadd.f32 %v4031, %v4137
        %v4208 = vadd.f32 %v4039, %v4133
        %v4209 = vadd.f32 %v4047, %v4138
        %v4210 = vadd.f32 %v4046, %v4135
        %v4211 = vadd.f32 %v4048, %v4139
        %v4212 = vmax.f32 %v4148, 0.0
        %v4213 = vmax.f32 %v4149, 0.0
        %v4214 = vmax.f32 %v4150, 0.0
        %v4215 = vmax.f32 %v4151, 0.0
        %v4216 = vmax.f32 %v4152, 0.0
        %v4217 = vmax.f32 %v4153, 0.0
        %v4218 = vmax.f32 %v4154, 0.0
        %v4219 = vmax.f32 %v4155, 0.0
        %v4220 = vmax.f32 %v4156, 0.0
        %v4221 = vmax.f32 %v4157, 0.0
        %v4222 = vmax.f32 %v4158, 0.0
        %v4223 = vmax.f32 %v4159, 0.0
        %v4224 = vmax.f32 %v4160, 0.0
        %v4225 = vmax.f32 %v4161, 0.0
        %v4226 = vmax.f32 %v4162, 0.0
        %v4227 = vmax.f32 %v4163, 0.0
        %v4228 = vmax.f32 %v4164, 0.0
        %v4229 = vmax.f32 %v4165, 0.0
        %v4230 = vmax.f32 %v4166, 0.0
        %v4231 = vmax.f32 %v4167, 0.0
        %v4232 = vmax.f32 %v4168, 0.0
        %v4233 = vmax.f32 %v4169, 0.0
        %v4234 = vmax.f32 %v4170, 0.0
        %v4235 = vmax.f32 %v4171, 0.0
        %v4236 = vmax.f32 %v4172, 0.0
        %v4237 = vmax.f32 %v4173, 0.0
        %v4238 = vmax.f32 %v4174, 0.0
        %v4239 = vmax.f32 %v4175, 0.0
        %v4240 = vmax.f32 %v4176, 0.0
        %v4241 = vmax.f32 %v4177, 0.0
        %v4242 = vmax.f32 %v4178, 0.0
        %v4243 = vmax.f32 %v4179, 0.0
        %v4244 = vmax.f32 %v4180, 0.0
        %v4245 = vmax.f32 %v4181, 0.0
        %v4246 = vmax.f32 %v4182, 0.0
        %v4247 = vmax.f32 %v4183, 0.0
        %v4248 = vmax.f32 %v4184, 0.0
        %v4249 = vmax.f32 %v4185, 0.0
        %v4250 = vmax.f32 %v4186, 0.0
        %v4251 = vmax.f32 %v4187, 0.0
        %v4252 = vmax.f32 %v4188, 0.0
        %v4253 = vmax.f32 %v4189, 0.0
        %v4254 = vmax.f32 %v4190, 0.0
        %v4255 = vmax.f32 %v4191, 0.0
        %v4256 = vmax.f32 %v4192, 0.0
        %v4257 = vmax.f32 %v4193, 0.0
        %v4258 = vmax.f32 %v4194, 0.0
        %v4259 = vmax.f32 %v4195, 0.0
        %v4260 = vmax.f32 %v4196, 0.0
        %v4261 = vmax.f32 %v4197, 0.0
        %v4262 = vmax.f32 %v4198, 0.0
        %v4263 = vmax.f32 %v4199, 0.0
        %v4264 = vmax.f32 %v4200, 0.0
        %v4265 = vmax.f32 %v4201, 0.0
        %v4266 = vmax.f32 %v4202, 0.0
        %v4267 = vmax.f32 %v4203, 0.0
        %v4268 = vmax.f32 %v4204, 0.0
        %v4269 = vmax.f32 %v4205, 0.0
        %v4270 = vmax.f32 %v4206, 0.0
        %v4271 = vmax.f32 %v4207, 0.0
        %v4272 = vmax.f32 %v4208, 0.0
        %v4273 = vmax.f32 %v4209, 0.0
        %v4274 = vmax.f32 %v4210, 0.0
        %v4275 = vmax.f32 %v4211, 0.0
        %v4276 = vpack.c.bf16 %v4212, %v4212
        %v4277 = vpack.c.bf16 %v4213, %v4213
        %v4278 = vpack.c.bf16 %v4214, %v4214
        %v4279 = vpack.c.bf16 %v4215, %v4215
        %v4280 = vpack.c.bf16 %v4216, %v4216
        %v4281 = vpack.c.bf16 %v4217, %v4217
        %v4282 = vpack.c.bf16 %v4218, %v4218
        %v4283 = vpack.c.bf16 %v4219, %v4219
        %v4284 = vpack.c.bf16 %v4220, %v4220
        %v4285 = vpack.c.bf16 %v4221, %v4221
        %v4286 = vpack.c.bf16 %v4222, %v4222
        %v4287 = vpack.c.bf16 %v4223, %v4223
        %v4288 = vpack.c.bf16 %v4224, %v4224
        %v4289 = vpack.c.bf16 %v4225, %v4225
        %v4290 = vpack.c.bf16 %v4226, %v4226
        %v4291 = vpack.c.bf16 %v4227, %v4227
        %v4292 = vpack.c.bf16 %v4228, %v4228
        %v4293 = vpack.c.bf16 %v4229, %v4229
        %v4294 = vpack.c.bf16 %v4230, %v4230
        %v4295 = vpack.c.bf16 %v4231, %v4231
        %v4296 = vpack.c.bf16 %v4232, %v4232
        %v4297 = vpack.c.bf16 %v4233, %v4233
        %v4298 = vpack.c.bf16 %v4234, %v4234
        %v4299 = vpack.c.bf16 %v4235, %v4235
        %v4300 = vpack.c.bf16 %v4236, %v4236
        %v4301 = vpack.c.bf16 %v4237, %v4237
        %v4302 = vpack.c.bf16 %v4238, %v4238
        %v4303 = vpack.c.bf16 %v4239, %v4239
        %v4304 = vpack.c.bf16 %v4240, %v4240
        %v4305 = vpack.c.bf16 %v4241, %v4241
        %v4306 = vpack.c.bf16 %v4242, %v4242
        %v4307 = vpack.c.bf16 %v4243, %v4243
        %v4308 = vpack.c.bf16 %v4244, %v4244
        %v4309 = vpack.c.bf16 %v4245, %v4245
        %v4310 = vpack.c.bf16 %v4246, %v4246
        %v4311 = vpack.c.bf16 %v4247, %v4247
        %v4312 = vpack.c.bf16 %v4248, %v4248
        %v4313 = vpack.c.bf16 %v4249, %v4249
        %v4314 = vpack.c.bf16 %v4250, %v4250
        %v4315 = vpack.c.bf16 %v4251, %v4251
        %v4316 = vpack.c.bf16 %v4252, %v4252
        %v4317 = vpack.c.bf16 %v4253, %v4253
        %v4318 = vpack.c.bf16 %v4254, %v4254
        %v4319 = vpack.c.bf16 %v4255, %v4255
        %v4320 = vpack.c.bf16 %v4256, %v4256
        %v4321 = vpack.c.bf16 %v4257, %v4257
        %v4322 = vpack.c.bf16 %v4258, %v4258
        %v4323 = vpack.c.bf16 %v4259, %v4259
        %v4324 = vpack.c.bf16 %v4260, %v4260
        %v4325 = vpack.c.bf16 %v4261, %v4261
        %v4326 = vpack.c.bf16 %v4262, %v4262
        %v4327 = vpack.c.bf16 %v4263, %v4263
        %v4328 = vpack.c.bf16 %v4264, %v4264
        %v4329 = vpack.c.bf16 %v4265, %v4265
        %v4330 = vpack.c.bf16 %v4266, %v4266
        %v4331 = vpack.c.bf16 %v4267, %v4267
        %v4332 = vpack.c.bf16 %v4268, %v4268
        %v4333 = vpack.c.bf16 %v4269, %v4269
        %v4334 = vpack.c.bf16 %v4270, %v4270
        %v4335 = vpack.c.bf16 %v4271, %v4271
        %v4336 = vpack.c.bf16 %v4272, %v4272
        %v4337 = vpack.c.bf16 %v4273, %v4273
        %v4338 = vpack.c.bf16 %v4274, %v4274
        %v4339 = vpack.c.bf16 %v4275, %v4275
        %v4341 = vunpack.c.l.s4 1966171168
        %v4342 = vunpack.c.0.s8 %v4341
        %v4343 = vlaneseq
        %v4344 = vshrl.u32 %v4343, 7
        %v4345 = vsub.s32 %v4342, %v4344
        %v4346 = vrot.slane %v298, %v4345
        %v4347 = vcombine.high %v4346, %v4346
        %v4349 = vunpack.c.l.s4 1966171168
        %v4350 = vunpack.c.0.s8 %v4349
        %v4351 = vlaneseq
        %v4352 = vshrl.u32 %v4351, 7
        %v4353 = vsub.s32 %v4350, %v4352
        %v4354 = vrot.slane %v4346, %v4353
        %v4356 = vunpack.c.l.s4 1966171168
        %v4357 = vunpack.c.0.s8 %v4356
        %v4358 = vlaneseq
        %v4359 = vshrl.u32 %v4358, 7
        %v4360 = vsub.s32 %v4357, %v4359
        %v4361 = vrot.slane %v4347, %v4360
        %v4362 = vcombine.high %v4354, %v4354
        %v4363 = vcombine.high %v4361, %v4361
        %v4365 = vunpack.c.l.s4 1966171168
        %v4366 = vunpack.c.0.s8 %v4365
        %v4367 = vlaneseq
        %v4368 = vshrl.u32 %v4367, 7
        %v4369 = vsub.s32 %v4366, %v4368
        %v4370 = vrot.slane %v299, %v4369
        %v4371 = vcombine.high %v4370, %v4370
        %v4373 = vunpack.c.l.s4 1966171168
        %v4374 = vunpack.c.0.s8 %v4373
        %v4375 = vlaneseq
        %v4376 = vshrl.u32 %v4375, 7
        %v4377 = vsub.s32 %v4374, %v4376
        %v4378 = vrot.slane %v4370, %v4377
        %v4380 = vunpack.c.l.s4 1966171168
        %v4381 = vunpack.c.0.s8 %v4380
        %v4382 = vlaneseq
        %v4383 = vshrl.u32 %v4382, 7
        %v4384 = vsub.s32 %v4381, %v4383
        %v4385 = vrot.slane %v4371, %v4384
        %v4386 = vcombine.high %v4378, %v4378
        %v4387 = vcombine.high %v4385, %v4385
        %v4389 = vunpack.c.l.s4 1966171168
        %v4390 = vunpack.c.0.s8 %v4389
        %v4391 = vlaneseq
        %v4392 = vshrl.u32 %v4391, 7
        %v4393 = vsub.s32 %v4390, %v4392
        %v4394 = vrot.slane %v302, %v4393
        %v4395 = vcombine.high %v4394, %v4394
        %v4397 = vunpack.c.l.s4 1966171168
        %v4398 = vunpack.c.0.s8 %v4397
        %v4399 = vlaneseq
        %v4400 = vshrl.u32 %v4399, 7
        %v4401 = vsub.s32 %v4398, %v4400
        %v4402 = vrot.slane %v4394, %v4401
        %v4404 = vunpack.c.l.s4 1966171168
        %v4405 = vunpack.c.0.s8 %v4404
        %v4406 = vlaneseq
        %v4407 = vshrl.u32 %v4406, 7
        %v4408 = vsub.s32 %v4405, %v4407
        %v4409 = vrot.slane %v4395, %v4408
        %v4410 = vcombine.high %v4402, %v4402
        %v4411 = vcombine.high %v4409, %v4409
        %v4413 = vunpack.c.l.s4 1966171168
        %v4414 = vunpack.c.0.s8 %v4413
        %v4415 = vlaneseq
        %v4416 = vshrl.u32 %v4415, 7
        %v4417 = vsub.s32 %v4414, %v4416
        %v4418 = vrot.slane %v303, %v4417
        %v4419 = vcombine.high %v4418, %v4418
        %v4421 = vunpack.c.l.s4 1966171168
        %v4422 = vunpack.c.0.s8 %v4421
        %v4423 = vlaneseq
        %v4424 = vshrl.u32 %v4423, 7
        %v4425 = vsub.s32 %v4422, %v4424
        %v4426 = vrot.slane %v4418, %v4425
        %v4428 = vunpack.c.l.s4 1966171168
        %v4429 = vunpack.c.0.s8 %v4428
        %v4430 = vlaneseq
        %v4431 = vshrl.u32 %v4430, 7
        %v4432 = vsub.s32 %v4429, %v4431
        %v4433 = vrot.slane %v4419, %v4432
        %v4434 = vcombine.high %v4426, %v4426
        %v4435 = vcombine.high %v4433, %v4433
        %v4437 = vunpack.c.l.s4 1966171168
        %v4438 = vunpack.c.0.s8 %v4437
        %v4439 = vlaneseq
        %v4440 = vshrl.u32 %v4439, 7
        %v4441 = vsub.s32 %v4438, %v4440
        %v4442 = vrot.slane %v306, %v4441
        %v4443 = vcombine.high %v4442, %v4442
        %v4445 = vunpack.c.l.s4 1966171168
        %v4446 = vunpack.c.0.s8 %v4445
        %v4447 = vlaneseq
        %v4448 = vshrl.u32 %v4447, 7
        %v4449 = vsub.s32 %v4446, %v4448
        %v4450 = vrot.slane %v4442, %v4449
        %v4452 = vunpack.c.l.s4 1966171168
        %v4453 = vunpack.c.0.s8 %v4452
        %v4454 = vlaneseq
        %v4455 = vshrl.u32 %v4454, 7
        %v4456 = vsub.s32 %v4453, %v4455
        %v4457 = vrot.slane %v4443, %v4456
        %v4458 = vcombine.high %v4450, %v4450
        %v4459 = vcombine.high %v4457, %v4457
        %v4461 = vunpack.c.l.s4 1966171168
        %v4462 = vunpack.c.0.s8 %v4461
        %v4463 = vlaneseq
        %v4464 = vshrl.u32 %v4463, 7
        %v4465 = vsub.s32 %v4462, %v4464
        %v4466 = vrot.slane %v307, %v4465
        %v4467 = vcombine.high %v4466, %v4466
        %v4469 = vunpack.c.l.s4 1966171168
        %v4470 = vunpack.c.0.s8 %v4469
        %v4471 = vlaneseq
        %v4472 = vshrl.u32 %v4471, 7
        %v4473 = vsub.s32 %v4470, %v4472
        %v4474 = vrot.slane %v4466, %v4473
        %v4476 = vunpack.c.l.s4 1966171168
        %v4477 = vunpack.c.0.s8 %v4476
        %v4478 = vlaneseq
        %v4479 = vshrl.u32 %v4478, 7
        %v4480 = vsub.s32 %v4477, %v4479
        %v4481 = vrot.slane %v4467, %v4480
        %v4482 = vcombine.high %v4474, %v4474
        %v4483 = vcombine.high %v4481, %v4481
        %v4485 = vunpack.c.l.s4 1966171168
        %v4486 = vunpack.c.0.s8 %v4485
        %v4487 = vlaneseq
        %v4488 = vshrl.u32 %v4487, 7
        %v4489 = vsub.s32 %v4486, %v4488
        %v4490 = vrot.slane %v310, %v4489
        %v4491 = vcombine.high %v4490, %v4490
        %v4493 = vunpack.c.l.s4 1966171168
        %v4494 = vunpack.c.0.s8 %v4493
        %v4495 = vlaneseq
        %v4496 = vshrl.u32 %v4495, 7
        %v4497 = vsub.s32 %v4494, %v4496
        %v4498 = vrot.slane %v4490, %v4497
        %v4500 = vunpack.c.l.s4 1966171168
        %v4501 = vunpack.c.0.s8 %v4500
        %v4502 = vlaneseq
        %v4503 = vshrl.u32 %v4502, 7
        %v4504 = vsub.s32 %v4501, %v4503
        %v4505 = vrot.slane %v4491, %v4504
        %v4506 = vcombine.high %v4498, %v4498
        %v4507 = vcombine.high %v4505, %v4505
        %v4509 = vunpack.c.l.s4 1966171168
        %v4510 = vunpack.c.0.s8 %v4509
        %v4511 = vlaneseq
        %v4512 = vshrl.u32 %v4511, 7
        %v4513 = vsub.s32 %v4510, %v4512
        %v4514 = vrot.slane %v311, %v4513
        %v4515 = vcombine.high %v4514, %v4514
        %v4517 = vunpack.c.l.s4 1966171168
        %v4518 = vunpack.c.0.s8 %v4517
        %v4519 = vlaneseq
        %v4520 = vshrl.u32 %v4519, 7
        %v4521 = vsub.s32 %v4518, %v4520
        %v4522 = vrot.slane %v4514, %v4521
        %v4524 = vunpack.c.l.s4 1966171168
        %v4525 = vunpack.c.0.s8 %v4524
        %v4526 = vlaneseq
        %v4527 = vshrl.u32 %v4526, 7
        %v4528 = vsub.s32 %v4525, %v4527
        %v4529 = vrot.slane %v4515, %v4528
        %v4530 = vcombine.high %v4522, %v4522
        %v4531 = vcombine.high %v4529, %v4529
        %v4533 = vunpack.c.l.s4 1966171168
        %v4534 = vunpack.c.0.s8 %v4533
        %v4535 = vlaneseq
        %v4536 = vshrl.u32 %v4535, 7
        %v4537 = vsub.s32 %v4534, %v4536
        %v4538 = vrot.slane %v314, %v4537
        %v4539 = vcombine.high %v4538, %v4538
        %v4541 = vunpack.c.l.s4 1966171168
        %v4542 = vunpack.c.0.s8 %v4541
        %v4543 = vlaneseq
        %v4544 = vshrl.u32 %v4543, 7
        %v4545 = vsub.s32 %v4542, %v4544
        %v4546 = vrot.slane %v4538, %v4545
        %v4548 = vunpack.c.l.s4 1966171168
        %v4549 = vunpack.c.0.s8 %v4548
        %v4550 = vlaneseq
        %v4551 = vshrl.u32 %v4550, 7
        %v4552 = vsub.s32 %v4549, %v4551
        %v4553 = vrot.slane %v4539, %v4552
        %v4554 = vcombine.high %v4546, %v4546
        %v4555 = vcombine.high %v4553, %v4553
        %v4557 = vunpack.c.l.s4 1966171168
        %v4558 = vunpack.c.0.s8 %v4557
        %v4559 = vlaneseq
        %v4560 = vshrl.u32 %v4559, 7
        %v4561 = vsub.s32 %v4558, %v4560
        %v4562 = vrot.slane %v315, %v4561
        %v4563 = vcombine.high %v4562, %v4562
        %v4565 = vunpack.c.l.s4 1966171168
        %v4566 = vunpack.c.0.s8 %v4565
        %v4567 = vlaneseq
        %v4568 = vshrl.u32 %v4567, 7
        %v4569 = vsub.s32 %v4566, %v4568
        %v4570 = vrot.slane %v4562, %v4569
        %v4572 = vunpack.c.l.s4 1966171168
        %v4573 = vunpack.c.0.s8 %v4572
        %v4574 = vlaneseq
        %v4575 = vshrl.u32 %v4574, 7
        %v4576 = vsub.s32 %v4573, %v4575
        %v4577 = vrot.slane %v4563, %v4576
        %v4578 = vcombine.high %v4570, %v4570
        %v4579 = vcombine.high %v4577, %v4577
        %v4581 = vunpack.c.l.s4 1966171168
        %v4582 = vunpack.c.0.s8 %v4581
        %v4583 = vlaneseq
        %v4584 = vshrl.u32 %v4583, 7
        %v4585 = vsub.s32 %v4582, %v4584
        %v4586 = vrot.slane %v318, %v4585
        %v4587 = vcombine.high %v4586, %v4586
        %v4589 = vunpack.c.l.s4 1966171168
        %v4590 = vunpack.c.0.s8 %v4589
        %v4591 = vlaneseq
        %v4592 = vshrl.u32 %v4591, 7
        %v4593 = vsub.s32 %v4590, %v4592
        %v4594 = vrot.slane %v4586, %v4593
        %v4596 = vunpack.c.l.s4 1966171168
        %v4597 = vunpack.c.0.s8 %v4596
        %v4598 = vlaneseq
        %v4599 = vshrl.u32 %v4598, 7
        %v4600 = vsub.s32 %v4597, %v4599
        %v4601 = vrot.slane %v4587, %v4600
        %v4602 = vcombine.high %v4594, %v4594
        %v4603 = vcombine.high %v4601, %v4601
        %v4605 = vunpack.c.l.s4 1966171168
        %v4606 = vunpack.c.0.s8 %v4605
        %v4607 = vlaneseq
        %v4608 = vshrl.u32 %v4607, 7
        %v4609 = vsub.s32 %v4606, %v4608
        %v4610 = vrot.slane %v319, %v4609
        %v4611 = vcombine.high %v4610, %v4610
        %v4613 = vunpack.c.l.s4 1966171168
        %v4614 = vunpack.c.0.s8 %v4613
        %v4615 = vlaneseq
        %v4616 = vshrl.u32 %v4615, 7
        %v4617 = vsub.s32 %v4614, %v4616
        %v4618 = vrot.slane %v4610, %v4617
        %v4620 = vunpack.c.l.s4 1966171168
        %v4621 = vunpack.c.0.s8 %v4620
        %v4622 = vlaneseq
        %v4623 = vshrl.u32 %v4622, 7
        %v4624 = vsub.s32 %v4621, %v4623
        %v4625 = vrot.slane %v4611, %v4624
        %v4626 = vcombine.high %v4618, %v4618
        %v4627 = vcombine.high %v4625, %v4625
        %v4629 = vunpack.c.l.s4 1966171168
        %v4630 = vunpack.c.0.s8 %v4629
        %v4631 = vlaneseq
        %v4632 = vshrl.u32 %v4631, 7
        %v4633 = vsub.s32 %v4630, %v4632
        %v4634 = vrot.slane %v322, %v4633
        %v4635 = vcombine.high %v4634, %v4634
        %v4637 = vunpack.c.l.s4 1966171168
        %v4638 = vunpack.c.0.s8 %v4637
        %v4639 = vlaneseq
        %v4640 = vshrl.u32 %v4639, 7
        %v4641 = vsub.s32 %v4638, %v4640
        %v4642 = vrot.slane %v4634, %v4641
        %v4644 = vunpack.c.l.s4 1966171168
        %v4645 = vunpack.c.0.s8 %v4644
        %v4646 = vlaneseq
        %v4647 = vshrl.u32 %v4646, 7
        %v4648 = vsub.s32 %v4645, %v4647
        %v4649 = vrot.slane %v4635, %v4648
        %v4650 = vcombine.high %v4642, %v4642
        %v4651 = vcombine.high %v4649, %v4649
        %v4653 = vunpack.c.l.s4 1966171168
        %v4654 = vunpack.c.0.s8 %v4653
        %v4655 = vlaneseq
        %v4656 = vshrl.u32 %v4655, 7
        %v4657 = vsub.s32 %v4654, %v4656
        %v4658 = vrot.slane %v323, %v4657
        %v4659 = vcombine.high %v4658, %v4658
        %v4661 = vunpack.c.l.s4 1966171168
        %v4662 = vunpack.c.0.s8 %v4661
        %v4663 = vlaneseq
        %v4664 = vshrl.u32 %v4663, 7
        %v4665 = vsub.s32 %v4662, %v4664
        %v4666 = vrot.slane %v4658, %v4665
        %v4668 = vunpack.c.l.s4 1966171168
        %v4669 = vunpack.c.0.s8 %v4668
        %v4670 = vlaneseq
        %v4671 = vshrl.u32 %v4670, 7
        %v4672 = vsub.s32 %v4669, %v4671
        %v4673 = vrot.slane %v4659, %v4672
        %v4674 = vcombine.high %v4666, %v4666
        %v4675 = vcombine.high %v4673, %v4673
        %v4677 = vunpack.c.l.s4 1966171168
        %v4678 = vunpack.c.0.s8 %v4677
        %v4679 = vlaneseq
        %v4680 = vshrl.u32 %v4679, 7
        %v4681 = vsub.s32 %v4678, %v4680
        %v4682 = vrot.slane %v326, %v4681
        %v4683 = vcombine.high %v4682, %v4682
        %v4685 = vunpack.c.l.s4 1966171168
        %v4686 = vunpack.c.0.s8 %v4685
        %v4687 = vlaneseq
        %v4688 = vshrl.u32 %v4687, 7
        %v4689 = vsub.s32 %v4686, %v4688
        %v4690 = vrot.slane %v4682, %v4689
        %v4692 = vunpack.c.l.s4 1966171168
        %v4693 = vunpack.c.0.s8 %v4692
        %v4694 = vlaneseq
        %v4695 = vshrl.u32 %v4694, 7
        %v4696 = vsub.s32 %v4693, %v4695
        %v4697 = vrot.slane %v4683, %v4696
        %v4698 = vcombine.high %v4690, %v4690
        %v4699 = vcombine.high %v4697, %v4697
        %v4701 = vunpack.c.l.s4 1966171168
        %v4702 = vunpack.c.0.s8 %v4701
        %v4703 = vlaneseq
        %v4704 = vshrl.u32 %v4703, 7
        %v4705 = vsub.s32 %v4702, %v4704
        %v4706 = vrot.slane %v327, %v4705
        %v4707 = vcombine.high %v4706, %v4706
        %v4709 = vunpack.c.l.s4 1966171168
        %v4710 = vunpack.c.0.s8 %v4709
        %v4711 = vlaneseq
        %v4712 = vshrl.u32 %v4711, 7
        %v4713 = vsub.s32 %v4710, %v4712
        %v4714 = vrot.slane %v4706, %v4713
        %v4716 = vunpack.c.l.s4 1966171168
        %v4717 = vunpack.c.0.s8 %v4716
        %v4718 = vlaneseq
        %v4719 = vshrl.u32 %v4718, 7
        %v4720 = vsub.s32 %v4717, %v4719
        %v4721 = vrot.slane %v4707, %v4720
        %v4722 = vcombine.high %v4714, %v4714
        %v4723 = vcombine.high %v4721, %v4721
        %v4724 = vld [vmem:[%s5] sm:$0xf]
        %v4725 = vld [vmem:[%s5 + $0x4] sm:$0xf]
        %v4726 = vld [vmem:[%s5 + $0x8] sm:$0xf]
        %v4728 = vunpack.c.l.s4 1966171168
        %v4729 = vunpack.c.0.s8 %v4728
        %v4730 = vlaneseq
        %v4731 = vshrl.u32 %v4730, 7
        %v4732 = vsub.s32 %v4729, %v4731
        %v4733 = vrot.slane %v4354, %v4732
        %v4735 = vunpack.c.l.s4 1966171168
        %v4736 = vunpack.c.0.s8 %v4735
        %v4737 = vlaneseq
        %v4738 = vshrl.u32 %v4737, 7
        %v4739 = vsub.s32 %v4736, %v4738
        %v4740 = vrot.slane %v4733, %v4739
        %v4742 = vunpack.c.l.s4 1966171168
        %v4743 = vunpack.c.0.s8 %v4742
        %v4744 = vlaneseq
        %v4745 = vshrl.u32 %v4744, 7
        %v4746 = vsub.s32 %v4743, %v4745
        %v4747 = vrot.slane %v4361, %v4746
        %v4749 = vunpack.c.l.s4 1966171168
        %v4750 = vunpack.c.0.s8 %v4749
        %v4751 = vlaneseq
        %v4752 = vshrl.u32 %v4751, 7
        %v4753 = vsub.s32 %v4750, %v4752
        %v4754 = vrot.slane %v4747, %v4753
        %v4756 = vunpack.c.l.s4 1966171168
        %v4757 = vunpack.c.0.s8 %v4756
        %v4758 = vlaneseq
        %v4759 = vshrl.u32 %v4758, 7
        %v4760 = vsub.s32 %v4757, %v4759
        %v4761 = vrot.slane %v4362, %v4760
        %v4763 = vunpack.c.l.s4 1966171168
        %v4764 = vunpack.c.0.s8 %v4763
        %v4765 = vlaneseq
        %v4766 = vshrl.u32 %v4765, 7
        %v4767 = vsub.s32 %v4764, %v4766
        %v4768 = vrot.slane %v4761, %v4767
        %v4770 = vunpack.c.l.s4 1966171168
        %v4771 = vunpack.c.0.s8 %v4770
        %v4772 = vlaneseq
        %v4773 = vshrl.u32 %v4772, 7
        %v4774 = vsub.s32 %v4771, %v4773
        %v4775 = vrot.slane %v4363, %v4774
        %v4777 = vunpack.c.l.s4 1966171168
        %v4778 = vunpack.c.0.s8 %v4777
        %v4779 = vlaneseq
        %v4780 = vshrl.u32 %v4779, 7
        %v4781 = vsub.s32 %v4778, %v4780
        %v4782 = vrot.slane %v4775, %v4781
        %v4784 = vunpack.c.l.s4 1966171168
        %v4785 = vunpack.c.0.s8 %v4784
        %v4786 = vlaneseq
        %v4787 = vshrl.u32 %v4786, 7
        %v4788 = vsub.s32 %v4785, %v4787
        %v4789 = vrot.slane %v4378, %v4788
        %v4791 = vunpack.c.l.s4 1966171168
        %v4792 = vunpack.c.0.s8 %v4791
        %v4793 = vlaneseq
        %v4794 = vshrl.u32 %v4793, 7
        %v4795 = vsub.s32 %v4792, %v4794
        %v4796 = vrot.slane %v4789, %v4795
        %v4798 = vunpack.c.l.s4 1966171168
        %v4799 = vunpack.c.0.s8 %v4798
        %v4800 = vlaneseq
        %v4801 = vshrl.u32 %v4800, 7
        %v4802 = vsub.s32 %v4799, %v4801
        %v4803 = vrot.slane %v4385, %v4802
        %v4805 = vunpack.c.l.s4 1966171168
        %v4806 = vunpack.c.0.s8 %v4805
        %v4807 = vlaneseq
        %v4808 = vshrl.u32 %v4807, 7
        %v4809 = vsub.s32 %v4806, %v4808
        %v4810 = vrot.slane %v4803, %v4809
        %v4812 = vunpack.c.l.s4 1966171168
        %v4813 = vunpack.c.0.s8 %v4812
        %v4814 = vlaneseq
        %v4815 = vshrl.u32 %v4814, 7
        %v4816 = vsub.s32 %v4813, %v4815
        %v4817 = vrot.slane %v4386, %v4816
        %v4819 = vunpack.c.l.s4 1966171168
        %v4820 = vunpack.c.0.s8 %v4819
        %v4821 = vlaneseq
        %v4822 = vshrl.u32 %v4821, 7
        %v4823 = vsub.s32 %v4820, %v4822
        %v4824 = vrot.slane %v4817, %v4823
        %v4826 = vunpack.c.l.s4 1966171168
        %v4827 = vunpack.c.0.s8 %v4826
        %v4828 = vlaneseq
        %v4829 = vshrl.u32 %v4828, 7
        %v4830 = vsub.s32 %v4827, %v4829
        %v4831 = vrot.slane %v4387, %v4830
        %v4833 = vunpack.c.l.s4 1966171168
        %v4834 = vunpack.c.0.s8 %v4833
        %v4835 = vlaneseq
        %v4836 = vshrl.u32 %v4835, 7
        %v4837 = vsub.s32 %v4834, %v4836
        %v4838 = vrot.slane %v4831, %v4837
        %v4840 = vunpack.c.l.s4 1966171168
        %v4841 = vunpack.c.0.s8 %v4840
        %v4842 = vlaneseq
        %v4843 = vshrl.u32 %v4842, 7
        %v4844 = vsub.s32 %v4841, %v4843
        %v4845 = vrot.slane %v4402, %v4844
        %v4847 = vunpack.c.l.s4 1966171168
        %v4848 = vunpack.c.0.s8 %v4847
        %v4849 = vlaneseq
        %v4850 = vshrl.u32 %v4849, 7
        %v4851 = vsub.s32 %v4848, %v4850
        %v4852 = vrot.slane %v4845, %v4851
        %v4854 = vunpack.c.l.s4 1966171168
        %v4855 = vunpack.c.0.s8 %v4854
        %v4856 = vlaneseq
        %v4857 = vshrl.u32 %v4856, 7
        %v4858 = vsub.s32 %v4855, %v4857
        %v4859 = vrot.slane %v4409, %v4858
        %v4861 = vunpack.c.l.s4 1966171168
        %v4862 = vunpack.c.0.s8 %v4861
        %v4863 = vlaneseq
        %v4864 = vshrl.u32 %v4863, 7
        %v4865 = vsub.s32 %v4862, %v4864
        %v4866 = vrot.slane %v4859, %v4865
        %v4868 = vunpack.c.l.s4 1966171168
        %v4869 = vunpack.c.0.s8 %v4868
        %v4870 = vlaneseq
        %v4871 = vshrl.u32 %v4870, 7
        %v4872 = vsub.s32 %v4869, %v4871
        %v4873 = vrot.slane %v4410, %v4872
        %v4875 = vunpack.c.l.s4 1966171168
        %v4876 = vunpack.c.0.s8 %v4875
        %v4877 = vlaneseq
        %v4878 = vshrl.u32 %v4877, 7
        %v4879 = vsub.s32 %v4876, %v4878
        %v4880 = vrot.slane %v4873, %v4879
        %v4882 = vunpack.c.l.s4 1966171168
        %v4883 = vunpack.c.0.s8 %v4882
        %v4884 = vlaneseq
        %v4885 = vshrl.u32 %v4884, 7
        %v4886 = vsub.s32 %v4883, %v4885
        %v4887 = vrot.slane %v4411, %v4886
        %v4889 = vunpack.c.l.s4 1966171168
        %v4890 = vunpack.c.0.s8 %v4889
        %v4891 = vlaneseq
        %v4892 = vshrl.u32 %v4891, 7
        %v4893 = vsub.s32 %v4890, %v4892
        %v4894 = vrot.slane %v4887, %v4893
        %v4896 = vunpack.c.l.s4 1966171168
        %v4897 = vunpack.c.0.s8 %v4896
        %v4898 = vlaneseq
        %v4899 = vshrl.u32 %v4898, 7
        %v4900 = vsub.s32 %v4897, %v4899
        %v4901 = vrot.slane %v4426, %v4900
        %v4903 = vunpack.c.l.s4 1966171168
        %v4904 = vunpack.c.0.s8 %v4903
        %v4905 = vlaneseq
        %v4906 = vshrl.u32 %v4905, 7
        %v4907 = vsub.s32 %v4904, %v4906
        %v4908 = vrot.slane %v4901, %v4907
        %v4910 = vunpack.c.l.s4 1966171168
        %v4911 = vunpack.c.0.s8 %v4910
        %v4912 = vlaneseq
        %v4913 = vshrl.u32 %v4912, 7
        %v4914 = vsub.s32 %v4911, %v4913
        %v4915 = vrot.slane %v4433, %v4914
        %v4917 = vunpack.c.l.s4 1966171168
        %v4918 = vunpack.c.0.s8 %v4917
        %v4919 = vlaneseq
        %v4920 = vshrl.u32 %v4919, 7
        %v4921 = vsub.s32 %v4918, %v4920
        %v4922 = vrot.slane %v4915, %v4921
        %v4924 = vunpack.c.l.s4 1966171168
        %v4925 = vunpack.c.0.s8 %v4924
        %v4926 = vlaneseq
        %v4927 = vshrl.u32 %v4926, 7
        %v4928 = vsub.s32 %v4925, %v4927
        %v4929 = vrot.slane %v4434, %v4928
        %v4931 = vunpack.c.l.s4 1966171168
        %v4932 = vunpack.c.0.s8 %v4931
        %v4933 = vlaneseq
        %v4934 = vshrl.u32 %v4933, 7
        %v4935 = vsub.s32 %v4932, %v4934
        %v4936 = vrot.slane %v4929, %v4935
        %v4938 = vunpack.c.l.s4 1966171168
        %v4939 = vunpack.c.0.s8 %v4938
        %v4940 = vlaneseq
        %v4941 = vshrl.u32 %v4940, 7
        %v4942 = vsub.s32 %v4939, %v4941
        %v4943 = vrot.slane %v4435, %v4942
        %v4945 = vunpack.c.l.s4 1966171168
        %v4946 = vunpack.c.0.s8 %v4945
        %v4947 = vlaneseq
        %v4948 = vshrl.u32 %v4947, 7
        %v4949 = vsub.s32 %v4946, %v4948
        %v4950 = vrot.slane %v4943, %v4949
        %v4952 = vunpack.c.l.s4 1966171168
        %v4953 = vunpack.c.0.s8 %v4952
        %v4954 = vlaneseq
        %v4955 = vshrl.u32 %v4954, 7
        %v4956 = vsub.s32 %v4953, %v4955
        %v4957 = vrot.slane %v4450, %v4956
        %v4959 = vunpack.c.l.s4 1966171168
        %v4960 = vunpack.c.0.s8 %v4959
        %v4961 = vlaneseq
        %v4962 = vshrl.u32 %v4961, 7
        %v4963 = vsub.s32 %v4960, %v4962
        %v4964 = vrot.slane %v4957, %v4963
        %v4966 = vunpack.c.l.s4 1966171168
        %v4967 = vunpack.c.0.s8 %v4966
        %v4968 = vlaneseq
        %v4969 = vshrl.u32 %v4968, 7
        %v4970 = vsub.s32 %v4967, %v4969
        %v4971 = vrot.slane %v4457, %v4970
        %v4973 = vunpack.c.l.s4 1966171168
        %v4974 = vunpack.c.0.s8 %v4973
        %v4975 = vlaneseq
        %v4976 = vshrl.u32 %v4975, 7
        %v4977 = vsub.s32 %v4974, %v4976
        %v4978 = vrot.slane %v4971, %v4977
        %v4980 = vunpack.c.l.s4 1966171168
        %v4981 = vunpack.c.0.s8 %v4980
        %v4982 = vlaneseq
        %v4983 = vshrl.u32 %v4982, 7
        %v4984 = vsub.s32 %v4981, %v4983
        %v4985 = vrot.slane %v4458, %v4984
        %v4987 = vunpack.c.l.s4 1966171168
        %v4988 = vunpack.c.0.s8 %v4987
        %v4989 = vlaneseq
        %v4990 = vshrl.u32 %v4989, 7
        %v4991 = vsub.s32 %v4988, %v4990
        %v4992 = vrot.slane %v4985, %v4991
        %v4994 = vunpack.c.l.s4 1966171168
        %v4995 = vunpack.c.0.s8 %v4994
        %v4996 = vlaneseq
        %v4997 = vshrl.u32 %v4996, 7
        %v4998 = vsub.s32 %v4995, %v4997
        %v4999 = vrot.slane %v4459, %v4998
        %v5001 = vunpack.c.l.s4 1966171168
        %v5002 = vunpack.c.0.s8 %v5001
        %v5003 = vlaneseq
        %v5004 = vshrl.u32 %v5003, 7
        %v5005 = vsub.s32 %v5002, %v5004
        %v5006 = vrot.slane %v4999, %v5005
        %v5008 = vunpack.c.l.s4 1966171168
        %v5009 = vunpack.c.0.s8 %v5008
        %v5010 = vlaneseq
        %v5011 = vshrl.u32 %v5010, 7
        %v5012 = vsub.s32 %v5009, %v5011
        %v5013 = vrot.slane %v4474, %v5012
        %v5015 = vunpack.c.l.s4 1966171168
        %v5016 = vunpack.c.0.s8 %v5015
        %v5017 = vlaneseq
        %v5018 = vshrl.u32 %v5017, 7
        %v5019 = vsub.s32 %v5016, %v5018
        %v5020 = vrot.slane %v5013, %v5019
        %v5022 = vunpack.c.l.s4 1966171168
        %v5023 = vunpack.c.0.s8 %v5022
        %v5024 = vlaneseq
        %v5025 = vshrl.u32 %v5024, 7
        %v5026 = vsub.s32 %v5023, %v5025
        %v5027 = vrot.slane %v4481, %v5026
        %v5029 = vunpack.c.l.s4 1966171168
        %v5030 = vunpack.c.0.s8 %v5029
        %v5031 = vlaneseq
        %v5032 = vshrl.u32 %v5031, 7
        %v5033 = vsub.s32 %v5030, %v5032
        %v5034 = vrot.slane %v5027, %v5033
        %v5036 = vunpack.c.l.s4 1966171168
        %v5037 = vunpack.c.0.s8 %v5036
        %v5038 = vlaneseq
        %v5039 = vshrl.u32 %v5038, 7
        %v5040 = vsub.s32 %v5037, %v5039
        %v5041 = vrot.slane %v4482, %v5040
        %v5043 = vunpack.c.l.s4 1966171168
        %v5044 = vunpack.c.0.s8 %v5043
        %v5045 = vlaneseq
        %v5046 = vshrl.u32 %v5045, 7
        %v5047 = vsub.s32 %v5044, %v5046
        %v5048 = vrot.slane %v5041, %v5047
        %v5050 = vunpack.c.l.s4 1966171168
        %v5051 = vunpack.c.0.s8 %v5050
        %v5052 = vlaneseq
        %v5053 = vshrl.u32 %v5052, 7
        %v5054 = vsub.s32 %v5051, %v5053
        %v5055 = vrot.slane %v4483, %v5054
        %v5057 = vunpack.c.l.s4 1966171168
        %v5058 = vunpack.c.0.s8 %v5057
        %v5059 = vlaneseq
        %v5060 = vshrl.u32 %v5059, 7
        %v5061 = vsub.s32 %v5058, %v5060
        %v5062 = vrot.slane %v5055, %v5061
        %v5064 = vunpack.c.l.s4 1966171168
        %v5065 = vunpack.c.0.s8 %v5064
        %v5066 = vlaneseq
        %v5067 = vshrl.u32 %v5066, 7
        %v5068 = vsub.s32 %v5065, %v5067
        %v5069 = vrot.slane %v4498, %v5068
        %v5071 = vunpack.c.l.s4 1966171168
        %v5072 = vunpack.c.0.s8 %v5071
        %v5073 = vlaneseq
        %v5074 = vshrl.u32 %v5073, 7
        %v5075 = vsub.s32 %v5072, %v5074
        %v5076 = vrot.slane %v5069, %v5075
        %v5078 = vunpack.c.l.s4 1966171168
        %v5079 = vunpack.c.0.s8 %v5078
        %v5080 = vlaneseq
        %v5081 = vshrl.u32 %v5080, 7
        %v5082 = vsub.s32 %v5079, %v5081
        %v5083 = vrot.slane %v4505, %v5082
        %v5085 = vunpack.c.l.s4 1966171168
        %v5086 = vunpack.c.0.s8 %v5085
        %v5087 = vlaneseq
        %v5088 = vshrl.u32 %v5087, 7
        %v5089 = vsub.s32 %v5086, %v5088
        %v5090 = vrot.slane %v5083, %v5089
        %v5092 = vunpack.c.l.s4 1966171168
        %v5093 = vunpack.c.0.s8 %v5092
        %v5094 = vlaneseq
        %v5095 = vshrl.u32 %v5094, 7
        %v5096 = vsub.s32 %v5093, %v5095
        %v5097 = vrot.slane %v4506, %v5096
        %v5099 = vunpack.c.l.s4 1966171168
        %v5100 = vunpack.c.0.s8 %v5099
        %v5101 = vlaneseq
        %v5102 = vshrl.u32 %v5101, 7
        %v5103 = vsub.s32 %v5100, %v5102
        %v5104 = vrot.slane %v5097, %v5103
        %v5106 = vunpack.c.l.s4 1966171168
        %v5107 = vunpack.c.0.s8 %v5106
        %v5108 = vlaneseq
        %v5109 = vshrl.u32 %v5108, 7
        %v5110 = vsub.s32 %v5107, %v5109
        %v5111 = vrot.slane %v4507, %v5110
        %v5113 = vunpack.c.l.s4 1966171168
        %v5114 = vunpack.c.0.s8 %v5113
        %v5115 = vlaneseq
        %v5116 = vshrl.u32 %v5115, 7
        %v5117 = vsub.s32 %v5114, %v5116
        %v5118 = vrot.slane %v5111, %v5117
        %v5120 = vunpack.c.l.s4 1966171168
        %v5121 = vunpack.c.0.s8 %v5120
        %v5122 = vlaneseq
        %v5123 = vshrl.u32 %v5122, 7
        %v5124 = vsub.s32 %v5121, %v5123
        %v5125 = vrot.slane %v4522, %v5124
        %v5127 = vunpack.c.l.s4 1966171168
        %v5128 = vunpack.c.0.s8 %v5127
        %v5129 = vlaneseq
        %v5130 = vshrl.u32 %v5129, 7
        %v5131 = vsub.s32 %v5128, %v5130
        %v5132 = vrot.slane %v5125, %v5131
        %v5134 = vunpack.c.l.s4 1966171168
        %v5135 = vunpack.c.0.s8 %v5134
        %v5136 = vlaneseq
        %v5137 = vshrl.u32 %v5136, 7
        %v5138 = vsub.s32 %v5135, %v5137
        %v5139 = vrot.slane %v4529, %v5138
        %v5141 = vunpack.c.l.s4 1966171168
        %v5142 = vunpack.c.0.s8 %v5141
        %v5143 = vlaneseq
        %v5144 = vshrl.u32 %v5143, 7
        %v5145 = vsub.s32 %v5142, %v5144
        %v5146 = vrot.slane %v5139, %v5145
        %v5148 = vunpack.c.l.s4 1966171168
        %v5149 = vunpack.c.0.s8 %v5148
        %v5150 = vlaneseq
        %v5151 = vshrl.u32 %v5150, 7
        %v5152 = vsub.s32 %v5149, %v5151
        %v5153 = vrot.slane %v4530, %v5152
        %v5155 = vunpack.c.l.s4 1966171168
        %v5156 = vunpack.c.0.s8 %v5155
        %v5157 = vlaneseq
        %v5158 = vshrl.u32 %v5157, 7
        %v5159 = vsub.s32 %v5156, %v5158
        %v5160 = vrot.slane %v5153, %v5159
        %v5162 = vunpack.c.l.s4 1966171168
        %v5163 = vunpack.c.0.s8 %v5162
        %v5164 = vlaneseq
        %v5165 = vshrl.u32 %v5164, 7
        %v5166 = vsub.s32 %v5163, %v5165
        %v5167 = vrot.slane %v4531, %v5166
        %v5169 = vunpack.c.l.s4 1966171168
        %v5170 = vunpack.c.0.s8 %v5169
        %v5171 = vlaneseq
        %v5172 = vshrl.u32 %v5171, 7
        %v5173 = vsub.s32 %v5170, %v5172
        %v5174 = vrot.slane %v5167, %v5173
        %v5176 = vunpack.c.l.s4 1966171168
        %v5177 = vunpack.c.0.s8 %v5176
        %v5178 = vlaneseq
        %v5179 = vshrl.u32 %v5178, 7
        %v5180 = vsub.s32 %v5177, %v5179
        %v5181 = vrot.slane %v4546, %v5180
        %v5183 = vunpack.c.l.s4 1966171168
        %v5184 = vunpack.c.0.s8 %v5183
        %v5185 = vlaneseq
        %v5186 = vshrl.u32 %v5185, 7
        %v5187 = vsub.s32 %v5184, %v5186
        %v5188 = vrot.slane %v5181, %v5187
        %v5190 = vunpack.c.l.s4 1966171168
        %v5191 = vunpack.c.0.s8 %v5190
        %v5192 = vlaneseq
        %v5193 = vshrl.u32 %v5192, 7
        %v5194 = vsub.s32 %v5191, %v5193
        %v5195 = vrot.slane %v4553, %v5194
        %v5197 = vunpack.c.l.s4 1966171168
        %v5198 = vunpack.c.0.s8 %v5197
        %v5199 = vlaneseq
        %v5200 = vshrl.u32 %v5199, 7
        %v5201 = vsub.s32 %v5198, %v5200
        %v5202 = vrot.slane %v5195, %v5201
        %v5204 = vunpack.c.l.s4 1966171168
        %v5205 = vunpack.c.0.s8 %v5204
        %v5206 = vlaneseq
        %v5207 = vshrl.u32 %v5206, 7
        %v5208 = vsub.s32 %v5205, %v5207
        %v5209 = vrot.slane %v4554, %v5208
        %v5211 = vunpack.c.l.s4 1966171168
        %v5212 = vunpack.c.0.s8 %v5211
        %v5213 = vlaneseq
        %v5214 = vshrl.u32 %v5213, 7
        %v5215 = vsub.s32 %v5212, %v5214
        %v5216 = vrot.slane %v5209, %v5215
        %v5218 = vunpack.c.l.s4 1966171168
        %v5219 = vunpack.c.0.s8 %v5218
        %v5220 = vlaneseq
        %v5221 = vshrl.u32 %v5220, 7
        %v5222 = vsub.s32 %v5219, %v5221
        %v5223 = vrot.slane %v4555, %v5222
        %v5225 = vunpack.c.l.s4 1966171168
        %v5226 = vunpack.c.0.s8 %v5225
        %v5227 = vlaneseq
        %v5228 = vshrl.u32 %v5227, 7
        %v5229 = vsub.s32 %v5226, %v5228
        %v5230 = vrot.slane %v5223, %v5229
        %v5232 = vunpack.c.l.s4 1966171168
        %v5233 = vunpack.c.0.s8 %v5232
        %v5234 = vlaneseq
        %v5235 = vshrl.u32 %v5234, 7
        %v5236 = vsub.s32 %v5233, %v5235
        %v5237 = vrot.slane %v4570, %v5236
        %v5239 = vunpack.c.l.s4 1966171168
        %v5240 = vunpack.c.0.s8 %v5239
        %v5241 = vlaneseq
        %v5242 = vshrl.u32 %v5241, 7
        %v5243 = vsub.s32 %v5240, %v5242
        %v5244 = vrot.slane %v5237, %v5243
        %v5246 = vunpack.c.l.s4 1966171168
        %v5247 = vunpack.c.0.s8 %v5246
        %v5248 = vlaneseq
        %v5249 = vshrl.u32 %v5248, 7
        %v5250 = vsub.s32 %v5247, %v5249
        %v5251 = vrot.slane %v4577, %v5250
        %v5253 = vunpack.c.l.s4 1966171168
        %v5254 = vunpack.c.0.s8 %v5253
        %v5255 = vlaneseq
        %v5256 = vshrl.u32 %v5255, 7
        %v5257 = vsub.s32 %v5254, %v5256
        %v5258 = vrot.slane %v5251, %v5257
        %v5260 = vunpack.c.l.s4 1966171168
        %v5261 = vunpack.c.0.s8 %v5260
        %v5262 = vlaneseq
        %v5263 = vshrl.u32 %v5262, 7
        %v5264 = vsub.s32 %v5261, %v5263
        %v5265 = vrot.slane %v4578, %v5264
        %v5267 = vunpack.c.l.s4 1966171168
        %v5268 = vunpack.c.0.s8 %v5267
        %v5269 = vlaneseq
        %v5270 = vshrl.u32 %v5269, 7
        %v5271 = vsub.s32 %v5268, %v5270
        %v5272 = vrot.slane %v5265, %v5271
        %v5274 = vunpack.c.l.s4 1966171168
        %v5275 = vunpack.c.0.s8 %v5274
        %v5276 = vlaneseq
        %v5277 = vshrl.u32 %v5276, 7
        %v5278 = vsub.s32 %v5275, %v5277
        %v5279 = vrot.slane %v4579, %v5278
        %v5281 = vunpack.c.l.s4 1966171168
        %v5282 = vunpack.c.0.s8 %v5281
        %v5283 = vlaneseq
        %v5284 = vshrl.u32 %v5283, 7
        %v5285 = vsub.s32 %v5282, %v5284
        %v5286 = vrot.slane %v5279, %v5285
        %v5288 = vunpack.c.l.s4 1966171168
        %v5289 = vunpack.c.0.s8 %v5288
        %v5290 = vlaneseq
        %v5291 = vshrl.u32 %v5290, 7
        %v5292 = vsub.s32 %v5289, %v5291
        %v5293 = vrot.slane %v4594, %v5292
        %v5295 = vunpack.c.l.s4 1966171168
        %v5296 = vunpack.c.0.s8 %v5295
        %v5297 = vlaneseq
        %v5298 = vshrl.u32 %v5297, 7
        %v5299 = vsub.s32 %v5296, %v5298
        %v5300 = vrot.slane %v5293, %v5299
        %v5302 = vunpack.c.l.s4 1966171168
        %v5303 = vunpack.c.0.s8 %v5302
        %v5304 = vlaneseq
        %v5305 = vshrl.u32 %v5304, 7
        %v5306 = vsub.s32 %v5303, %v5305
        %v5307 = vrot.slane %v4601, %v5306
        %v5309 = vunpack.c.l.s4 1966171168
        %v5310 = vunpack.c.0.s8 %v5309
        %v5311 = vlaneseq
        %v5312 = vshrl.u32 %v5311, 7
        %v5313 = vsub.s32 %v5310, %v5312
        %v5314 = vrot.slane %v5307, %v5313
        %v5316 = vunpack.c.l.s4 1966171168
        %v5317 = vunpack.c.0.s8 %v5316
        %v5318 = vlaneseq
        %v5319 = vshrl.u32 %v5318, 7
        %v5320 = vsub.s32 %v5317, %v5319
        %v5321 = vrot.slane %v4602, %v5320
        %v5323 = vunpack.c.l.s4 1966171168
        %v5324 = vunpack.c.0.s8 %v5323
        %v5325 = vlaneseq
        %v5326 = vshrl.u32 %v5325, 7
        %v5327 = vsub.s32 %v5324, %v5326
        %v5328 = vrot.slane %v5321, %v5327
        %v5330 = vunpack.c.l.s4 1966171168
        %v5331 = vunpack.c.0.s8 %v5330
        %v5332 = vlaneseq
        %v5333 = vshrl.u32 %v5332, 7
        %v5334 = vsub.s32 %v5331, %v5333
        %v5335 = vrot.slane %v4603, %v5334
        %v5337 = vunpack.c.l.s4 1966171168
        %v5338 = vunpack.c.0.s8 %v5337
        %v5339 = vlaneseq
        %v5340 = vshrl.u32 %v5339, 7
        %v5341 = vsub.s32 %v5338, %v5340
        %v5342 = vrot.slane %v5335, %v5341
        %v5344 = vunpack.c.l.s4 1966171168
        %v5345 = vunpack.c.0.s8 %v5344
        %v5346 = vlaneseq
        %v5347 = vshrl.u32 %v5346, 7
        %v5348 = vsub.s32 %v5345, %v5347
        %v5349 = vrot.slane %v4618, %v5348
        %v5351 = vunpack.c.l.s4 1966171168
        %v5352 = vunpack.c.0.s8 %v5351
        %v5353 = vlaneseq
        %v5354 = vshrl.u32 %v5353, 7
        %v5355 = vsub.s32 %v5352, %v5354
        %v5356 = vrot.slane %v5349, %v5355
        %v5358 = vunpack.c.l.s4 1966171168
        %v5359 = vunpack.c.0.s8 %v5358
        %v5360 = vlaneseq
        %v5361 = vshrl.u32 %v5360, 7
        %v5362 = vsub.s32 %v5359, %v5361
        %v5363 = vrot.slane %v4625, %v5362
        %v5365 = vunpack.c.l.s4 1966171168
        %v5366 = vunpack.c.0.s8 %v5365
        %v5367 = vlaneseq
        %v5368 = vshrl.u32 %v5367, 7
        %v5369 = vsub.s32 %v5366, %v5368
        %v5370 = vrot.slane %v5363, %v5369
        %v5372 = vunpack.c.l.s4 1966171168
        %v5373 = vunpack.c.0.s8 %v5372
        %v5374 = vlaneseq
        %v5375 = vshrl.u32 %v5374, 7
        %v5376 = vsub.s32 %v5373, %v5375
        %v5377 = vrot.slane %v4626, %v5376
        %v5379 = vunpack.c.l.s4 1966171168
        %v5380 = vunpack.c.0.s8 %v5379
        %v5381 = vlaneseq
        %v5382 = vshrl.u32 %v5381, 7
        %v5383 = vsub.s32 %v5380, %v5382
        %v5384 = vrot.slane %v5377, %v5383
        %v5386 = vunpack.c.l.s4 1966171168
        %v5387 = vunpack.c.0.s8 %v5386
        %v5388 = vlaneseq
        %v5389 = vshrl.u32 %v5388, 7
        %v5390 = vsub.s32 %v5387, %v5389
        %v5391 = vrot.slane %v4627, %v5390
        %v5393 = vunpack.c.l.s4 1966171168
        %v5394 = vunpack.c.0.s8 %v5393
        %v5395 = vlaneseq
        %v5396 = vshrl.u32 %v5395, 7
        %v5397 = vsub.s32 %v5394, %v5396
        %v5398 = vrot.slane %v5391, %v5397
        %v5400 = vunpack.c.l.s4 1966171168
        %v5401 = vunpack.c.0.s8 %v5400
        %v5402 = vlaneseq
        %v5403 = vshrl.u32 %v5402, 7
        %v5404 = vsub.s32 %v5401, %v5403
        %v5405 = vrot.slane %v4642, %v5404
        %v5407 = vunpack.c.l.s4 1966171168
        %v5408 = vunpack.c.0.s8 %v5407
        %v5409 = vlaneseq
        %v5410 = vshrl.u32 %v5409, 7
        %v5411 = vsub.s32 %v5408, %v5410
        %v5412 = vrot.slane %v5405, %v5411
        %v5414 = vunpack.c.l.s4 1966171168
        %v5415 = vunpack.c.0.s8 %v5414
        %v5416 = vlaneseq
        %v5417 = vshrl.u32 %v5416, 7
        %v5418 = vsub.s32 %v5415, %v5417
        %v5419 = vrot.slane %v4649, %v5418
        %v5421 = vunpack.c.l.s4 1966171168
        %v5422 = vunpack.c.0.s8 %v5421
        %v5423 = vlaneseq
        %v5424 = vshrl.u32 %v5423, 7
        %v5425 = vsub.s32 %v5422, %v5424
        %v5426 = vrot.slane %v5419, %v5425
        %v5428 = vunpack.c.l.s4 1966171168
        %v5429 = vunpack.c.0.s8 %v5428
        %v5430 = vlaneseq
        %v5431 = vshrl.u32 %v5430, 7
        %v5432 = vsub.s32 %v5429, %v5431
        %v5433 = vrot.slane %v4650, %v5432
        %v5435 = vunpack.c.l.s4 1966171168
        %v5436 = vunpack.c.0.s8 %v5435
        %v5437 = vlaneseq
        %v5438 = vshrl.u32 %v5437, 7
        %v5439 = vsub.s32 %v5436, %v5438
        %v5440 = vrot.slane %v5433, %v5439
        %v5442 = vunpack.c.l.s4 1966171168
        %v5443 = vunpack.c.0.s8 %v5442
        %v5444 = vlaneseq
        %v5445 = vshrl.u32 %v5444, 7
        %v5446 = vsub.s32 %v5443, %v5445
        %v5447 = vrot.slane %v4651, %v5446
        %v5449 = vunpack.c.l.s4 1966171168
        %v5450 = vunpack.c.0.s8 %v5449
        %v5451 = vlaneseq
        %v5452 = vshrl.u32 %v5451, 7
        %v5453 = vsub.s32 %v5450, %v5452
        %v5454 = vrot.slane %v5447, %v5453
        %v5456 = vunpack.c.l.s4 1966171168
        %v5457 = vunpack.c.0.s8 %v5456
        %v5458 = vlaneseq
        %v5459 = vshrl.u32 %v5458, 7
        %v5460 = vsub.s32 %v5457, %v5459
        %v5461 = vrot.slane %v4666, %v5460
        %v5463 = vunpack.c.l.s4 1966171168
        %v5464 = vunpack.c.0.s8 %v5463
        %v5465 = vlaneseq
        %v5466 = vshrl.u32 %v5465, 7
        %v5467 = vsub.s32 %v5464, %v5466
        %v5468 = vrot.slane %v5461, %v5467
        %v5470 = vunpack.c.l.s4 1966171168
        %v5471 = vunpack.c.0.s8 %v5470
        %v5472 = vlaneseq
        %v5473 = vshrl.u32 %v5472, 7
        %v5474 = vsub.s32 %v5471, %v5473
        %v5475 = vrot.slane %v4673, %v5474
        %v5477 = vunpack.c.l.s4 1966171168
        %v5478 = vunpack.c.0.s8 %v5477
        %v5479 = vlaneseq
        %v5480 = vshrl.u32 %v5479, 7
        %v5481 = vsub.s32 %v5478, %v5480
        %v5482 = vrot.slane %v5475, %v5481
        %v5484 = vunpack.c.l.s4 1966171168
        %v5485 = vunpack.c.0.s8 %v5484
        %v5486 = vlaneseq
        %v5487 = vshrl.u32 %v5486, 7
        %v5488 = vsub.s32 %v5485, %v5487
        %v5489 = vrot.slane %v4674, %v5488
        %v5491 = vunpack.c.l.s4 1966171168
        %v5492 = vunpack.c.0.s8 %v5491
        %v5493 = vlaneseq
        %v5494 = vshrl.u32 %v5493, 7
        %v5495 = vsub.s32 %v5492, %v5494
        %v5496 = vrot.slane %v5489, %v5495
        %v5498 = vunpack.c.l.s4 1966171168
        %v5499 = vunpack.c.0.s8 %v5498
        %v5500 = vlaneseq
        %v5501 = vshrl.u32 %v5500, 7
        %v5502 = vsub.s32 %v5499, %v5501
        %v5503 = vrot.slane %v4675, %v5502
        %v5505 = vunpack.c.l.s4 1966171168
        %v5506 = vunpack.c.0.s8 %v5505
        %v5507 = vlaneseq
        %v5508 = vshrl.u32 %v5507, 7
        %v5509 = vsub.s32 %v5506, %v5508
        %v5510 = vrot.slane %v5503, %v5509
        %v5512 = vunpack.c.l.s4 1966171168
        %v5513 = vunpack.c.0.s8 %v5512
        %v5514 = vlaneseq
        %v5515 = vshrl.u32 %v5514, 7
        %v5516 = vsub.s32 %v5513, %v5515
        %v5517 = vrot.slane %v4690, %v5516
        %v5519 = vunpack.c.l.s4 1966171168
        %v5520 = vunpack.c.0.s8 %v5519
        %v5521 = vlaneseq
        %v5522 = vshrl.u32 %v5521, 7
        %v5523 = vsub.s32 %v5520, %v5522
        %v5524 = vrot.slane %v5517, %v5523
        %v5526 = vunpack.c.l.s4 1966171168
        %v5527 = vunpack.c.0.s8 %v5526
        %v5528 = vlaneseq
        %v5529 = vshrl.u32 %v5528, 7
        %v5530 = vsub.s32 %v5527, %v5529
        %v5531 = vrot.slane %v4697, %v5530
        %v5533 = vunpack.c.l.s4 1966171168
        %v5534 = vunpack.c.0.s8 %v5533
        %v5535 = vlaneseq
        %v5536 = vshrl.u32 %v5535, 7
        %v5537 = vsub.s32 %v5534, %v5536
        %v5538 = vrot.slane %v5531, %v5537
        %v5540 = vunpack.c.l.s4 1966171168
        %v5541 = vunpack.c.0.s8 %v5540
        %v5542 = vlaneseq
        %v5543 = vshrl.u32 %v5542, 7
        %v5544 = vsub.s32 %v5541, %v5543
        %v5545 = vrot.slane %v4698, %v5544
        %v5547 = vunpack.c.l.s4 1966171168
        %v5548 = vunpack.c.0.s8 %v5547
        %v5549 = vlaneseq
        %v5550 = vshrl.u32 %v5549, 7
        %v5551 = vsub.s32 %v5548, %v5550
        %v5552 = vrot.slane %v5545, %v5551
        %v5554 = vunpack.c.l.s4 1966171168
        %v5555 = vunpack.c.0.s8 %v5554
        %v5556 = vlaneseq
        %v5557 = vshrl.u32 %v5556, 7
        %v5558 = vsub.s32 %v5555, %v5557
        %v5559 = vrot.slane %v4699, %v5558
        %v5561 = vunpack.c.l.s4 1966171168
        %v5562 = vunpack.c.0.s8 %v5561
        %v5563 = vlaneseq
        %v5564 = vshrl.u32 %v5563, 7
        %v5565 = vsub.s32 %v5562, %v5564
        %v5566 = vrot.slane %v5559, %v5565
        %v5568 = vunpack.c.l.s4 1966171168
        %v5569 = vunpack.c.0.s8 %v5568
        %v5570 = vlaneseq
        %v5571 = vshrl.u32 %v5570, 7
        %v5572 = vsub.s32 %v5569, %v5571
        %v5573 = vrot.slane %v4714, %v5572
        %v5575 = vunpack.c.l.s4 1966171168
        %v5576 = vunpack.c.0.s8 %v5575
        %v5577 = vlaneseq
        %v5578 = vshrl.u32 %v5577, 7
        %v5579 = vsub.s32 %v5576, %v5578
        %v5580 = vrot.slane %v5573, %v5579
        %v5582 = vunpack.c.l.s4 1966171168
        %v5583 = vunpack.c.0.s8 %v5582
        %v5584 = vlaneseq
        %v5585 = vshrl.u32 %v5584, 7
        %v5586 = vsub.s32 %v5583, %v5585
        %v5587 = vrot.slane %v4721, %v5586
        %v5589 = vunpack.c.l.s4 1966171168
        %v5590 = vunpack.c.0.s8 %v5589
        %v5591 = vlaneseq
        %v5592 = vshrl.u32 %v5591, 7
        %v5593 = vsub.s32 %v5590, %v5592
        %v5594 = vrot.slane %v5587, %v5593
        %v5596 = vunpack.c.l.s4 1966171168
        %v5597 = vunpack.c.0.s8 %v5596
        %v5598 = vlaneseq
        %v5599 = vshrl.u32 %v5598, 7
        %v5600 = vsub.s32 %v5597, %v5599
        %v5601 = vrot.slane %v4722, %v5600
        %v5603 = vunpack.c.l.s4 1966171168
        %v5604 = vunpack.c.0.s8 %v5603
        %v5605 = vlaneseq
        %v5606 = vshrl.u32 %v5605, 7
        %v5607 = vsub.s32 %v5604, %v5606
        %v5608 = vrot.slane %v5601, %v5607
        %v5610 = vunpack.c.l.s4 1966171168
        %v5611 = vunpack.c.0.s8 %v5610
        %v5612 = vlaneseq
        %v5613 = vshrl.u32 %v5612, 7
        %v5614 = vsub.s32 %v5611, %v5613
        %v5615 = vrot.slane %v4723, %v5614
        %v5617 = vunpack.c.l.s4 1966171168
        %v5618 = vunpack.c.0.s8 %v5617
        %v5619 = vlaneseq
        %v5620 = vshrl.u32 %v5619, 7
        %v5621 = vsub.s32 %v5618, %v5620
        %v5622 = vrot.slane %v5615, %v5621
        %v5623 = vunpack.c.l.b16 %v4740
        %v5624 = vunpack.c.l.b16 %v4754
        %v5625 = vunpack.c.l.b16 %v4768
        %v5626 = vunpack.c.l.b16 %v4782
        %v5627 = vunpack.c.l.b16 %v4796
        %v5628 = vunpack.c.l.b16 %v4810
        %v5629 = vunpack.c.l.b16 %v4824
        %v5630 = vunpack.c.l.b16 %v4838
        %v5631 = vunpack.c.l.b16 %v4852
        %v5632 = vunpack.c.l.b16 %v4866
        %v5633 = vunpack.c.l.b16 %v4880
        %v5634 = vunpack.c.l.b16 %v4894
        %v5635 = vunpack.c.l.b16 %v4908
        %v5636 = vunpack.c.l.b16 %v4922
        %v5637 = vunpack.c.l.b16 %v4936
        %v5638 = vunpack.c.l.b16 %v4950
        %v5639 = vunpack.c.l.b16 %v4964
        %v5640 = vunpack.c.l.b16 %v4978
        %v5641 = vunpack.c.l.b16 %v4992
        %v5642 = vunpack.c.l.b16 %v5006
        %v5643 = vunpack.c.l.b16 %v5020
        %v5644 = vunpack.c.l.b16 %v5034
        %v5645 = vunpack.c.l.b16 %v5048
        %v5646 = vunpack.c.l.b16 %v5062
        %v5647 = vunpack.c.l.b16 %v5076
        %v5648 = vunpack.c.l.b16 %v5090
        %v5649 = vunpack.c.l.b16 %v5104
        %v5650 = vunpack.c.l.b16 %v5118
        %v5651 = vunpack.c.l.b16 %v5132
        %v5652 = vunpack.c.l.b16 %v5146
        %v5653 = vunpack.c.l.b16 %v5160
        %v5654 = vunpack.c.l.b16 %v5174
        %v5655 = vunpack.c.l.b16 %v5188
        %v5656 = vunpack.c.l.b16 %v5202
        %v5657 = vunpack.c.l.b16 %v5216
        %v5658 = vunpack.c.l.b16 %v5230
        %v5659 = vunpack.c.l.b16 %v5244
        %v5660 = vunpack.c.l.b16 %v5258
        %v5661 = vunpack.c.l.b16 %v5272
        %v5662 = vunpack.c.l.b16 %v5286
        %v5663 = vunpack.c.l.b16 %v5300
        %v5664 = vunpack.c.l.b16 %v5314
        %v5665 = vunpack.c.l.b16 %v5328
        %v5666 = vunpack.c.l.b16 %v5342
        %v5667 = vunpack.c.l.b16 %v5356
        %v5668 = vunpack.c.l.b16 %v5370
        %v5669 = vunpack.c.l.b16 %v5384
        %v5670 = vunpack.c.l.b16 %v5398
        %v5671 = vunpack.c.l.b16 %v5412
        %v5672 = vunpack.c.l.b16 %v5426
        %v5673 = vunpack.c.l.b16 %v5440
        %v5674 = vunpack.c.l.b16 %v5454
        %v5675 = vunpack.c.l.b16 %v5468
        %v5676 = vunpack.c.l.b16 %v5482
        %v5677 = vunpack.c.l.b16 %v5496
        %v5678 = vunpack.c.l.b16 %v5510
        %v5679 = vunpack.c.l.b16 %v5524
        %v5680 = vunpack.c.l.b16 %v5538
        %v5681 = vunpack.c.l.b16 %v5552
        %v5682 = vunpack.c.l.b16 %v5566
        %v5683 = vunpack.c.l.b16 %v5580
        %v5684 = vunpack.c.l.b16 %v5594
        %v5685 = vunpack.c.l.b16 %v5608
        %v5686 = vunpack.c.l.b16 %v5622
        %v5687 = vrot.slane %v5624, 7
        %vm5688 = vcmask 1041409
        %v5689 = vsel %vm5688, %v5687, %v5623
        %v5690 = vrot.slane %v5625, 6
        %vm5691 = vcmask 1042434
        %v5692 = vsel %vm5691, %v5690, %v5689
        %v5693 = vrot.slane %v5626, 5
        %vm5694 = vcmask 1043459
        %v5695 = vsel %vm5694, %v5693, %v5692
        %v5696 = vrot.slane %v5627, 4
        %vm5697 = vcmask 1044484
        %v5698 = vsel %vm5697, %v5696, %v5695
        %v5699 = vrot.slane %v5628, 3
        %vm5700 = vcmask 1045509
        %v5701 = vsel %vm5700, %v5699, %v5698
        %v5702 = vrot.slane %v5629, 2
        %vm5703 = vcmask 1046534
        %v5704 = vsel %vm5703, %v5702, %v5701
        %v5705 = vrot.slane %v5630, 1
        %vm5706 = vcmask 1047559
        %v5707 = vsel %vm5706, %v5705, %v5704
        %v5708 = vrot.slane %v5632, 7
        %v5709 = vsel %vm5688, %v5708, %v5631
        %v5710 = vrot.slane %v5633, 6
        %v5711 = vsel %vm5691, %v5710, %v5709
        %v5712 = vrot.slane %v5634, 5
        %v5713 = vsel %vm5694, %v5712, %v5711
        %v5714 = vrot.slane %v5635, 4
        %v5715 = vsel %vm5697, %v5714, %v5713
        %v5716 = vrot.slane %v5636, 3
        %v5717 = vsel %vm5700, %v5716, %v5715
        %v5718 = vrot.slane %v5637, 2
        %v5719 = vsel %vm5703, %v5718, %v5717
        %v5720 = vrot.slane %v5638, 1
        %v5721 = vsel %vm5706, %v5720, %v5719
        %v5722 = vrot.slane %v5640, 7
        %v5723 = vsel %vm5688, %v5722, %v5639
        %v5724 = vrot.slane %v5641, 6
        %v5725 = vsel %vm5691, %v5724, %v5723
        %v5726 = vrot.slane %v5642, 5
        %v5727 = vsel %vm5694, %v5726, %v5725
        %v5728 = vrot.slane %v5643, 4
        %v5729 = vsel %vm5697, %v5728, %v5727
        %v5730 = vrot.slane %v5644, 3
        %v5731 = vsel %vm5700, %v5730, %v5729
        %v5732 = vrot.slane %v5645, 2
        %v5733 = vsel %vm5703, %v5732, %v5731
        %v5734 = vrot.slane %v5646, 1
        %v5735 = vsel %vm5706, %v5734, %v5733
        %v5736 = vrot.slane %v5648, 7
        %v5737 = vsel %vm5688, %v5736, %v5647
        %v5738 = vrot.slane %v5649, 6
        %v5739 = vsel %vm5691, %v5738, %v5737
        %v5740 = vrot.slane %v5650, 5
        %v5741 = vsel %vm5694, %v5740, %v5739
        %v5742 = vrot.slane %v5651, 4
        %v5743 = vsel %vm5697, %v5742, %v5741
        %v5744 = vrot.slane %v5652, 3
        %v5745 = vsel %vm5700, %v5744, %v5743
        %v5746 = vrot.slane %v5653, 2
        %v5747 = vsel %vm5703, %v5746, %v5745
        %v5748 = vrot.slane %v5654, 1
        %v5749 = vsel %vm5706, %v5748, %v5747
        %v5750 = vrot.slane %v5656, 7
        %v5751 = vsel %vm5688, %v5750, %v5655
        %v5752 = vrot.slane %v5657, 6
        %v5753 = vsel %vm5691, %v5752, %v5751
        %v5754 = vrot.slane %v5658, 5
        %v5755 = vsel %vm5694, %v5754, %v5753
        %v5756 = vrot.slane %v5659, 4
        %v5757 = vsel %vm5697, %v5756, %v5755
        %v5758 = vrot.slane %v5660, 3
        %v5759 = vsel %vm5700, %v5758, %v5757
        %v5760 = vrot.slane %v5661, 2
        %v5761 = vsel %vm5703, %v5760, %v5759
        %v5762 = vrot.slane %v5662, 1
        %v5763 = vsel %vm5706, %v5762, %v5761
        %v5764 = vrot.slane %v5664, 7
        %v5765 = vsel %vm5688, %v5764, %v5663
        %v5766 = vrot.slane %v5665, 6
        %v5767 = vsel %vm5691, %v5766, %v5765
        %v5768 = vrot.slane %v5666, 5
        %v5769 = vsel %vm5694, %v5768, %v5767
        %v5770 = vrot.slane %v5667, 4
        %v5771 = vsel %vm5697, %v5770, %v5769
        %v5772 = vrot.slane %v5668, 3
        %v5773 = vsel %vm5700, %v5772, %v5771
        %v5774 = vrot.slane %v5669, 2
        %v5775 = vsel %vm5703, %v5774, %v5773
        %v5776 = vrot.slane %v5670, 1
        %v5777 = vsel %vm5706, %v5776, %v5775
        %v5778 = vrot.slane %v5672, 7
        %v5779 = vsel %vm5688, %v5778, %v5671
        %v5780 = vrot.slane %v5673, 6
        %v5781 = vsel %vm5691, %v5780, %v5779
        %v5782 = vrot.slane %v5674, 5
        %v5783 = vsel %vm5694, %v5782, %v5781
        %v5784 = vrot.slane %v5675, 4
        %v5785 = vsel %vm5697, %v5784, %v5783
        %v5786 = vrot.slane %v5676, 3
        %v5787 = vsel %vm5700, %v5786, %v5785
        %v5788 = vrot.slane %v5677, 2
        %v5789 = vsel %vm5703, %v5788, %v5787
        %v5790 = vrot.slane %v5678, 1
        %v5791 = vsel %vm5706, %v5790, %v5789
        %v5792 = vrot.slane %v5680, 7
        %v5793 = vsel %vm5688, %v5792, %v5679
        %v5794 = vrot.slane %v5681, 6
        %v5795 = vsel %vm5691, %v5794, %v5793
        %v5796 = vrot.slane %v5682, 5
        %v5797 = vsel %vm5694, %v5796, %v5795
        %v5798 = vrot.slane %v5683, 4
        %v5799 = vsel %vm5697, %v5798, %v5797
        %v5800 = vrot.slane %v5684, 3
        %v5801 = vsel %vm5700, %v5800, %v5799
        %v5802 = vrot.slane %v5685, 2
        %v5803 = vsel %vm5703, %v5802, %v5801
        %v5804 = vrot.slane %v5686, 1
        %v5805 = vsel %vm5706, %v5804, %v5803
        %v5806 = vpack.c.b16 %v5721, %v5707
        %v5807 = vpack.c.b16 %v5749, %v5735
        %v5808 = vpack.c.b16 %v5777, %v5763
        %v5809 = vpack.c.b16 %v5805, %v5791
        %v5812 = vunpack.c.l.b16 %v4725
        %v5813 = vunpack.c.l.b16 %v4726
        %v5814 = vpack.c.b16 %v5813, %v5812
        %v5817 = vsel %vm425, %v5806, 0
        %v5820 = vsel %vm425, %v5807, 0
        %v5823 = vsel %vm425, %v5808, 0
        %v5826 = vsel %vm425, %v5809, 0
        %5828 = vmatprep.subr.bf16.mxu0 0
        %5829 = vmatpush1.bf16.msra.mxu0 %v5814
        %5830 = vmatprep.subr.bf16.mxu0 0
        %5831 = vmatpush1.bf16.msra.mxu0 0
        %5832 = vmatprep.subr.bf16.mxu0 0
        %5833 = vmatpush1.bf16.msra.mxu0 0
        %5834 = vmatprep.subr.bf16.mxu0 0
        %5835 = vmatpush1.bf16.msra.mxu0 0
        %5836 = vmatprep.subr.bf16.mxu0 0
        %5837 = vmatpush1.bf16.msra.mxu0 0
        %5838 = vmatprep.subr.bf16.mxu0 0
        %5839 = vmatpush1.bf16.msra.mxu0 0
        %5840 = vmatprep.subr.bf16.mxu0 0
        %5841 = vmatpush1.bf16.msra.mxu0 0
        %5842 = vmatprep.subr.bf16.mxu0 0
        %5843 = vmatpush1.bf16.msra.mxu0 0
        %5844 = vmatprep.subr.bf16.mxu0 0
        %5845 = vmatpush1.bf16.msra.mxu0 0
        %5846 = vmatprep.subr.bf16.mxu0 0
        %5847 = vmatpush1.bf16.msra.mxu0 0
        %5848 = vmatprep.subr.bf16.mxu0 0
        %5849 = vmatpush1.bf16.msra.mxu0 0
        %5850 = vmatprep.subr.bf16.mxu0 0
        %5851 = vmatpush1.bf16.msra.mxu0 0
        %5852 = vmatprep.subr.bf16.mxu0 0
        %5853 = vmatpush1.bf16.msra.mxu0 0
        %5854 = vmatprep.subr.bf16.mxu0 0
        %5855 = vmatpush1.bf16.msra.mxu0 0
        %5856 = vmatprep.subr.bf16.mxu0 0
        %5857 = vmatpush1.bf16.msra.mxu0 0
        %5858 = vmatprep.subr.bf16.mxu0 0
        %5859 = vmatpush1.bf16.msra.mxu0 0
        %5860 = vmatprep.mubr.bf16.mxu0 0
        %5861 = vmatmul.mubr.bf16.gmra.mrb[0].mxu0 %v5817
        %v5862 = vpop.f32.mrb[0].mxu0
        %v5863 = vadd.f32 0.0, %v5862
        %v5864 = vpop.f32.mrb[0].mxu0
        %v5865 = vpop.f32.mrb[0].mxu0
        %v5866 = vadd.f32 0.0, %v5865
        %v5867 = vpop.f32.mrb[0].mxu0
        %5868 = vmatprep.mubr.bf16.mxu0 0
        %5869 = vmatmul.mubr.bf16.gmra.mrb[0].mxu0 %v5820
        %v5870 = vpop.f32.mrb[0].mxu0
        %v5871 = vadd.f32 0.0, %v5870
        %v5872 = vpop.f32.mrb[0].mxu0
        %v5873 = vpop.f32.mrb[0].mxu0
        %v5874 = vadd.f32 0.0, %v5873
        %v5875 = vpop.f32.mrb[0].mxu0
        %5876 = vmatprep.mubr.bf16.mxu0 0
        %5877 = vmatmul.mubr.bf16.gmra.mrb[0].mxu0 %v5823
        %v5878 = vpop.f32.mrb[0].mxu0
        %v5879 = vadd.f32 0.0, %v5878
        %v5880 = vpop.f32.mrb[0].mxu0
        %v5881 = vpop.f32.mrb[0].mxu0
        %v5882 = vadd.f32 0.0, %v5881
        %v5883 = vpop.f32.mrb[0].mxu0
        %5884 = vmatprep.mubr.bf16.mxu0 0
        %5885 = vmatmul.mubr.bf16.gmra.mrb[0].mxu0 %v5826
        %v5886 = vpop.f32.mrb[0].mxu0
        %v5887 = vadd.f32 0.0, %v5886
        %v5888 = vpop.f32.mrb[0].mxu0
        %v5889 = vpop.f32.mrb[0].mxu0
        %v5890 = vadd.f32 0.0, %v5889
        %v5891 = vpop.f32.mrb[0].mxu0
        %5892 = vdwg.mxu0
        %v5957 = vunpack.c.l.b16 %v4276
        %v5958 = vunpack.c.l.b16 %v4277
        %v5959 = vunpack.c.l.b16 %v4278
        %v5960 = vunpack.c.l.b16 %v4279
        %v5961 = vunpack.c.l.b16 %v4280
        %v5962 = vunpack.c.l.b16 %v4281
        %v5963 = vunpack.c.l.b16 %v4282
        %v5964 = vunpack.c.l.b16 %v4283
        %v5965 = vunpack.c.l.b16 %v4284
        %v5966 = vunpack.c.l.b16 %v4285
        %v5967 = vunpack.c.l.b16 %v4286
        %v5968 = vunpack.c.l.b16 %v4287
        %v5969 = vunpack.c.l.b16 %v4288
        %v5970 = vunpack.c.l.b16 %v4289
        %v5971 = vunpack.c.l.b16 %v4290
        %v5972 = vunpack.c.l.b16 %v4291
        %v5973 = vunpack.c.l.b16 %v4292
        %v5974 = vunpack.c.l.b16 %v4293
        %v5975 = vunpack.c.l.b16 %v4294
        %v5976 = vunpack.c.l.b16 %v4295
        %v5977 = vunpack.c.l.b16 %v4296
        %v5978 = vunpack.c.l.b16 %v4297
        %v5979 = vunpack.c.l.b16 %v4298
        %v5980 = vunpack.c.l.b16 %v4299
        %v5981 = vunpack.c.l.b16 %v4300
        %v5982 = vunpack.c.l.b16 %v4301
        %v5983 = vunpack.c.l.b16 %v4302
        %v5984 = vunpack.c.l.b16 %v4303
        %v5985 = vunpack.c.l.b16 %v4304
        %v5986 = vunpack.c.l.b16 %v4305
        %v5987 = vunpack.c.l.b16 %v4306
        %v5988 = vunpack.c.l.b16 %v4307
        %v5989 = vunpack.c.l.b16 %v4308
        %v5990 = vunpack.c.l.b16 %v4309
        %v5991 = vunpack.c.l.b16 %v4310
        %v5992 = vunpack.c.l.b16 %v4311
        %v5993 = vunpack.c.l.b16 %v4312
        %v5994 = vunpack.c.l.b16 %v4313
        %v5995 = vunpack.c.l.b16 %v4314
        %v5996 = vunpack.c.l.b16 %v4315
        %v5997 = vunpack.c.l.b16 %v4316
        %v5998 = vunpack.c.l.b16 %v4317
        %v5999 = vunpack.c.l.b16 %v4318
        %v6000 = vunpack.c.l.b16 %v4319
        %v6001 = vunpack.c.l.b16 %v4320
        %v6002 = vunpack.c.l.b16 %v4321
        %v6003 = vunpack.c.l.b16 %v4322
        %v6004 = vunpack.c.l.b16 %v4323
        %v6005 = vunpack.c.l.b16 %v4324
        %v6006 = vunpack.c.l.b16 %v4325
        %v6007 = vunpack.c.l.b16 %v4326
        %v6008 = vunpack.c.l.b16 %v4327
        %v6009 = vunpack.c.l.b16 %v4328
        %v6010 = vunpack.c.l.b16 %v4329
        %v6011 = vunpack.c.l.b16 %v4330
        %v6012 = vunpack.c.l.b16 %v4331
        %v6013 = vunpack.c.l.b16 %v4332
        %v6014 = vunpack.c.l.b16 %v4333
        %v6015 = vunpack.c.l.b16 %v4334
        %v6016 = vunpack.c.l.b16 %v4335
        %v6017 = vunpack.c.l.b16 %v4336
        %v6018 = vunpack.c.l.b16 %v4337
        %v6019 = vunpack.c.l.b16 %v4338
        %v6020 = vunpack.c.l.b16 %v4339
        %v6021 = vrot.slane %v5958, 7
        %v6022 = vsel %vm5688, %v6021, %v5957
        %v6023 = vrot.slane %v5959, 6
        %v6024 = vsel %vm5691, %v6023, %v6022
        %v6025 = vrot.slane %v5960, 5
        %v6026 = vsel %vm5694, %v6025, %v6024
        %v6027 = vrot.slane %v5961, 4
        %v6028 = vsel %vm5697, %v6027, %v6026
        %v6029 = vrot.slane %v5962, 3
        %v6030 = vsel %vm5700, %v6029, %v6028
        %v6031 = vrot.slane %v5963, 2
        %v6032 = vsel %vm5703, %v6031, %v6030
        %v6033 = vrot.slane %v5964, 1
        %v6034 = vsel %vm5706, %v6033, %v6032
        %v6035 = vrot.slane %v5966, 7
        %v6036 = vsel %vm5688, %v6035, %v5965
        %v6037 = vrot.slane %v5967, 6
        %v6038 = vsel %vm5691, %v6037, %v6036
        %v6039 = vrot.slane %v5968, 5
        %v6040 = vsel %vm5694, %v6039, %v6038
        %v6041 = vrot.slane %v5969, 4
        %v6042 = vsel %vm5697, %v6041, %v6040
        %v6043 = vrot.slane %v5970, 3
        %v6044 = vsel %vm5700, %v6043, %v6042
        %v6045 = vrot.slane %v5971, 2
        %v6046 = vsel %vm5703, %v6045, %v6044
        %v6047 = vrot.slane %v5972, 1
        %v6048 = vsel %vm5706, %v6047, %v6046
        %v6049 = vrot.slane %v5974, 7
        %v6050 = vsel %vm5688, %v6049, %v5973
        %v6051 = vrot.slane %v5975, 6
        %v6052 = vsel %vm5691, %v6051, %v6050
        %v6053 = vrot.slane %v5976, 5
        %v6054 = vsel %vm5694, %v6053, %v6052
        %v6055 = vrot.slane %v5977, 4
        %v6056 = vsel %vm5697, %v6055, %v6054
        %v6057 = vrot.slane %v5978, 3
        %v6058 = vsel %vm5700, %v6057, %v6056
        %v6059 = vrot.slane %v5979, 2
        %v6060 = vsel %vm5703, %v6059, %v6058
        %v6061 = vrot.slane %v5980, 1
        %v6062 = vsel %vm5706, %v6061, %v6060
        %v6063 = vrot.slane %v5982, 7
        %v6064 = vsel %vm5688, %v6063, %v5981
        %v6065 = vrot.slane %v5983, 6
        %v6066 = vsel %vm5691, %v6065, %v6064
        %v6067 = vrot.slane %v5984, 5
        %v6068 = vsel %vm5694, %v6067, %v6066
        %v6069 = vrot.slane %v5985, 4
        %v6070 = vsel %vm5697, %v6069, %v6068
        %v6071 = vrot.slane %v5986, 3
        %v6072 = vsel %vm5700, %v6071, %v6070
        %v6073 = vrot.slane %v5987, 2
        %v6074 = vsel %vm5703, %v6073, %v6072
        %v6075 = vrot.slane %v5988, 1
        %v6076 = vsel %vm5706, %v6075, %v6074
        %v6077 = vrot.slane %v5990, 7
        %v6078 = vsel %vm5688, %v6077, %v5989
        %v6079 = vrot.slane %v5991, 6
        %v6080 = vsel %vm5691, %v6079, %v6078
        %v6081 = vrot.slane %v5992, 5
        %v6082 = vsel %vm5694, %v6081, %v6080
        %v6083 = vrot.slane %v5993, 4
        %v6084 = vsel %vm5697, %v6083, %v6082
        %v6085 = vrot.slane %v5994, 3
        %v6086 = vsel %vm5700, %v6085, %v6084
        %v6087 = vrot.slane %v5995, 2
        %v6088 = vsel %vm5703, %v6087, %v6086
        %v6089 = vrot.slane %v5996, 1
        %v6090 = vsel %vm5706, %v6089, %v6088
        %v6091 = vrot.slane %v5998, 7
        %v6092 = vsel %vm5688, %v6091, %v5997
        %v6093 = vrot.slane %v5999, 6
        %v6094 = vsel %vm5691, %v6093, %v6092
        %v6095 = vrot.slane %v6000, 5
        %v6096 = vsel %vm5694, %v6095, %v6094
        %v6097 = vrot.slane %v6001, 4
        %v6098 = vsel %vm5697, %v6097, %v6096
        %v6099 = vrot.slane %v6002, 3
        %v6100 = vsel %vm5700, %v6099, %v6098
        %v6101 = vrot.slane %v6003, 2
        %v6102 = vsel %vm5703, %v6101, %v6100
        %v6103 = vrot.slane %v6004, 1
        %v6104 = vsel %vm5706, %v6103, %v6102
        %v6105 = vrot.slane %v6006, 7
        %v6106 = vsel %vm5688, %v6105, %v6005
        %v6107 = vrot.slane %v6007, 6
        %v6108 = vsel %vm5691, %v6107, %v6106
        %v6109 = vrot.slane %v6008, 5
        %v6110 = vsel %vm5694, %v6109, %v6108
        %v6111 = vrot.slane %v6009, 4
        %v6112 = vsel %vm5697, %v6111, %v6110
        %v6113 = vrot.slane %v6010, 3
        %v6114 = vsel %vm5700, %v6113, %v6112
        %v6115 = vrot.slane %v6011, 2
        %v6116 = vsel %vm5703, %v6115, %v6114
        %v6117 = vrot.slane %v6012, 1
        %v6118 = vsel %vm5706, %v6117, %v6116
        %v6119 = vrot.slane %v6014, 7
        %v6120 = vsel %vm5688, %v6119, %v6013
        %v6121 = vrot.slane %v6015, 6
        %v6122 = vsel %vm5691, %v6121, %v6120
        %v6123 = vrot.slane %v6016, 5
        %v6124 = vsel %vm5694, %v6123, %v6122
        %v6125 = vrot.slane %v6017, 4
        %v6126 = vsel %vm5697, %v6125, %v6124
        %v6127 = vrot.slane %v6018, 3
        %v6128 = vsel %vm5700, %v6127, %v6126
        %v6129 = vrot.slane %v6019, 2
        %v6130 = vsel %vm5703, %v6129, %v6128
        %v6131 = vrot.slane %v6020, 1
        %v6132 = vsel %vm5706, %v6131, %v6130
        %v6133 = vpack.c.b16 %v6048, %v6034
        %v6134 = vpack.c.b16 %v6076, %v6062
        %v6135 = vpack.c.b16 %v6104, %v6090
        %v6136 = vpack.c.b16 %v6132, %v6118
        %v6138 = vsel %vm1801, %v6133, 0
        %v6141 = vsel %vm1801, %v6134, 0
        %v6144 = vsel %vm1801, %v6135, 0
        %v6147 = vsel %vm1801, %v6136, 0
        %v6150 = vsel %vm1850, %v4724, 0
        %6152 = vmatprep.subr.bf16.mxu0 0
        %6153 = vmatpush1.bf16.msra.mxu0 %v6150
        %6154 = vmatprep.subr.bf16.mxu0 0
        %6155 = vmatpush1.bf16.msra.mxu0 0
        %6156 = vmatprep.subr.bf16.mxu0 0
        %6157 = vmatpush1.bf16.msra.mxu0 0
        %6158 = vmatprep.subr.bf16.mxu0 0
        %6159 = vmatpush1.bf16.msra.mxu0 0
        %6160 = vmatprep.subr.bf16.mxu0 0
        %6161 = vmatpush1.bf16.msra.mxu0 0
        %6162 = vmatprep.subr.bf16.mxu0 0
        %6163 = vmatpush1.bf16.msra.mxu0 0
        %6164 = vmatprep.subr.bf16.mxu0 0
        %6165 = vmatpush1.bf16.msra.mxu0 0
        %6166 = vmatprep.subr.bf16.mxu0 0
        %6167 = vmatpush1.bf16.msra.mxu0 0
        %6168 = vmatprep.subr.bf16.mxu0 0
        %6169 = vmatpush1.bf16.msra.mxu0 0
        %6170 = vmatprep.subr.bf16.mxu0 0
        %6171 = vmatpush1.bf16.msra.mxu0 0
        %6172 = vmatprep.subr.bf16.mxu0 0
        %6173 = vmatpush1.bf16.msra.mxu0 0
        %6174 = vmatprep.subr.bf16.mxu0 0
        %6175 = vmatpush1.bf16.msra.mxu0 0
        %6176 = vmatprep.subr.bf16.mxu0 0
        %6177 = vmatpush1.bf16.msra.mxu0 0
        %6178 = vmatprep.subr.bf16.mxu0 0
        %6179 = vmatpush1.bf16.msra.mxu0 0
        %6180 = vmatprep.subr.bf16.mxu0 0
        %6181 = vmatpush1.bf16.msra.mxu0 0
        %6182 = vmatprep.subr.bf16.mxu0 0
        %6183 = vmatpush1.bf16.msra.mxu0 0
        %6184 = vmatprep.mubr.bf16.mxu0 0
        %6185 = vmatmul.mubr.bf16.gmra.mrb[0].mxu0 %v6138
        %v6186 = vpop.f32.mrb[0].mxu0
        %v6187 = vadd.f32 %v5863, %v6186
        %v6188 = vpop.f32.mrb[0].mxu0
        %v6189 = vpop.f32.mrb[0].mxu0
        %v6190 = vadd.f32 %v5866, %v6189
        %v6191 = vpop.f32.mrb[0].mxu0
        %6192 = vmatprep.mubr.bf16.mxu0 0
        %6193 = vmatmul.mubr.bf16.gmra.mrb[0].mxu0 %v6141
        %v6194 = vpop.f32.mrb[0].mxu0
        %v6195 = vadd.f32 %v5871, %v6194
        %v6196 = vpop.f32.mrb[0].mxu0
        %v6197 = vpop.f32.mrb[0].mxu0
        %v6198 = vadd.f32 %v5874, %v6197
        %v6199 = vpop.f32.mrb[0].mxu0
        %6200 = vmatprep.mubr.bf16.mxu0 0
        %6201 = vmatmul.mubr.bf16.gmra.mrb[0].mxu0 %v6144
        %v6202 = vpop.f32.mrb[0].mxu0
        %v6203 = vadd.f32 %v5879, %v6202
        %v6204 = vpop.f32.mrb[0].mxu0
        %v6205 = vpop.f32.mrb[0].mxu0
        %v6206 = vadd.f32 %v5882, %v6205
        %v6207 = vpop.f32.mrb[0].mxu0
        %6208 = vmatprep.mubr.bf16.mxu0 0
        %6209 = vmatmul.mubr.bf16.gmra.mrb[0].mxu0 %v6147
        %v6210 = vpop.f32.mrb[0].mxu0
        %v6211 = vadd.f32 %v5887, %v6210
        %v6212 = vpop.f32.mrb[0].mxu0
        %v6213 = vpop.f32.mrb[0].mxu0
        %v6214 = vadd.f32 %v5890, %v6213
        %v6215 = vpop.f32.mrb[0].mxu0
        %6216 = vdwg.mxu0
        %v6217 = vld [vmem:[%s6] sm:$0x1]
        %v6219 = vlaneseq
        %v6220 = vshrl.u32 %v6219, 7
        %v6221 = vsub.s32 0, %v6220
        %v6222 = vrot.slane %v6217, %v6221
        %v6224 = vadd.f32 %v6187, %v6222
        %v6225 = vadd.f32 %v6190, %v6222
        %v6226 = vadd.f32 %v6195, %v6222
        %v6227 = vadd.f32 %v6198, %v6222
        %v6228 = vadd.f32 %v6203, %v6222
        %v6229 = vadd.f32 %v6206, %v6222
        %v6230 = vadd.f32 %v6211, %v6222
        %v6231 = vadd.f32 %v6214, %v6222
        %v6232 = vmax.f32 %v6224, 0.0
        %v6233 = vmax.f32 %v6225, 0.0
        %v6234 = vmax.f32 %v6226, 0.0
        %v6235 = vmax.f32 %v6227, 0.0
        %v6236 = vmax.f32 %v6228, 0.0
        %v6237 = vmax.f32 %v6229, 0.0
        %v6238 = vmax.f32 %v6230, 0.0
        %v6239 = vmax.f32 %v6231, 0.0
        %vm6240 = vcmask 261120
        %6241 = vst.msk [vmem:[%s296] sm:$0xff] %vm6240, %v6232
        %6242 = vst.msk [vmem:[%s296 + $0x8] sm:$0xff] %vm6240, %v6233
        %6243 = vst.msk [vmem:[%s296 + $0x10] sm:$0xff] %vm6240, %v6234
        %6244 = vst.msk [vmem:[%s296 + $0x18] sm:$0xff] %vm6240, %v6235
        %6245 = vst.msk [vmem:[%s296 + $0x20] sm:$0xff] %vm6240, %v6236
        %6246 = vst.msk [vmem:[%s296 + $0x28] sm:$0xff] %vm6240, %v6237
        %6247 = vst.msk [vmem:[%s296 + $0x30] sm:$0xff] %vm6240, %v6238
        %6248 = vst.msk [vmem:[%s296 + $0x38] sm:$0xff] %vm6240, %v6239
        %s6249 = sand.u32 %s184, 1
        %s6250 = scalar_lea.sflag [#allocation5], %s6249
        %s6251 = sand.u32 %s184, 1
        %s6252 = smul.addr %s6251, 64
        %s6253 = scalar_lea.vmem [#allocation6], %s6252
        // Predicated region
        $region53: #{tpu_custom_call.1} parent=47 // pred_check
          %p6254 = pneg %p194
        $region54: #{tpu_custom_call.1} parent=47 // pred_check_branch
          %6256 = sbr.rel (%p6254) target = $region56
        $region55: #{tpu_custom_call.1} parent=47 // pred_region
          %s6258 = ssub.s32 1024, 1024
          %6259 = vsyncadd %s6250, %s6258
          %s6260 = smul.addr %s24, 8
          %s6261 = smul.addr %s6260, 128
          %s6262 = scalar_lea.hbm %s7, %s6261
          %s6263 = sshll.u32 %s6253, 4
          %s6264 = int_to_ptr.vmem [resolvable:$true] %s6263
          %6269 = dma.vmem_to_hbm [thread:$0]  %s6264, 1024, %s6262, %s6250, 128, 128, 8
        $region56: #{tpu_custom_call.1} parent=47 // pred_fallthru
          _
      $region48: #{tpu_custom_call.1} parent=5 // pred_fallthru
        _
      %p6270 = scmp.le.s32.totalorder 2, %s19
      // Predicated region
      $region57: #{tpu_custom_call.1} parent=5 // pred_check
        %p6271 = pneg %p6270
      $region58: #{tpu_custom_call.1} parent=5 // pred_check_branch
        %6273 = sbr.rel (%p6271) target = $region60
      $region59: #{tpu_custom_call.1} parent=5 // pred_region
        %s6274 = ssub.s32 %s19, 2
        // Predicated region
        $region61: #{tpu_custom_call.1} parent=59 // pred_check
          %p6275 = pneg %p200
        $region62: #{tpu_custom_call.1} parent=59 // pred_check_branch
          %6277 = sbr.rel (%p6275) target = $region64
        $region63: #{tpu_custom_call.1} parent=59 // pred_region
          %s6278 = sand.u32 %s185, 1
          %s6279 = scalar_lea.sflag [#allocation5], %s6278
          %s6280 = sand.u32 %s185, 1
          %s6281 = smul.addr %s6280, 64
          %s6282 = scalar_lea.vmem [#allocation6], %s6281
          %6283 = dma.done %s6279, 1024
        $region64: #{tpu_custom_call.1} parent=59 // pred_fallthru
          _
      $region60: #{tpu_custom_call.1} parent=5 // pred_fallthru
        _
    $region6: #{tpu_custom_call.1} parent=1 // loop_footer
      %s23 = sadd.s32 1, %s19
    $region7: #{tpu_custom_call.1} parent=1 // loop_footer_branch
      %18 = sbr.rel target = $region3
    $region8: #{tpu_custom_call.1} parent=1 // loop_exit
      _
    %6284 = vsyncpa [#allocation4], 1
    %s6285 = scalar_lea.sflag [#allocation4], 1
    %6286 = vsyncpa %s6285, 1
    %6287 = vsyncpa [#allocation5], 1
    %s6288 = scalar_lea.sflag [#allocation5], 1
    %6289 = vsyncpa %s6288, 1

</llo_original>
